<compile_context>
chip_gen: v7x
topology: tpu7x:2x2x1
jax: 0.10.0
libtpu: 0.0.40
codegen_flags: <defaults>
</compile_context>

<pallas_src>
import functools

import jax
import jax.numpy as jnp
import numpy as np
from jax.experimental import pallas as pl
from jax.experimental.pallas import tpu as pltpu


# ------------------------------- Pallas kernel ---------------------------------

def _vit_channel_map_kernel(x_ref, weqv_ref, posqv_ref, wk_ref, wo_ref, bo_ref,
                            o_ref, *, dp, tb):
    # x_ref: (TB*C, H*W) activations for the current fused batch group (bf16 feed).
    xb = x_ref[...].astype(jnp.bfloat16)          # no-op when the producer is bf16

    # Fused We @ [Wq@M@E | Wv] projection: one MXU pass, 2*dp lanes (dp 128-aligned).
    qv = jnp.dot(xb, weqv_ref[...], preferred_element_type=jnp.float32)   # (TBC, 2*dp)

    # (pos_embedding + b_embed) folded through the projection; broadcast over the TB
    # fused batch elements in-kernel (f32 VPU add, v5e-safe).
    qv = qv + jnp.tile(posqv_ref[...], (tb, 1))

    q_pre = qv[:, :dp]                            # vreg-aligned split (lane 128)
    v = qv[:, dp:]

    # linear_k over the channel axis, block-diagonal across the TB fused batch
    # elements; sigmoid gate (E-expansion folded, f32 on the EUP).
    k_pre = jnp.dot(wk_ref[...], q_pre.astype(jnp.bfloat16),
                    preferred_element_type=jnp.float32)                   # (TBC, dp)
    gate = jax.nn.sigmoid(k_pre)

    # diag(attn) @ v == elementwise gate, then linear_out; store bf16, f32 accum.
    out = (v * gate).astype(jnp.bfloat16)
    acc = jnp.dot(out, wo_ref[...], preferred_element_type=jnp.float32) + bo_ref[...]
    o_ref[...] = acc.astype(o_ref.dtype)


# --------------------------------- wrapper --------------------------------------

def vit_channel_map_forward(x5, kparams, nf, image_size, tb):
    B, N, C, H, W = x5.shape
    assert N == 1 and H == W == image_size and C == nf
    HW = H * W
    dp = int(kparams["dp"])
    BN = B * N
    assert BN % tb == 0, "BN must be divisible by the per-step batch tile"
    tbc = tb * C
    rows = BN * C

    # (B, N, C, H, W) -> (BN*C, HW): pure reshape, no data movement, dtype preserved.
    x2 = x5.reshape(rows, HW)

    # Block-diagonal linear_k over the TB fused batch elements, built from the
    # (C, C) weight so prepared params stay TB-independent (tiny: tbc x tbc bf16).
    wk_bd = jnp.kron(jnp.eye(tb, dtype=jnp.float32),
                     kparams["Wk"]).astype(jnp.bfloat16)

    # Explicit VMEM budget: double-buffered activation blocks + resident weights
    # + headroom, floored at 32 MiB and capped at 56 MiB (v7x physical VMEM = 64 MiB).
    act_bytes = tbc * HW * (x2.dtype.itemsize + 2)            # input + bf16 output
    wgt_bytes = (HW * 2 * dp * 2 + C * 2 * dp * 4 + tbc * tbc * 2
                 + dp * HW * 2 + HW * 4)
    vmem_need = 2 * act_bytes + 2 * wgt_bytes + (4 << 20)
    vmem_limit = int(min(max(vmem_need, 32 << 20), 56 << 20))

    def full(shape):  # whole-array block, constant index map (not re-DMA'd per step)
        return pl.BlockSpec(shape, lambda b, _n=len(shape): (0,) * _n)

    out2 = pl.pallas_call(
        functools.partial(_vit_channel_map_kernel, dp=dp, tb=tb),
        out_shape=jax.ShapeDtypeStruct((rows, HW), jnp.bfloat16),
        grid=(BN // tb,),
        in_specs=[
            pl.BlockSpec((tbc, HW), lambda b: (b, 0)),  # activations (bf16)
            full((HW, 2 * dp)),       # We @ [Wq@M@E | Wv], lane-padded (bf16)
            full((C, 2 * dp)),        # (pos + b_embed) @ [Wq@M@E | Wv]    (f32)
            full((tbc, tbc)),         # block-diag Wk                      (bf16)
            full((dp, HW)),           # Wo, zero-padded rows               (bf16)
            full((1, HW)),            # b_out                              (f32)
        ],
        out_specs=pl.BlockSpec((tbc, HW), lambda b: (b, 0)),
        compiler_params=pltpu.CompilerParams(
            dimension_semantics=("parallel",),
            vmem_limit_bytes=vmem_limit),
    )(x2, kparams["Weqv"], kparams["posqv"], wk_bd, kparams["Wo"], kparams["bo"])

    return out2.reshape(B, N, C, H, W)


# ---------------------------- parameter construction ----------------------------

def init_params(key, nf, image_size):
    """Synthetic weights in (in_features, out_features) layout (x @ W); Wk in torch
    (out, in) layout to mirror nn.Linear(nf, nf)."""
    HW = image_size ** 2
    dim = HW // 16
    C = nf
    ks = jax.random.split(key, 8)

    def nrm(k, shape, scale):
        return (scale * jax.random.normal(k, shape)).astype(jnp.float32)

    return dict(
        We=nrm(ks[0], (HW, dim), 1.0 / float(np.sqrt(HW))),
        be=nrm(ks[1], (dim,), 0.02),
        pos=nrm(ks[2], (C, dim), 1.0),                    # pos_embedding (1, nf, dim)
        Wq=nrm(ks[3], (dim, dim), 1.0 / float(np.sqrt(dim))),
        Wk=nrm(ks[4], (C, C), 1.0 / float(np.sqrt(C))),
        Wv=nrm(ks[5], (dim, dim), 1.0 / float(np.sqrt(dim))),
        Wo=nrm(ks[6], (dim, HW), 1.0 / float(np.sqrt(dim))),
        bo=nrm(ks[7], (HW,), 0.02),
    )


def prepare_kernel_params(params, nf, image_size):
    """Fold AvgPool (M), diag_embed (E), linear_embed (We) and the pos/bias into the
    fused projection weights, pad each projection half to a 128-lane boundary, and
    cast the MXU operands to bf16.  TB-independent (linear_k stays (C, C))."""
    HW = image_size ** 2
    dim = HW // 16
    heads = max(1, image_size // 16)
    assert dim % heads == 0, "dim must be divisible by heads (AvgPool1d semantics)"
    dh = dim // heads
    C = nf
    dp = -(-dim // 128) * 128            # each projection half padded to 128 lanes

    # M: per-head mean pool (AvgPool1d(dh));  E: head -> dim expansion.
    M = np.zeros((dim, heads), np.float32)
    E = np.zeros((heads, dim), np.float32)
    for h in range(heads):
        M[h * dh:(h + 1) * dh, h] = 1.0 / dh
        E[h, h * dh:(h + 1) * dh] = 1.0

    We = np.asarray(params["We"], np.float32)
    WqME = np.asarray(params["Wq"], np.float32) @ M @ E            # (dim, dim)

    Wqv = np.zeros((dim, 2 * dp), np.float32)                      # [WqME | 0 | Wv | 0]
    Wqv[:, :dim] = WqME
    Wqv[:, dp:dp + dim] = np.asarray(params["Wv"], np.float32)

    Weqv = We @ Wqv                                                # (HW, 2*dp)
    posqv = (np.asarray(params["pos"], np.float32)
             + np.asarray(params["be"], np.float32)[None, :]) @ Wqv  # (C, 2*dp)

    Wo_pad = np.zeros((dp, HW), np.float32)                        # zero rows for pad
    Wo_pad[:dim, :] = np.asarray(params["Wo"], np.float32)

    return dict(
        Weqv=jnp.asarray(Weqv, jnp.bfloat16),
        posqv=jnp.asarray(posqv, jnp.float32),
        Wk=jnp.asarray(params["Wk"], jnp.float32),   # (C, C); block-diag built per-TB
        Wo=jnp.asarray(Wo_pad, jnp.bfloat16),
        bo=jnp.asarray(params["bo"], jnp.float32).reshape(1, HW),
        dp=dp,
    )


# ------------------------------ pure-JAX reference -------------------------------

def ref_forward(x5, params, image_size):
    """Faithful f32 re-implementation of the torch Vit_Channel_Map forward."""
    B, N, C, H, W = x5.shape
    BN = B * N
    HW = H * W
    heads = max(1, image_size // 16)
    dim = image_size ** 2 // 16
    dh = dim // heads

    x = x5.reshape(BN, C, HW).astype(jnp.float32)
    x = x @ params["We"] + params["be"] + params["pos"]                 # (BN, C, dim)
    q = (x @ params["Wq"]).reshape(BN, C, heads, dh).transpose(0, 2, 1, 3)
    q = q.mean(-1)                                                      # (BN, heads, C)
    k = jax.nn.sigmoid(jnp.einsum("bhi,ji->bhj", q, params["Wk"]))      # (BN, heads, C)
    v = (x @ params["Wv"]).reshape(BN, C, heads, dh).transpose(0, 2, 1, 3)
    out = k[..., None] * v                                              # diag_embed @ v
    out = out.transpose(0, 2, 1, 3).reshape(BN, C, dim)
    out = out @ params["Wo"] + params["bo"]
    return out.reshape(B, N, C, H, W)


# ------------------------------------- main --------------------------------------

if __name__ == "__main__":
    # dim = 32*32/16 = 64 (padded to dp=128), heads = 2, dh = 32.
    # B=32, TB=16 -> TBC = 128 rows (full MXU M push) and grid = 2 (even, both v7x TCs).
    nf, num_frames, image_size = 8, 1, 32
    B = 32
    TB = 16

    key = jax.random.PRNGKey(0)
    kx, kp = jax.random.split(key)
    x_f32 = jax.random.normal(kx, (B, num_frames, nf, image_size, image_size),
                              jnp.float32)
    # Upstream producer emits bf16 activations (halves input HBM traffic); the
    # reference below consumes the exact same bf16-rounded values.
    x = x_f32.astype(jnp.bfloat16)

    params = init_params(kp, nf, image_size)
    kparams = prepare_kernel_params(params, nf, image_size)

    out = vit_channel_map_forward(x, kparams, nf, image_size, TB)
    out = jax.block_until_ready(out)
    assert out.shape == x.shape and out.dtype == jnp.bfloat16

    # Reference is pure f32 on the same bf16-rounded input; the kernel uses bf16 MXU
    # feeds (f32 accumulation) and a bf16 output store, so allow a bf16-sized error
    # budget while still catching any structural bug (rel. Frobenius is the tight gate).
    ref = np.asarray(ref_forward(x.astype(jnp.float32), params, image_size))
    got = np.asarray(out.astype(jnp.float32))
    rel_fro = np.linalg.norm(got - ref) / np.linalg.norm(ref)
    assert rel_fro < 2e-2, f"relative Frobenius error too large: {rel_fro}"
    np.testing.assert_allclose(got, ref, rtol=5e-2, atol=8e-2)

    print("KERNEL_OK")
</pallas_src>

<mosaic_0001>
module attributes {stable_mosaic.version = 11 : i64} {
  func.func @_vit_channel_map_kernel(%arg0: i32, %arg1: memref<128x1024xbf16, #tpu.memory_space<vmem>>, %arg2: memref<1024x256xbf16, #tpu.memory_space<vmem>>, %arg3: memref<8x256xf32, #tpu.memory_space<vmem>>, %arg4: memref<128x128xbf16, #tpu.memory_space<vmem>>, %arg5: memref<128x1024xbf16, #tpu.memory_space<vmem>>, %arg6: memref<1x1024xf32, #tpu.memory_space<vmem>>, %arg7: memref<128x1024xbf16, #tpu.memory_space<vmem>>) attributes {dimension_semantics = [#tpu.dimension_semantics<parallel>], iteration_bounds = array<i64: 2>, scalar_prefetch = 0 : i64, scratch_operands = 0 : i64, tpu.core_type = #tpu.core_type<tc>, window_params = [{transform_indices = @transform_0, window_bounds = array<i64: 128, 1024>}, {pipeline_mode = #tpu.pipeline_mode<synchronous>, transform_indices = @transform_1, window_bounds = array<i64: 1024, 256>}, {pipeline_mode = #tpu.pipeline_mode<synchronous>, transform_indices = @transform_2, window_bounds = array<i64: 8, 256>}, {pipeline_mode = #tpu.pipeline_mode<synchronous>, transform_indices = @transform_3, window_bounds = array<i64: 128, 128>}, {pipeline_mode = #tpu.pipeline_mode<synchronous>, transform_indices = @transform_4, window_bounds = array<i64: 128, 1024>}, {pipeline_mode = #tpu.pipeline_mode<synchronous>, transform_indices = @transform_5, window_bounds = array<i64: 1, 1024>}, {transform_indices = @transform_6, window_bounds = array<i64: 128, 1024>}]} {
    %c0 = arith.constant 0 : index
    %c0_0 = arith.constant 0 : index
    %0 = vector.load %arg1[%c0, %c0_0] : memref<128x1024xbf16, #tpu.memory_space<vmem>>, vector<128x1024xbf16>
    %c0_1 = arith.constant 0 : index
    %c0_2 = arith.constant 0 : index
    %1 = vector.load %arg2[%c0_1, %c0_2] : memref<1024x256xbf16, #tpu.memory_space<vmem>>, vector<1024x256xbf16>
    %cst = arith.constant dense<0.000000e+00> : vector<128x256xf32>
    %2 = tpu.matmul %0, %1, %cst {dimension_numbers = #tpu.dot_dimension_numbers<[1], [0], [0], [1], [0, 0, 1, 1], [], []>} : vector<128x1024xbf16>, vector<1024x256xbf16>, vector<128x256xf32> -> vector<128x256xf32>
    %c0_3 = arith.constant 0 : index
    %c0_4 = arith.constant 0 : index
    %3 = vector.load %arg3[%c0_3, %c0_4] : memref<8x256xf32, #tpu.memory_space<vmem>>, vector<8x256xf32>
    %4 = tpu.concatenate %3, %3, %3, %3, %3, %3, %3, %3, %3, %3, %3, %3, %3, %3, %3, %3 in 0 : vector<8x256xf32>, vector<8x256xf32>, vector<8x256xf32>, vector<8x256xf32>, vector<8x256xf32>, vector<8x256xf32>, vector<8x256xf32>, vector<8x256xf32>, vector<8x256xf32>, vector<8x256xf32>, vector<8x256xf32>, vector<8x256xf32>, vector<8x256xf32>, vector<8x256xf32>, vector<8x256xf32>, vector<8x256xf32> -> vector<128x256xf32>
    %5 = arith.addf %2, %4 : vector<128x256xf32>
    %6 = vector.extract_strided_slice %5 {offsets = [0, 0], sizes = [128, 128], strides = [1, 1]} : vector<128x256xf32> to vector<128x128xf32>
    %7 = vector.extract_strided_slice %5 {offsets = [0, 128], sizes = [128, 128], strides = [1, 1]} : vector<128x256xf32> to vector<128x128xf32>
    %c0_5 = arith.constant 0 : index
    %c0_6 = arith.constant 0 : index
    %8 = vector.load %arg4[%c0_5, %c0_6] : memref<128x128xbf16, #tpu.memory_space<vmem>>, vector<128x128xbf16>
    %9 = arith.truncf %6 : vector<128x128xf32> to vector<128x128xbf16>
    %cst_7 = arith.constant dense<0.000000e+00> : vector<128x128xf32>
    %10 = tpu.matmul %8, %9, %cst_7 {dimension_numbers = #tpu.dot_dimension_numbers<[1], [0], [0], [1], [0, 0, 1, 1], [], []>} : vector<128x128xbf16>, vector<128x128xbf16>, vector<128x128xf32> -> vector<128x128xf32>
    %11 = arith.negf %10 : vector<128x128xf32>
    %12 = math.exp %11 : vector<128x128xf32>
    %cst_8 = arith.constant 1.000000e+00 : f32
    %13 = vector.broadcast %cst_8 : f32 to vector<128x128xf32>
    %14 = arith.addf %13, %12 : vector<128x128xf32>
    %15 = arith.divf %13, %14 : vector<128x128xf32>
    %16 = arith.mulf %7, %15 : vector<128x128xf32>
    %17 = arith.truncf %16 : vector<128x128xf32> to vector<128x128xbf16>
    %c0_9 = arith.constant 0 : index
    %c0_10 = arith.constant 0 : index
    %18 = vector.load %arg5[%c0_9, %c0_10] : memref<128x1024xbf16, #tpu.memory_space<vmem>>, vector<128x1024xbf16>
    %cst_11 = arith.constant dense<0.000000e+00> : vector<128x1024xf32>
    %19 = tpu.matmul %17, %18, %cst_11 {dimension_numbers = #tpu.dot_dimension_numbers<[1], [0], [0], [1], [0, 0, 1, 1], [], []>} : vector<128x128xbf16>, vector<128x1024xbf16>, vector<128x1024xf32> -> vector<128x1024xf32>
    %c0_12 = arith.constant 0 : index
    %c0_13 = arith.constant 0 : index
    %20 = vector.load %arg6[%c0_12, %c0_13] : memref<1x1024xf32, #tpu.memory_space<vmem>>, vector<1x1024xf32>
    %21 = vector.broadcast %20 : vector<1x1024xf32> to vector<128x1024xf32>
    %22 = arith.addf %19, %21 : vector<128x1024xf32>
    %23 = arith.truncf %22 : vector<128x1024xf32> to vector<128x1024xbf16>
    %c0_14 = arith.constant 0 : index
    %c0_15 = arith.constant 0 : index
    %24 = vector.load %arg7[%c0_14, %c0_15] : memref<128x1024xbf16, #tpu.memory_space<vmem>>, vector<128x1024xbf16>
    tpu.vector_store %arg7[%c0_14, %c0_15], %23 {strides = array<i32>} : memref<128x1024xbf16, #tpu.memory_space<vmem>>, vector<128x1024xbf16>,
    return
  }
  func.func @transform_0(%arg0: i32) -> (i32, i32) {
    %c0_i32 = arith.constant 0 : i32
    %c0_i32_0 = arith.constant 0 : i32
    return %arg0, %c0_i32 : i32, i32
  }
  func.func @transform_1(%arg0: i32) -> (i32, i32) {
    %c0_i32 = arith.constant 0 : i32
    %c0_i32_0 = arith.constant 0 : i32
    %c0_i32_1 = arith.constant 0 : i32
    return %c0_i32, %c0_i32_0 : i32, i32
  }
  func.func @transform_2(%arg0: i32) -> (i32, i32) {
    %c0_i32 = arith.constant 0 : i32
    %c0_i32_0 = arith.constant 0 : i32
    %c0_i32_1 = arith.constant 0 : i32
    return %c0_i32, %c0_i32_0 : i32, i32
  }
  func.func @transform_3(%arg0: i32) -> (i32, i32) {
    %c0_i32 = arith.constant 0 : i32
    %c0_i32_0 = arith.constant 0 : i32
    %c0_i32_1 = arith.constant 0 : i32
    return %c0_i32, %c0_i32_0 : i32, i32
  }
  func.func @transform_4(%arg0: i32) -> (i32, i32) {
    %c0_i32 = arith.constant 0 : i32
    %c0_i32_0 = arith.constant 0 : i32
    %c0_i32_1 = arith.constant 0 : i32
    return %c0_i32, %c0_i32_0 : i32, i32
  }
  func.func @transform_5(%arg0: i32) -> (i32, i32) {
    %c0_i32 = arith.constant 0 : i32
    %c0_i32_0 = arith.constant 0 : i32
    %c0_i32_1 = arith.constant 0 : i32
    return %c0_i32, %c0_i32_0 : i32, i32
  }
  func.func @transform_6(%arg0: i32) -> (i32, i32) {
    %c0_i32 = arith.constant 0 : i32
    %c0_i32_0 = arith.constant 0 : i32
    return %arg0, %c0_i32 : i32, i32
  }
}

</mosaic_0001>

<llo_original>
// kernel: tpu_custom_call.1
$region0: #{tpu_custom_call.1}
  #allocation0 [shape = 'u32[]', space=smem, size = 0x4, offset = 0x4, fixed_abs, tag = 'smem constant byte address 0x4 - core index']
  #allocation1 [shape = 'u32[144,128]{1,0:T(1,128)}', space=vmem, size = 0x12000, scoped, tag = 'internal scratch']
  %s0 = inlined_call_operand.hbm [shape: bf16[256,1024], index: 0, kind: input, shape index: {}]
  %s1 = inlined_call_operand.hbm [shape: bf16[1024,256], index: 1, kind: input, shape index: {}]
  %s2 = inlined_call_operand.hbm [shape: f32[8,256], index: 2, kind: input, shape index: {}]
  %s3 = inlined_call_operand.hbm [shape: bf16[128,128], index: 3, kind: input, shape index: {}]
  %s4 = inlined_call_operand.hbm [shape: bf16[128,1024], index: 4, kind: input, shape index: {}]
  %s5 = inlined_call_operand.vmem [shape: f32[1,1024], index: 5, kind: input, shape index: {}]
  %s6 = inlined_call_operand.hbm [shape: bf16[256,1024], index: 6, kind: output, shape index: {}]
  %s7 = sld [smem:[#allocation0]]
  $region77: #{tpu_custom_call.1} parent=0
    _
  %s9 = ssub.s32 1, %s7
  %s10 = scalar_select 0, %s9, %s7
  $region1: #{tpu_custom_call.1} parent=0
    #allocation2 [shape = 'u8[524288]{0}', space=vmem, size = 0x80000, scoped, tag = 'input window, operand 0']
    #allocation3 [shape = 's32[2]{0}', space=sflag, size = 0x8, scoped, tag = 'scoped memory for tpu_custom_call.1']
    #allocation4 [shape = 's32[2]{0}', space=sflag, size = 0x8, scoped, tag = 'scoped memory for tpu_custom_call.1']
    #allocation5 [shape = 'u8[524288]{0}', space=vmem, size = 0x80000, scoped, tag = 'input window, operand 1, single buffered']
    #allocation6 [shape = 's32[1]{0}', space=sflag, size = 0x4, scoped, tag = 'scoped memory for tpu_custom_call.1']
    #allocation7 [shape = 'u8[8192]{0}', space=vmem, size = 0x2000, scoped, tag = 'input window, operand 2, single buffered']
    #allocation8 [shape = 'u8[32768]{0}', space=vmem, size = 0x8000, scoped, tag = 'input window, operand 3, single buffered']
    #allocation9 [shape = 's32[1]{0}', space=sflag, size = 0x4, scoped, tag = 'scoped memory for tpu_custom_call.1']
    #allocation10 [shape = 'u8[262144]{0}', space=vmem, size = 0x40000, scoped, tag = 'input window, operand 4, single buffered']
    #allocation11 [shape = 'u8[524288]{0}', space=vmem, size = 0x80000, scoped, tag = 'output window, operand 0']
    %11 = vsyncpa [#allocation3], 0
    %s12 = scalar_lea.sflag [#allocation3], 1
    %13 = vsyncpa %s12, 0
    %14 = vsyncpa [#allocation6], 0
    %15 = vsyncpa [#allocation9], 0
    %16 = vsyncpa [#allocation4], 0
    %s17 = scalar_lea.sflag [#allocation4], 1
    %18 = vsyncpa %s17, 0
    loop: start=0, step=1, limit=4
    $region2: #{tpu_custom_call.1} parent=1 // loop_pre_header
      _
    $region3: #{tpu_custom_call.1} parent=1 // loop_header
      %s20 = sphi 0, %s24
      %p21 = scmp.ge.s32.totalorder %s20, 4
      %s30 = sphi 0, %s32
      %s33 = sphi 0, %s30
      %s34 = sphi 0, %s33
      %s50 = sphi 0, %s34
      %s54 = sphi 0, %s54
      %s56 = sphi 0, %s54
      %s57 = sphi 0, %s56
      %s71 = sphi 0, %s57
      %s75 = sphi 0, %s75
      %s77 = sphi 0, %s75
      %s78 = sphi 0, %s77
      %s92 = sphi 0, %s78
      %s96 = sphi 0, %s96
      %s98 = sphi 0, %s96
      %s99 = sphi 0, %s98
      %s113 = sphi 0, %s99
      %s117 = sphi 0, %s117
      %s119 = sphi 0, %s117
      %s120 = sphi 0, %s119
      %s134 = sphi 0, %s120
      %s138 = sphi 0, %s138
      %s140 = sphi 0, %s138
      %s141 = sphi 0, %s140
      %s155 = sphi 0, %s141
      %s161 = sphi 0, %s163
      %s164 = sphi 0, %s161
      %s165 = sphi 0, %s164
      %s181 = sphi 0, %s165
    $region4: #{tpu_custom_call.1} parent=1 // loop_header_branch
      %23 = sbr.rel (%p21) target = $region8
    $region5: #{tpu_custom_call.1} parent=1 // loop_body
      %s25 = ssub.s32 %s20, 1
      %s26 = ssub.s32 %s20, 2
      %s27 = sadd.s32 %s20, 1
      %s28 = ssub.s32 %s20, %s27
      %p29 = scmp.eq.s32.totalorder %s28, 0
      %s31 = sadd.s32 %s30, 1
      %s32 = scalar_select %p29, %s30, %s31
      %p35 = pneg %p29
      %p36 = scmp.eq.s32.totalorder %s20, 1
      %p37 = por %p35, %p36
      %p38 = scmp.ne.s32.totalorder %s30, %s33
      %p39 = scmp.eq.s32.totalorder %s20, 0
      %p40 = por %p38, %p39
      %p41 = scmp.ne.s32.totalorder %s30, %s33
      %p42 = scmp.eq.s32.totalorder %s25, 1
      %p43 = por %p41, %p42
      %p44 = scmp.ne.s32.totalorder %s33, %s34
      %p45 = scmp.eq.s32.totalorder %s25, 0
      %p46 = por %p44, %p45
      %p47 = scmp.ne.s32.totalorder %s33, %s34
      %p48 = scmp.eq.s32.totalorder %s26, 1
      %p49 = por %p47, %p48
      %p51 = scmp.ne.s32.totalorder %s34, %s50
      %p52 = scmp.eq.s32.totalorder %s26, 0
      %p53 = por %p51, %p52
      %s55 = sadd.s32 %s54, 1
      %p58 = scmp.eq.s32.totalorder %s20, 1
      %p59 = scmp.ne.s32.totalorder %s54, %s56
      %p60 = scmp.eq.s32.totalorder %s20, 0
      %p61 = por %p59, %p60
      %p62 = scmp.ne.s32.totalorder %s54, %s56
      %p63 = scmp.eq.s32.totalorder %s25, 1
      %p64 = por %p62, %p63
      %p65 = scmp.ne.s32.totalorder %s56, %s57
      %p66 = scmp.eq.s32.totalorder %s25, 0
      %p67 = por %p65, %p66
      %p68 = scmp.ne.s32.totalorder %s56, %s57
      %p69 = scmp.eq.s32.totalorder %s26, 1
      %p70 = por %p68, %p69
      %p72 = scmp.ne.s32.totalorder %s57, %s71
      %p73 = scmp.eq.s32.totalorder %s26, 0
      %p74 = por %p72, %p73
      %s76 = sadd.s32 %s75, 1
      %p79 = scmp.eq.s32.totalorder %s20, 1
      %p80 = scmp.ne.s32.totalorder %s75, %s77
      %p81 = scmp.eq.s32.totalorder %s20, 0
      %p82 = por %p80, %p81
      %p83 = scmp.ne.s32.totalorder %s75, %s77
      %p84 = scmp.eq.s32.totalorder %s25, 1
      %p85 = por %p83, %p84
      %p86 = scmp.ne.s32.totalorder %s77, %s78
      %p87 = scmp.eq.s32.totalorder %s25, 0
      %p88 = por %p86, %p87
      %p89 = scmp.ne.s32.totalorder %s77, %s78
      %p90 = scmp.eq.s32.totalorder %s26, 1
      %p91 = por %p89, %p90
      %p93 = scmp.ne.s32.totalorder %s78, %s92
      %p94 = scmp.eq.s32.totalorder %s26, 0
      %p95 = por %p93, %p94
      %s97 = sadd.s32 %s96, 1
      %p100 = scmp.eq.s32.totalorder %s20, 1
      %p101 = scmp.ne.s32.totalorder %s96, %s98
      %p102 = scmp.eq.s32.totalorder %s20, 0
      %p103 = por %p101, %p102
      %p104 = scmp.ne.s32.totalorder %s96, %s98
      %p105 = scmp.eq.s32.totalorder %s25, 1
      %p106 = por %p104, %p105
      %p107 = scmp.ne.s32.totalorder %s98, %s99
      %p108 = scmp.eq.s32.totalorder %s25, 0
      %p109 = por %p107, %p108
      %p110 = scmp.ne.s32.totalorder %s98, %s99
      %p111 = scmp.eq.s32.totalorder %s26, 1
      %p112 = por %p110, %p111
      %p114 = scmp.ne.s32.totalorder %s99, %s113
      %p115 = scmp.eq.s32.totalorder %s26, 0
      %p116 = por %p114, %p115
      %s118 = sadd.s32 %s117, 1
      %p121 = scmp.eq.s32.totalorder %s20, 1
      %p122 = scmp.ne.s32.totalorder %s117, %s119
      %p123 = scmp.eq.s32.totalorder %s20, 0
      %p124 = por %p122, %p123
      %p125 = scmp.ne.s32.totalorder %s117, %s119
      %p126 = scmp.eq.s32.totalorder %s25, 1
      %p127 = por %p125, %p126
      %p128 = scmp.ne.s32.totalorder %s119, %s120
      %p129 = scmp.eq.s32.totalorder %s25, 0
      %p130 = por %p128, %p129
      %p131 = scmp.ne.s32.totalorder %s119, %s120
      %p132 = scmp.eq.s32.totalorder %s26, 1
      %p133 = por %p131, %p132
      %p135 = scmp.ne.s32.totalorder %s120, %s134
      %p136 = scmp.eq.s32.totalorder %s26, 0
      %p137 = por %p135, %p136
      %s139 = sadd.s32 %s138, 1
      %p142 = scmp.eq.s32.totalorder %s20, 1
      %p143 = scmp.ne.s32.totalorder %s138, %s140
      %p144 = scmp.eq.s32.totalorder %s20, 0
      %p145 = por %p143, %p144
      %p146 = scmp.ne.s32.totalorder %s138, %s140
      %p147 = scmp.eq.s32.totalorder %s25, 1
      %p148 = por %p146, %p147
      %p149 = scmp.ne.s32.totalorder %s140, %s141
      %p150 = scmp.eq.s32.totalorder %s25, 0
      %p151 = por %p149, %p150
      %p152 = scmp.ne.s32.totalorder %s140, %s141
      %p153 = scmp.eq.s32.totalorder %s26, 1
      %p154 = por %p152, %p153
      %p156 = scmp.ne.s32.totalorder %s141, %s155
      %p157 = scmp.eq.s32.totalorder %s26, 0
      %p158 = por %p156, %p157
      %s159 = ssub.s32 %s20, %s27
      %p160 = scmp.eq.s32.totalorder %s159, 0
      %s162 = sadd.s32 %s161, 1
      %s163 = scalar_select %p160, %s161, %s162
      %p166 = pneg %p160
      %p167 = scmp.eq.s32.totalorder %s20, 1
      %p168 = por %p166, %p167
      %p169 = scmp.ne.s32.totalorder %s161, %s164
      %p170 = scmp.eq.s32.totalorder %s20, 0
      %p171 = por %p169, %p170
      %p172 = scmp.ne.s32.totalorder %s161, %s164
      %p173 = scmp.eq.s32.totalorder %s25, 1
      %p174 = por %p172, %p173
      %p175 = scmp.ne.s32.totalorder %s164, %s165
      %p176 = scmp.eq.s32.totalorder %s25, 0
      %p177 = por %p175, %p176
      %p178 = scmp.ne.s32.totalorder %s164, %s165
      %p179 = scmp.eq.s32.totalorder %s26, 1
      %p180 = por %p178, %p179
      %p182 = scmp.ne.s32.totalorder %s165, %s181
      %p183 = scmp.eq.s32.totalorder %s26, 0
      %p184 = por %p182, %p183
      %p185 = scmp.le.s32.totalorder 1, %s20
      %p186 = scmp.lt.s32.totalorder %s20, 3
      %p187 = pnand %p185, %p186
      %p188 = pneg %p187
      // Predicated region
      $region9: #{tpu_custom_call.1} parent=5 // pred_check
        _
      $region10: #{tpu_custom_call.1} parent=5 // pred_check_branch
        %190 = sbr.rel (%p187) target = $region12
      $region11: #{tpu_custom_call.1} parent=5 // pred_region
        %s191 = ssub.s32 %s20, 1
        // Predicated region
        $region13: #{tpu_custom_call.1} parent=11 // pred_check
          %p192 = pneg %p67
        $region14: #{tpu_custom_call.1} parent=11 // pred_check_branch
          %194 = sbr.rel (%p192) target = $region16
        $region15: #{tpu_custom_call.1} parent=11 // pred_region
          %s196 = ssub.s32 16384, 16384
          %197 = vsyncadd [#allocation6], %s196
          %s198 = sshll.u32 [#allocation5], 4
          %s199 = int_to_ptr.vmem [resolvable:$true] %s198
          %204 = dma.hbm_to_vmem [thread:$0]  %s1, 16384, %s199, [#allocation6], 128, 128, 8
        $region16: #{tpu_custom_call.1} parent=11 // pred_fallthru
          _
        // Predicated region
        $region17: #{tpu_custom_call.1} parent=11 // pred_check
          %p205 = pneg %p88
        $region18: #{tpu_custom_call.1} parent=11 // pred_check_branch
          %207 = sbr.rel (%p205) target = $region20
        $region19: #{tpu_custom_call.1} parent=11 // pred_region
          %s209 = ssub.s32 256, 256
          %210 = vsyncadd [#allocation6], %s209
          %s212 = sshll.u32 [#allocation7], 4
          %s213 = int_to_ptr.vmem [resolvable:$true] %s212
          %215 = dma.hbm_to_vmem [thread:$0]  %s2, 256, %s213, [#allocation6]
        $region20: #{tpu_custom_call.1} parent=11 // pred_fallthru
          _
        // Predicated region
        $region21: #{tpu_custom_call.1} parent=11 // pred_check
          %p216 = pneg %p109
        $region22: #{tpu_custom_call.1} parent=11 // pred_check_branch
          %218 = sbr.rel (%p216) target = $region24
        $region23: #{tpu_custom_call.1} parent=11 // pred_region
          %s220 = ssub.s32 1024, 1024
          %221 = vsyncadd [#allocation9], %s220
          %s222 = sshll.u32 [#allocation8], 4
          %s223 = int_to_ptr.vmem [resolvable:$true] %s222
          %228 = dma.hbm_to_vmem [thread:$0]  %s3, 1024, %s223, [#allocation9], 64, 64, 4
        $region24: #{tpu_custom_call.1} parent=11 // pred_fallthru
          _
        // Predicated region
        $region25: #{tpu_custom_call.1} parent=11 // pred_check
          %p229 = pneg %p130
        $region26: #{tpu_custom_call.1} parent=11 // pred_check_branch
          %231 = sbr.rel (%p229) target = $region28
        $region27: #{tpu_custom_call.1} parent=11 // pred_region
          %s233 = ssub.s32 8192, 8192
          %234 = vsyncadd [#allocation9], %s233
          %s235 = sshll.u32 [#allocation10], 4
          %s236 = int_to_ptr.vmem [resolvable:$true] %s235
          %241 = dma.hbm_to_vmem [thread:$0]  %s4, 8192, %s236, [#allocation9], 512, 512, 32
        $region28: #{tpu_custom_call.1} parent=11 // pred_fallthru
          _
        // Predicated region
        $region29: #{tpu_custom_call.1} parent=11 // pred_check
          %p242 = pneg %p151
        $region30: #{tpu_custom_call.1} parent=11 // pred_check_branch
          %244 = sbr.rel (%p242) target = $region32
        $region31: #{tpu_custom_call.1} parent=11 // pred_region
          _
        $region32: #{tpu_custom_call.1} parent=11 // pred_fallthru
          _
      $region12: #{tpu_custom_call.1} parent=5 // pred_fallthru
        _
      %p245 = scmp.lt.s32.totalorder %s20, 2
      // Predicated region
      $region33: #{tpu_custom_call.1} parent=5 // pred_check
        %p246 = pneg %p245
      $region34: #{tpu_custom_call.1} parent=5 // pred_check_branch
        %248 = sbr.rel (%p246) target = $region36
      $region35: #{tpu_custom_call.1} parent=5 // pred_region
        // Predicated region
        $region37: #{tpu_custom_call.1} parent=35 // pred_check
          %p249 = pneg %p40
        $region38: #{tpu_custom_call.1} parent=35 // pred_check_branch
          %251 = sbr.rel (%p249) target = $region40
        $region39: #{tpu_custom_call.1} parent=35 // pred_region
          %s252 = sand.u32 %s30, 1
          %s253 = scalar_lea.sflag [#allocation3], %s252
          %s254 = sand.u32 %s30, 1
          %s255 = smul.addr %s254, 512
          %s256 = scalar_lea.vmem [#allocation2], %s255
          %s257 = smul.u32 16, %s20
          %s259 = ssub.s32 8192, 8192
          %260 = vsyncadd %s253, %s259
          %s261 = smul.addr %s257, 8
          %s262 = smul.addr %s261, 64
          %s263 = scalar_lea.hbm %s0, %s262
          %s264 = sshll.u32 %s256, 4
          %s265 = int_to_ptr.vmem [resolvable:$true] %s264
          %270 = dma.hbm_to_vmem [thread:$0]  %s263, 8192, %s265, %s253, 512, 512, 32
        $region40: #{tpu_custom_call.1} parent=35 // pred_fallthru
          _
      $region36: #{tpu_custom_call.1} parent=5 // pred_fallthru
        _
      %p271 = scmp.le.s32.totalorder 1, %s20
      %p272 = scmp.lt.s32.totalorder %s20, 3
      %p273 = pnand %p271, %p272
      %p274 = pneg %p273
      // Predicated region
      $region41: #{tpu_custom_call.1} parent=5 // pred_check
        _
      $region42: #{tpu_custom_call.1} parent=5 // pred_check_branch
        %276 = sbr.rel (%p273) target = $region44
      $region43: #{tpu_custom_call.1} parent=5 // pred_region
        %s277 = ssub.s32 %s20, 1
        %s278 = sand.u32 %s33, 1
        %s279 = scalar_lea.sflag [#allocation3], %s278
        %s280 = sand.u32 %s33, 1
        %s281 = smul.addr %s280, 512
        %s282 = scalar_lea.vmem [#allocation2], %s281
        // Predicated region
        $region45: #{tpu_custom_call.1} parent=43 // pred_check
          %p283 = pneg %p46
        $region46: #{tpu_custom_call.1} parent=43 // pred_check_branch
          %285 = sbr.rel (%p283) target = $region48
        $region47: #{tpu_custom_call.1} parent=43 // pred_region
          %286 = dma.done %s279, 8192
        $region48: #{tpu_custom_call.1} parent=43 // pred_fallthru
          _
        // Predicated region
        $region49: #{tpu_custom_call.1} parent=43 // pred_check
          %p287 = pneg %p67
        $region50: #{tpu_custom_call.1} parent=43 // pred_check_branch
          %289 = sbr.rel (%p287) target = $region52
        $region51: #{tpu_custom_call.1} parent=43 // pred_region
          %290 = dma.done [#allocation6], 16384
        $region52: #{tpu_custom_call.1} parent=43 // pred_fallthru
          _
        // Predicated region
        $region53: #{tpu_custom_call.1} parent=43 // pred_check
          %p291 = pneg %p88
        $region54: #{tpu_custom_call.1} parent=43 // pred_check_branch
          %293 = sbr.rel (%p291) target = $region56
        $region55: #{tpu_custom_call.1} parent=43 // pred_region
          %294 = dma.done [#allocation6], 256
        $region56: #{tpu_custom_call.1} parent=43 // pred_fallthru
          _
        // Predicated region
        $region57: #{tpu_custom_call.1} parent=43 // pred_check
          %p295 = pneg %p109
        $region58: #{tpu_custom_call.1} parent=43 // pred_check_branch
          %297 = sbr.rel (%p295) target = $region60
        $region59: #{tpu_custom_call.1} parent=43 // pred_region
          %298 = dma.done [#allocation9], 1024
        $region60: #{tpu_custom_call.1} parent=43 // pred_fallthru
          _
        // Predicated region
        $region61: #{tpu_custom_call.1} parent=43 // pred_check
          %p299 = pneg %p130
        $region62: #{tpu_custom_call.1} parent=43 // pred_check_branch
          %301 = sbr.rel (%p299) target = $region64
        $region63: #{tpu_custom_call.1} parent=43 // pred_region
          %302 = dma.done [#allocation9], 8192
        $region64: #{tpu_custom_call.1} parent=43 // pred_fallthru
          _
        %s303 = sand.u32 %s33, 1
        %s304 = scalar_lea.sflag [#allocation3], %s303
        %s305 = sand.u32 %s33, 1
        %s306 = smul.addr %s305, 512
        %s307 = scalar_lea.vmem [#allocation2], %s306
        %p308 = pneg %p46
        %p309 = pneg %p43
        %p310 = pneg %p67
        %p311 = pneg %p64
        %p312 = pneg %p88
        %p313 = pneg %p85
        %p314 = pneg %p109
        %p315 = pneg %p106
        %p316 = pneg %p130
        %p317 = pneg %p127
        %p318 = pneg %p151
        %p319 = pneg %p148
        %p320 = pneg %p177
        %p321 = pneg %p174
        %s322 = sand.u32 %s164, 1
        %s323 = scalar_lea.sflag [#allocation4], %s322
        %s324 = sand.u32 %s164, 1
        %s325 = smul.addr %s324, 512
        %s326 = scalar_lea.vmem [#allocation11], %s325
        %s327 = smul.u32 16, %s25
        %s328 = smul.u32 16, %s25
        %v330 = vld [vmem:[%s282] sm:$0xff]
        %v331 = vld [vmem:[%s282 + $0x8] sm:$0xff]
        %v332 = vld [vmem:[%s282 + $0x10] sm:$0xff]
        %v333 = vld [vmem:[%s282 + $0x18] sm:$0xff]
        %v334 = vld [vmem:[%s282 + $0x20] sm:$0xff]
        %v335 = vld [vmem:[%s282 + $0x28] sm:$0xff]
        %v336 = vld [vmem:[%s282 + $0x30] sm:$0xff]
        %v337 = vld [vmem:[%s282 + $0x38] sm:$0xff]
        %v338 = vld [vmem:[%s282 + $0x40] sm:$0xff]
        %v339 = vld [vmem:[%s282 + $0x48] sm:$0xff]
        %v340 = vld [vmem:[%s282 + $0x50] sm:$0xff]
        %v341 = vld [vmem:[%s282 + $0x58] sm:$0xff]
        %v342 = vld [vmem:[%s282 + $0x60] sm:$0xff]
        %v343 = vld [vmem:[%s282 + $0x68] sm:$0xff]
        %v344 = vld [vmem:[%s282 + $0x70] sm:$0xff]
        %v345 = vld [vmem:[%s282 + $0x78] sm:$0xff]
        %v346 = vld [vmem:[%s282 + $0x80] sm:$0xff]
        %v347 = vld [vmem:[%s282 + $0x88] sm:$0xff]
        %v348 = vld [vmem:[%s282 + $0x90] sm:$0xff]
        %v349 = vld [vmem:[%s282 + $0x98] sm:$0xff]
        %v350 = vld [vmem:[%s282 + $0xa0] sm:$0xff]
        %v351 = vld [vmem:[%s282 + $0xa8] sm:$0xff]
        %v352 = vld [vmem:[%s282 + $0xb0] sm:$0xff]
        %v353 = vld [vmem:[%s282 + $0xb8] sm:$0xff]
        %v354 = vld [vmem:[%s282 + $0xc0] sm:$0xff]
        %v355 = vld [vmem:[%s282 + $0xc8] sm:$0xff]
        %v356 = vld [vmem:[%s282 + $0xd0] sm:$0xff]
        %v357 = vld [vmem:[%s282 + $0xd8] sm:$0xff]
        %v358 = vld [vmem:[%s282 + $0xe0] sm:$0xff]
        %v359 = vld [vmem:[%s282 + $0xe8] sm:$0xff]
        %v360 = vld [vmem:[%s282 + $0xf0] sm:$0xff]
        %v361 = vld [vmem:[%s282 + $0xf8] sm:$0xff]
        %v362 = vld [vmem:[%s282 + $0x100] sm:$0xff]
        %v363 = vld [vmem:[%s282 + $0x108] sm:$0xff]
        %v364 = vld [vmem:[%s282 + $0x110] sm:$0xff]
        %v365 = vld [vmem:[%s282 + $0x118] sm:$0xff]
        %v366 = vld [vmem:[%s282 + $0x120] sm:$0xff]
        %v367 = vld [vmem:[%s282 + $0x128] sm:$0xff]
        %v368 = vld [vmem:[%s282 + $0x130] sm:$0xff]
        %v369 = vld [vmem:[%s282 + $0x138] sm:$0xff]
        %v370 = vld [vmem:[%s282 + $0x140] sm:$0xff]
        %v371 = vld [vmem:[%s282 + $0x148] sm:$0xff]
        %v372 = vld [vmem:[%s282 + $0x150] sm:$0xff]
        %v373 = vld [vmem:[%s282 + $0x158] sm:$0xff]
        %v374 = vld [vmem:[%s282 + $0x160] sm:$0xff]
        %v375 = vld [vmem:[%s282 + $0x168] sm:$0xff]
        %v376 = vld [vmem:[%s282 + $0x170] sm:$0xff]
        %v377 = vld [vmem:[%s282 + $0x178] sm:$0xff]
        %v378 = vld [vmem:[%s282 + $0x180] sm:$0xff]
        %v379 = vld [vmem:[%s282 + $0x188] sm:$0xff]
        %v380 = vld [vmem:[%s282 + $0x190] sm:$0xff]
        %v381 = vld [vmem:[%s282 + $0x198] sm:$0xff]
        %v382 = vld [vmem:[%s282 + $0x1a0] sm:$0xff]
        %v383 = vld [vmem:[%s282 + $0x1a8] sm:$0xff]
        %v384 = vld [vmem:[%s282 + $0x1b0] sm:$0xff]
        %v385 = vld [vmem:[%s282 + $0x1b8] sm:$0xff]
        %v386 = vld [vmem:[%s282 + $0x1c0] sm:$0xff]
        %v387 = vld [vmem:[%s282 + $0x1c8] sm:$0xff]
        %v388 = vld [vmem:[%s282 + $0x1d0] sm:$0xff]
        %v389 = vld [vmem:[%s282 + $0x1d8] sm:$0xff]
        %v390 = vld [vmem:[%s282 + $0x1e0] sm:$0xff]
        %v391 = vld [vmem:[%s282 + $0x1e8] sm:$0xff]
        %v392 = vld [vmem:[%s282 + $0x1f0] sm:$0xff]
        %v393 = vld [vmem:[%s282 + $0x1f8] sm:$0xff]
        %v394 = vld [vmem:[#allocation5] sm:$0xff]
        %v395 = vld [vmem:[#allocation5 + $0x8] sm:$0xff]
        %v396 = vld [vmem:[#allocation5 + $0x10] sm:$0xff]
        %v397 = vld [vmem:[#allocation5 + $0x18] sm:$0xff]
        %v398 = vld [vmem:[#allocation5 + $0x20] sm:$0xff]
        %v399 = vld [vmem:[#allocation5 + $0x28] sm:$0xff]
        %v400 = vld [vmem:[#allocation5 + $0x30] sm:$0xff]
        %v401 = vld [vmem:[#allocation5 + $0x38] sm:$0xff]
        %v402 = vld [vmem:[#allocation5 + $0x40] sm:$0xff]
        %v403 = vld [vmem:[#allocation5 + $0x48] sm:$0xff]
        %v404 = vld [vmem:[#allocation5 + $0x50] sm:$0xff]
        %v405 = vld [vmem:[#allocation5 + $0x58] sm:$0xff]
        %v406 = vld [vmem:[#allocation5 + $0x60] sm:$0xff]
        %v407 = vld [vmem:[#allocation5 + $0x68] sm:$0xff]
        %v408 = vld [vmem:[#allocation5 + $0x70] sm:$0xff]
        %v409 = vld [vmem:[#allocation5 + $0x78] sm:$0xff]
        %v410 = vld [vmem:[#allocation5 + $0x80] sm:$0xff]
        %v411 = vld [vmem:[#allocation5 + $0x88] sm:$0xff]
        %v412 = vld [vmem:[#allocation5 + $0x90] sm:$0xff]
        %v413 = vld [vmem:[#allocation5 + $0x98] sm:$0xff]
        %v414 = vld [vmem:[#allocation5 + $0xa0] sm:$0xff]
        %v415 = vld [vmem:[#allocation5 + $0xa8] sm:$0xff]
        %v416 = vld [vmem:[#allocation5 + $0xb0] sm:$0xff]
        %v417 = vld [vmem:[#allocation5 + $0xb8] sm:$0xff]
        %v418 = vld [vmem:[#allocation5 + $0xc0] sm:$0xff]
        %v419 = vld [vmem:[#allocation5 + $0xc8] sm:$0xff]
        %v420 = vld [vmem:[#allocation5 + $0xd0] sm:$0xff]
        %v421 = vld [vmem:[#allocation5 + $0xd8] sm:$0xff]
        %v422 = vld [vmem:[#allocation5 + $0xe0] sm:$0xff]
        %v423 = vld [vmem:[#allocation5 + $0xe8] sm:$0xff]
        %v424 = vld [vmem:[#allocation5 + $0xf0] sm:$0xff]
        %v425 = vld [vmem:[#allocation5 + $0xf8] sm:$0xff]
        %v426 = vld [vmem:[#allocation5 + $0x100] sm:$0xff]
        %v427 = vld [vmem:[#allocation5 + $0x108] sm:$0xff]
        %v428 = vld [vmem:[#allocation5 + $0x110] sm:$0xff]
        %v429 = vld [vmem:[#allocation5 + $0x118] sm:$0xff]
        %v430 = vld [vmem:[#allocation5 + $0x120] sm:$0xff]
        %v431 = vld [vmem:[#allocation5 + $0x128] sm:$0xff]
        %v432 = vld [vmem:[#allocation5 + $0x130] sm:$0xff]
        %v433 = vld [vmem:[#allocation5 + $0x138] sm:$0xff]
        %v434 = vld [vmem:[#allocation5 + $0x140] sm:$0xff]
        %v435 = vld [vmem:[#allocation5 + $0x148] sm:$0xff]
        %v436 = vld [vmem:[#allocation5 + $0x150] sm:$0xff]
        %v437 = vld [vmem:[#allocation5 + $0x158] sm:$0xff]
        %v438 = vld [vmem:[#allocation5 + $0x160] sm:$0xff]
        %v439 = vld [vmem:[#allocation5 + $0x168] sm:$0xff]
        %v440 = vld [vmem:[#allocation5 + $0x170] sm:$0xff]
        %v441 = vld [vmem:[#allocation5 + $0x178] sm:$0xff]
        %v442 = vld [vmem:[#allocation5 + $0x180] sm:$0xff]
        %v443 = vld [vmem:[#allocation5 + $0x188] sm:$0xff]
        %v444 = vld [vmem:[#allocation5 + $0x190] sm:$0xff]
        %v445 = vld [vmem:[#allocation5 + $0x198] sm:$0xff]
        %v446 = vld [vmem:[#allocation5 + $0x1a0] sm:$0xff]
        %v447 = vld [vmem:[#allocation5 + $0x1a8] sm:$0xff]
        %v448 = vld [vmem:[#allocation5 + $0x1b0] sm:$0xff]
        %v449 = vld [vmem:[#allocation5 + $0x1b8] sm:$0xff]
        %v450 = vld [vmem:[#allocation5 + $0x1c0] sm:$0xff]
        %v451 = vld [vmem:[#allocation5 + $0x1c8] sm:$0xff]
        %v452 = vld [vmem:[#allocation5 + $0x1d0] sm:$0xff]
        %v453 = vld [vmem:[#allocation5 + $0x1d8] sm:$0xff]
        %v454 = vld [vmem:[#allocation5 + $0x1e0] sm:$0xff]
        %v455 = vld [vmem:[#allocation5 + $0x1e8] sm:$0xff]
        %v456 = vld [vmem:[#allocation5 + $0x1f0] sm:$0xff]
        %v457 = vld [vmem:[#allocation5 + $0x1f8] sm:$0xff]
        %v458 = vld [vmem:[#allocation5 + $0x200] sm:$0xff]
        %v459 = vld [vmem:[#allocation5 + $0x208] sm:$0xff]
        %v460 = vld [vmem:[#allocation5 + $0x210] sm:$0xff]
        %v461 = vld [vmem:[#allocation5 + $0x218] sm:$0xff]
        %v462 = vld [vmem:[#allocation5 + $0x220] sm:$0xff]
        %v463 = vld [vmem:[#allocation5 + $0x228] sm:$0xff]
        %v464 = vld [vmem:[#allocation5 + $0x230] sm:$0xff]
        %v465 = vld [vmem:[#allocation5 + $0x238] sm:$0xff]
        %v466 = vld [vmem:[#allocation5 + $0x240] sm:$0xff]
        %v467 = vld [vmem:[#allocation5 + $0x248] sm:$0xff]
        %v468 = vld [vmem:[#allocation5 + $0x250] sm:$0xff]
        %v469 = vld [vmem:[#allocation5 + $0x258] sm:$0xff]
        %v470 = vld [vmem:[#allocation5 + $0x260] sm:$0xff]
        %v471 = vld [vmem:[#allocation5 + $0x268] sm:$0xff]
        %v472 = vld [vmem:[#allocation5 + $0x270] sm:$0xff]
        %v473 = vld [vmem:[#allocation5 + $0x278] sm:$0xff]
        %v474 = vld [vmem:[#allocation5 + $0x280] sm:$0xff]
        %v475 = vld [vmem:[#allocation5 + $0x288] sm:$0xff]
        %v476 = vld [vmem:[#allocation5 + $0x290] sm:$0xff]
        %v477 = vld [vmem:[#allocation5 + $0x298] sm:$0xff]
        %v478 = vld [vmem:[#allocation5 + $0x2a0] sm:$0xff]
        %v479 = vld [vmem:[#allocation5 + $0x2a8] sm:$0xff]
        %v480 = vld [vmem:[#allocation5 + $0x2b0] sm:$0xff]
        %v481 = vld [vmem:[#allocation5 + $0x2b8] sm:$0xff]
        %v482 = vld [vmem:[#allocation5 + $0x2c0] sm:$0xff]
        %v483 = vld [vmem:[#allocation5 + $0x2c8] sm:$0xff]
        %v484 = vld [vmem:[#allocation5 + $0x2d0] sm:$0xff]
        %v485 = vld [vmem:[#allocation5 + $0x2d8] sm:$0xff]
        %v486 = vld [vmem:[#allocation5 + $0x2e0] sm:$0xff]
        %v487 = vld [vmem:[#allocation5 + $0x2e8] sm:$0xff]
        %v488 = vld [vmem:[#allocation5 + $0x2f0] sm:$0xff]
        %v489 = vld [vmem:[#allocation5 + $0x2f8] sm:$0xff]
        %v490 = vld [vmem:[#allocation5 + $0x300] sm:$0xff]
        %v491 = vld [vmem:[#allocation5 + $0x308] sm:$0xff]
        %v492 = vld [vmem:[#allocation5 + $0x310] sm:$0xff]
        %v493 = vld [vmem:[#allocation5 + $0x318] sm:$0xff]
        %v494 = vld [vmem:[#allocation5 + $0x320] sm:$0xff]
        %v495 = vld [vmem:[#allocation5 + $0x328] sm:$0xff]
        %v496 = vld [vmem:[#allocation5 + $0x330] sm:$0xff]
        %v497 = vld [vmem:[#allocation5 + $0x338] sm:$0xff]
        %v498 = vld [vmem:[#allocation5 + $0x340] sm:$0xff]
        %v499 = vld [vmem:[#allocation5 + $0x348] sm:$0xff]
        %v500 = vld [vmem:[#allocation5 + $0x350] sm:$0xff]
        %v501 = vld [vmem:[#allocation5 + $0x358] sm:$0xff]
        %v502 = vld [vmem:[#allocation5 + $0x360] sm:$0xff]
        %v503 = vld [vmem:[#allocation5 + $0x368] sm:$0xff]
        %v504 = vld [vmem:[#allocation5 + $0x370] sm:$0xff]
        %v505 = vld [vmem:[#allocation5 + $0x378] sm:$0xff]
        %v506 = vld [vmem:[#allocation5 + $0x380] sm:$0xff]
        %v507 = vld [vmem:[#allocation5 + $0x388] sm:$0xff]
        %v508 = vld [vmem:[#allocation5 + $0x390] sm:$0xff]
        %v509 = vld [vmem:[#allocation5 + $0x398] sm:$0xff]
        %v510 = vld [vmem:[#allocation5 + $0x3a0] sm:$0xff]
        %v511 = vld [vmem:[#allocation5 + $0x3a8] sm:$0xff]
        %v512 = vld [vmem:[#allocation5 + $0x3b0] sm:$0xff]
        %v513 = vld [vmem:[#allocation5 + $0x3b8] sm:$0xff]
        %v514 = vld [vmem:[#allocation5 + $0x3c0] sm:$0xff]
        %v515 = vld [vmem:[#allocation5 + $0x3c8] sm:$0xff]
        %v516 = vld [vmem:[#allocation5 + $0x3d0] sm:$0xff]
        %v517 = vld [vmem:[#allocation5 + $0x3d8] sm:$0xff]
        %v518 = vld [vmem:[#allocation5 + $0x3e0] sm:$0xff]
        %v519 = vld [vmem:[#allocation5 + $0x3e8] sm:$0xff]
        %v520 = vld [vmem:[#allocation5 + $0x3f0] sm:$0xff]
        %v521 = vld [vmem:[#allocation5 + $0x3f8] sm:$0xff]
        %v522 = vld [vmem:[#allocation7] sm:$0xff]
        %v523 = vld [vmem:[#allocation7 + $0x8] sm:$0xff]
        %v588 = vunpack.c.l.b16 %v330
        %v589 = vunpack.c.h.b16 %v330
        %v590 = vunpack.c.l.b16 %v331
        %v591 = vunpack.c.h.b16 %v331
        %v592 = vunpack.c.l.b16 %v332
        %v593 = vunpack.c.h.b16 %v332
        %v594 = vunpack.c.l.b16 %v333
        %v595 = vunpack.c.h.b16 %v333
        %v596 = vunpack.c.l.b16 %v334
        %v597 = vunpack.c.h.b16 %v334
        %v598 = vunpack.c.l.b16 %v335
        %v599 = vunpack.c.h.b16 %v335
        %v600 = vunpack.c.l.b16 %v336
        %v601 = vunpack.c.h.b16 %v336
        %v602 = vunpack.c.l.b16 %v337
        %v603 = vunpack.c.h.b16 %v337
        %v604 = vunpack.c.l.b16 %v338
        %v605 = vunpack.c.h.b16 %v338
        %v606 = vunpack.c.l.b16 %v339
        %v607 = vunpack.c.h.b16 %v339
        %v608 = vunpack.c.l.b16 %v340
        %v609 = vunpack.c.h.b16 %v340
        %v610 = vunpack.c.l.b16 %v341
        %v611 = vunpack.c.h.b16 %v341
        %v612 = vunpack.c.l.b16 %v342
        %v613 = vunpack.c.h.b16 %v342
        %v614 = vunpack.c.l.b16 %v343
        %v615 = vunpack.c.h.b16 %v343
        %v616 = vunpack.c.l.b16 %v344
        %v617 = vunpack.c.h.b16 %v344
        %v618 = vunpack.c.l.b16 %v345
        %v619 = vunpack.c.h.b16 %v345
        %v620 = vunpack.c.l.b16 %v346
        %v621 = vunpack.c.h.b16 %v346
        %v622 = vunpack.c.l.b16 %v347
        %v623 = vunpack.c.h.b16 %v347
        %v624 = vunpack.c.l.b16 %v348
        %v625 = vunpack.c.h.b16 %v348
        %v626 = vunpack.c.l.b16 %v349
        %v627 = vunpack.c.h.b16 %v349
        %v628 = vunpack.c.l.b16 %v350
        %v629 = vunpack.c.h.b16 %v350
        %v630 = vunpack.c.l.b16 %v351
        %v631 = vunpack.c.h.b16 %v351
        %v632 = vunpack.c.l.b16 %v352
        %v633 = vunpack.c.h.b16 %v352
        %v634 = vunpack.c.l.b16 %v353
        %v635 = vunpack.c.h.b16 %v353
        %v636 = vunpack.c.l.b16 %v354
        %v637 = vunpack.c.h.b16 %v354
        %v638 = vunpack.c.l.b16 %v355
        %v639 = vunpack.c.h.b16 %v355
        %v640 = vunpack.c.l.b16 %v356
        %v641 = vunpack.c.h.b16 %v356
        %v642 = vunpack.c.l.b16 %v357
        %v643 = vunpack.c.h.b16 %v357
        %v644 = vunpack.c.l.b16 %v358
        %v645 = vunpack.c.h.b16 %v358
        %v646 = vunpack.c.l.b16 %v359
        %v647 = vunpack.c.h.b16 %v359
        %v648 = vunpack.c.l.b16 %v360
        %v649 = vunpack.c.h.b16 %v360
        %v650 = vunpack.c.l.b16 %v361
        %v651 = vunpack.c.h.b16 %v361
        %v652 = vunpack.c.l.b16 %v362
        %v653 = vunpack.c.h.b16 %v362
        %v654 = vunpack.c.l.b16 %v363
        %v655 = vunpack.c.h.b16 %v363
        %v656 = vunpack.c.l.b16 %v364
        %v657 = vunpack.c.h.b16 %v364
        %v658 = vunpack.c.l.b16 %v365
        %v659 = vunpack.c.h.b16 %v365
        %v660 = vunpack.c.l.b16 %v366
        %v661 = vunpack.c.h.b16 %v366
        %v662 = vunpack.c.l.b16 %v367
        %v663 = vunpack.c.h.b16 %v367
        %v664 = vunpack.c.l.b16 %v368
        %v665 = vunpack.c.h.b16 %v368
        %v666 = vunpack.c.l.b16 %v369
        %v667 = vunpack.c.h.b16 %v369
        %v668 = vunpack.c.l.b16 %v370
        %v669 = vunpack.c.h.b16 %v370
        %v670 = vunpack.c.l.b16 %v371
        %v671 = vunpack.c.h.b16 %v371
        %v672 = vunpack.c.l.b16 %v372
        %v673 = vunpack.c.h.b16 %v372
        %v674 = vunpack.c.l.b16 %v373
        %v675 = vunpack.c.h.b16 %v373
        %v676 = vunpack.c.l.b16 %v374
        %v677 = vunpack.c.h.b16 %v374
        %v678 = vunpack.c.l.b16 %v375
        %v679 = vunpack.c.h.b16 %v375
        %v680 = vunpack.c.l.b16 %v376
        %v681 = vunpack.c.h.b16 %v376
        %v682 = vunpack.c.l.b16 %v377
        %v683 = vunpack.c.h.b16 %v377
        %v684 = vunpack.c.l.b16 %v378
        %v685 = vunpack.c.h.b16 %v378
        %v686 = vunpack.c.l.b16 %v379
        %v687 = vunpack.c.h.b16 %v379
        %v688 = vunpack.c.l.b16 %v380
        %v689 = vunpack.c.h.b16 %v380
        %v690 = vunpack.c.l.b16 %v381
        %v691 = vunpack.c.h.b16 %v381
        %v692 = vunpack.c.l.b16 %v382
        %v693 = vunpack.c.h.b16 %v382
        %v694 = vunpack.c.l.b16 %v383
        %v695 = vunpack.c.h.b16 %v383
        %v696 = vunpack.c.l.b16 %v384
        %v697 = vunpack.c.h.b16 %v384
        %v698 = vunpack.c.l.b16 %v385
        %v699 = vunpack.c.h.b16 %v385
        %v700 = vunpack.c.l.b16 %v386
        %v701 = vunpack.c.h.b16 %v386
        %v702 = vunpack.c.l.b16 %v387
        %v703 = vunpack.c.h.b16 %v387
        %v704 = vunpack.c.l.b16 %v388
        %v705 = vunpack.c.h.b16 %v388
        %v706 = vunpack.c.l.b16 %v389
        %v707 = vunpack.c.h.b16 %v389
        %v708 = vunpack.c.l.b16 %v390
        %v709 = vunpack.c.h.b16 %v390
        %v710 = vunpack.c.l.b16 %v391
        %v711 = vunpack.c.h.b16 %v391
        %v712 = vunpack.c.l.b16 %v392
        %v713 = vunpack.c.h.b16 %v392
        %v714 = vunpack.c.l.b16 %v393
        %v715 = vunpack.c.h.b16 %v393
        %v716 = vpack.c.b16 %v596, %v588
        %v717 = vpack.c.b16 %v597, %v589
        %v718 = vpack.c.b16 %v598, %v590
        %v719 = vpack.c.b16 %v599, %v591
        %v720 = vpack.c.b16 %v600, %v592
        %v721 = vpack.c.b16 %v601, %v593
        %v722 = vpack.c.b16 %v602, %v594
        %v723 = vpack.c.b16 %v603, %v595
        %v724 = vpack.c.b16 %v612, %v604
        %v725 = vpack.c.b16 %v613, %v605
        %v726 = vpack.c.b16 %v614, %v606
        %v727 = vpack.c.b16 %v615, %v607
        %v728 = vpack.c.b16 %v616, %v608
        %v729 = vpack.c.b16 %v617, %v609
        %v730 = vpack.c.b16 %v618, %v610
        %v731 = vpack.c.b16 %v619, %v611
        %v732 = vpack.c.b16 %v628, %v620
        %v733 = vpack.c.b16 %v629, %v621
        %v734 = vpack.c.b16 %v630, %v622
        %v735 = vpack.c.b16 %v631, %v623
        %v736 = vpack.c.b16 %v632, %v624
        %v737 = vpack.c.b16 %v633, %v625
        %v738 = vpack.c.b16 %v634, %v626
        %v739 = vpack.c.b16 %v635, %v627
        %v740 = vpack.c.b16 %v644, %v636
        %v741 = vpack.c.b16 %v645, %v637
        %v742 = vpack.c.b16 %v646, %v638
        %v743 = vpack.c.b16 %v647, %v639
        %v744 = vpack.c.b16 %v648, %v640
        %v745 = vpack.c.b16 %v649, %v641
        %v746 = vpack.c.b16 %v650, %v642
        %v747 = vpack.c.b16 %v651, %v643
        %v748 = vpack.c.b16 %v660, %v652
        %v749 = vpack.c.b16 %v661, %v653
        %v750 = vpack.c.b16 %v662, %v654
        %v751 = vpack.c.b16 %v663, %v655
        %v752 = vpack.c.b16 %v664, %v656
        %v753 = vpack.c.b16 %v665, %v657
        %v754 = vpack.c.b16 %v666, %v658
        %v755 = vpack.c.b16 %v667, %v659
        %v756 = vpack.c.b16 %v676, %v668
        %v757 = vpack.c.b16 %v677, %v669
        %v758 = vpack.c.b16 %v678, %v670
        %v759 = vpack.c.b16 %v679, %v671
        %v760 = vpack.c.b16 %v680, %v672
        %v761 = vpack.c.b16 %v681, %v673
        %v762 = vpack.c.b16 %v682, %v674
        %v763 = vpack.c.b16 %v683, %v675
        %v764 = vpack.c.b16 %v692, %v684
        %v765 = vpack.c.b16 %v693, %v685
        %v766 = vpack.c.b16 %v694, %v686
        %v767 = vpack.c.b16 %v695, %v687
        %v768 = vpack.c.b16 %v696, %v688
        %v769 = vpack.c.b16 %v697, %v689
        %v770 = vpack.c.b16 %v698, %v690
        %v771 = vpack.c.b16 %v699, %v691
        %v772 = vpack.c.b16 %v708, %v700
        %v773 = vpack.c.b16 %v709, %v701
        %v774 = vpack.c.b16 %v710, %v702
        %v775 = vpack.c.b16 %v711, %v703
        %v776 = vpack.c.b16 %v712, %v704
        %v777 = vpack.c.b16 %v713, %v705
        %v778 = vpack.c.b16 %v714, %v706
        %v779 = vpack.c.b16 %v715, %v707
        %v972 = vunpack.c.l.b16 %v394
        %v973 = vunpack.c.h.b16 %v394
        %v974 = vunpack.c.l.b16 %v395
        %v975 = vunpack.c.h.b16 %v395
        %v976 = vunpack.c.l.b16 %v396
        %v977 = vunpack.c.h.b16 %v396
        %v978 = vunpack.c.l.b16 %v397
        %v979 = vunpack.c.h.b16 %v397
        %v980 = vunpack.c.l.b16 %v398
        %v981 = vunpack.c.h.b16 %v398
        %v982 = vunpack.c.l.b16 %v399
        %v983 = vunpack.c.h.b16 %v399
        %v984 = vunpack.c.l.b16 %v400
        %v985 = vunpack.c.h.b16 %v400
        %v986 = vunpack.c.l.b16 %v401
        %v987 = vunpack.c.h.b16 %v401
        %v988 = vunpack.c.l.b16 %v402
        %v989 = vunpack.c.h.b16 %v402
        %v990 = vunpack.c.l.b16 %v403
        %v991 = vunpack.c.h.b16 %v403
        %v992 = vunpack.c.l.b16 %v404
        %v993 = vunpack.c.h.b16 %v404
        %v994 = vunpack.c.l.b16 %v405
        %v995 = vunpack.c.h.b16 %v405
        %v996 = vunpack.c.l.b16 %v406
        %v997 = vunpack.c.h.b16 %v406
        %v998 = vunpack.c.l.b16 %v407
        %v999 = vunpack.c.h.b16 %v407
        %v1000 = vunpack.c.l.b16 %v408
        %v1001 = vunpack.c.h.b16 %v408
        %v1002 = vunpack.c.l.b16 %v409
        %v1003 = vunpack.c.h.b16 %v409
        %v1004 = vunpack.c.l.b16 %v410
        %v1005 = vunpack.c.h.b16 %v410
        %v1006 = vunpack.c.l.b16 %v411
        %v1007 = vunpack.c.h.b16 %v411
        %v1008 = vunpack.c.l.b16 %v412
        %v1009 = vunpack.c.h.b16 %v412
        %v1010 = vunpack.c.l.b16 %v413
        %v1011 = vunpack.c.h.b16 %v413
        %v1012 = vunpack.c.l.b16 %v414
        %v1013 = vunpack.c.h.b16 %v414
        %v1014 = vunpack.c.l.b16 %v415
        %v1015 = vunpack.c.h.b16 %v415
        %v1016 = vunpack.c.l.b16 %v416
        %v1017 = vunpack.c.h.b16 %v416
        %v1018 = vunpack.c.l.b16 %v417
        %v1019 = vunpack.c.h.b16 %v417
        %v1020 = vunpack.c.l.b16 %v418
        %v1021 = vunpack.c.h.b16 %v418
        %v1022 = vunpack.c.l.b16 %v419
        %v1023 = vunpack.c.h.b16 %v419
        %v1024 = vunpack.c.l.b16 %v420
        %v1025 = vunpack.c.h.b16 %v420
        %v1026 = vunpack.c.l.b16 %v421
        %v1027 = vunpack.c.h.b16 %v421
        %v1028 = vunpack.c.l.b16 %v422
        %v1029 = vunpack.c.h.b16 %v422
        %v1030 = vunpack.c.l.b16 %v423
        %v1031 = vunpack.c.h.b16 %v423
        %v1032 = vunpack.c.l.b16 %v424
        %v1033 = vunpack.c.h.b16 %v424
        %v1034 = vunpack.c.l.b16 %v425
        %v1035 = vunpack.c.h.b16 %v425
        %v1036 = vunpack.c.l.b16 %v426
        %v1037 = vunpack.c.h.b16 %v426
        %v1038 = vunpack.c.l.b16 %v427
        %v1039 = vunpack.c.h.b16 %v427
        %v1040 = vunpack.c.l.b16 %v428
        %v1041 = vunpack.c.h.b16 %v428
        %v1042 = vunpack.c.l.b16 %v429
        %v1043 = vunpack.c.h.b16 %v429
        %v1044 = vunpack.c.l.b16 %v430
        %v1045 = vunpack.c.h.b16 %v430
        %v1046 = vunpack.c.l.b16 %v431
        %v1047 = vunpack.c.h.b16 %v431
        %v1048 = vunpack.c.l.b16 %v432
        %v1049 = vunpack.c.h.b16 %v432
        %v1050 = vunpack.c.l.b16 %v433
        %v1051 = vunpack.c.h.b16 %v433
        %v1052 = vunpack.c.l.b16 %v434
        %v1053 = vunpack.c.h.b16 %v434
        %v1054 = vunpack.c.l.b16 %v435
        %v1055 = vunpack.c.h.b16 %v435
        %v1056 = vunpack.c.l.b16 %v436
        %v1057 = vunpack.c.h.b16 %v436
        %v1058 = vunpack.c.l.b16 %v437
        %v1059 = vunpack.c.h.b16 %v437
        %v1060 = vunpack.c.l.b16 %v438
        %v1061 = vunpack.c.h.b16 %v438
        %v1062 = vunpack.c.l.b16 %v439
        %v1063 = vunpack.c.h.b16 %v439
        %v1064 = vunpack.c.l.b16 %v440
        %v1065 = vunpack.c.h.b16 %v440
        %v1066 = vunpack.c.l.b16 %v441
        %v1067 = vunpack.c.h.b16 %v441
        %v1068 = vunpack.c.l.b16 %v442
        %v1069 = vunpack.c.h.b16 %v442
        %v1070 = vunpack.c.l.b16 %v443
        %v1071 = vunpack.c.h.b16 %v443
        %v1072 = vunpack.c.l.b16 %v444
        %v1073 = vunpack.c.h.b16 %v444
        %v1074 = vunpack.c.l.b16 %v445
        %v1075 = vunpack.c.h.b16 %v445
        %v1076 = vunpack.c.l.b16 %v446
        %v1077 = vunpack.c.h.b16 %v446
        %v1078 = vunpack.c.l.b16 %v447
        %v1079 = vunpack.c.h.b16 %v447
        %v1080 = vunpack.c.l.b16 %v448
        %v1081 = vunpack.c.h.b16 %v448
        %v1082 = vunpack.c.l.b16 %v449
        %v1083 = vunpack.c.h.b16 %v449
        %v1084 = vunpack.c.l.b16 %v450
        %v1085 = vunpack.c.h.b16 %v450
        %v1086 = vunpack.c.l.b16 %v451
        %v1087 = vunpack.c.h.b16 %v451
        %v1088 = vunpack.c.l.b16 %v452
        %v1089 = vunpack.c.h.b16 %v452
        %v1090 = vunpack.c.l.b16 %v453
        %v1091 = vunpack.c.h.b16 %v453
        %v1092 = vunpack.c.l.b16 %v454
        %v1093 = vunpack.c.h.b16 %v454
        %v1094 = vunpack.c.l.b16 %v455
        %v1095 = vunpack.c.h.b16 %v455
        %v1096 = vunpack.c.l.b16 %v456
        %v1097 = vunpack.c.h.b16 %v456
        %v1098 = vunpack.c.l.b16 %v457
        %v1099 = vunpack.c.h.b16 %v457
        %v1100 = vunpack.c.l.b16 %v458
        %v1101 = vunpack.c.h.b16 %v458
        %v1102 = vunpack.c.l.b16 %v459
        %v1103 = vunpack.c.h.b16 %v459
        %v1104 = vunpack.c.l.b16 %v460
        %v1105 = vunpack.c.h.b16 %v460
        %v1106 = vunpack.c.l.b16 %v461
        %v1107 = vunpack.c.h.b16 %v461
        %v1108 = vunpack.c.l.b16 %v462
        %v1109 = vunpack.c.h.b16 %v462
        %v1110 = vunpack.c.l.b16 %v463
        %v1111 = vunpack.c.h.b16 %v463
        %v1112 = vunpack.c.l.b16 %v464
        %v1113 = vunpack.c.h.b16 %v464
        %v1114 = vunpack.c.l.b16 %v465
        %v1115 = vunpack.c.h.b16 %v465
        %v1116 = vunpack.c.l.b16 %v466
        %v1117 = vunpack.c.h.b16 %v466
        %v1118 = vunpack.c.l.b16 %v467
        %v1119 = vunpack.c.h.b16 %v467
        %v1120 = vunpack.c.l.b16 %v468
        %v1121 = vunpack.c.h.b16 %v468
        %v1122 = vunpack.c.l.b16 %v469
        %v1123 = vunpack.c.h.b16 %v469
        %v1124 = vunpack.c.l.b16 %v470
        %v1125 = vunpack.c.h.b16 %v470
        %v1126 = vunpack.c.l.b16 %v471
        %v1127 = vunpack.c.h.b16 %v471
        %v1128 = vunpack.c.l.b16 %v472
        %v1129 = vunpack.c.h.b16 %v472
        %v1130 = vunpack.c.l.b16 %v473
        %v1131 = vunpack.c.h.b16 %v473
        %v1132 = vunpack.c.l.b16 %v474
        %v1133 = vunpack.c.h.b16 %v474
        %v1134 = vunpack.c.l.b16 %v475
        %v1135 = vunpack.c.h.b16 %v475
        %v1136 = vunpack.c.l.b16 %v476
        %v1137 = vunpack.c.h.b16 %v476
        %v1138 = vunpack.c.l.b16 %v477
        %v1139 = vunpack.c.h.b16 %v477
        %v1140 = vunpack.c.l.b16 %v478
        %v1141 = vunpack.c.h.b16 %v478
        %v1142 = vunpack.c.l.b16 %v479
        %v1143 = vunpack.c.h.b16 %v479
        %v1144 = vunpack.c.l.b16 %v480
        %v1145 = vunpack.c.h.b16 %v480
        %v1146 = vunpack.c.l.b16 %v481
        %v1147 = vunpack.c.h.b16 %v481
        %v1148 = vunpack.c.l.b16 %v482
        %v1149 = vunpack.c.h.b16 %v482
        %v1150 = vunpack.c.l.b16 %v483
        %v1151 = vunpack.c.h.b16 %v483
        %v1152 = vunpack.c.l.b16 %v484
        %v1153 = vunpack.c.h.b16 %v484
        %v1154 = vunpack.c.l.b16 %v485
        %v1155 = vunpack.c.h.b16 %v485
        %v1156 = vunpack.c.l.b16 %v486
        %v1157 = vunpack.c.h.b16 %v486
        %v1158 = vunpack.c.l.b16 %v487
        %v1159 = vunpack.c.h.b16 %v487
        %v1160 = vunpack.c.l.b16 %v488
        %v1161 = vunpack.c.h.b16 %v488
        %v1162 = vunpack.c.l.b16 %v489
        %v1163 = vunpack.c.h.b16 %v489
        %v1164 = vunpack.c.l.b16 %v490
        %v1165 = vunpack.c.h.b16 %v490
        %v1166 = vunpack.c.l.b16 %v491
        %v1167 = vunpack.c.h.b16 %v491
        %v1168 = vunpack.c.l.b16 %v492
        %v1169 = vunpack.c.h.b16 %v492
        %v1170 = vunpack.c.l.b16 %v493
        %v1171 = vunpack.c.h.b16 %v493
        %v1172 = vunpack.c.l.b16 %v494
        %v1173 = vunpack.c.h.b16 %v494
        %v1174 = vunpack.c.l.b16 %v495
        %v1175 = vunpack.c.h.b16 %v495
        %v1176 = vunpack.c.l.b16 %v496
        %v1177 = vunpack.c.h.b16 %v496
        %v1178 = vunpack.c.l.b16 %v497
        %v1179 = vunpack.c.h.b16 %v497
        %v1180 = vunpack.c.l.b16 %v498
        %v1181 = vunpack.c.h.b16 %v498
        %v1182 = vunpack.c.l.b16 %v499
        %v1183 = vunpack.c.h.b16 %v499
        %v1184 = vunpack.c.l.b16 %v500
        %v1185 = vunpack.c.h.b16 %v500
        %v1186 = vunpack.c.l.b16 %v501
        %v1187 = vunpack.c.h.b16 %v501
        %v1188 = vunpack.c.l.b16 %v502
        %v1189 = vunpack.c.h.b16 %v502
        %v1190 = vunpack.c.l.b16 %v503
        %v1191 = vunpack.c.h.b16 %v503
        %v1192 = vunpack.c.l.b16 %v504
        %v1193 = vunpack.c.h.b16 %v504
        %v1194 = vunpack.c.l.b16 %v505
        %v1195 = vunpack.c.h.b16 %v505
        %v1196 = vunpack.c.l.b16 %v506
        %v1197 = vunpack.c.h.b16 %v506
        %v1198 = vunpack.c.l.b16 %v507
        %v1199 = vunpack.c.h.b16 %v507
        %v1200 = vunpack.c.l.b16 %v508
        %v1201 = vunpack.c.h.b16 %v508
        %v1202 = vunpack.c.l.b16 %v509
        %v1203 = vunpack.c.h.b16 %v509
        %v1204 = vunpack.c.l.b16 %v510
        %v1205 = vunpack.c.h.b16 %v510
        %v1206 = vunpack.c.l.b16 %v511
        %v1207 = vunpack.c.h.b16 %v511
        %v1208 = vunpack.c.l.b16 %v512
        %v1209 = vunpack.c.h.b16 %v512
        %v1210 = vunpack.c.l.b16 %v513
        %v1211 = vunpack.c.h.b16 %v513
        %v1212 = vunpack.c.l.b16 %v514
        %v1213 = vunpack.c.h.b16 %v514
        %v1214 = vunpack.c.l.b16 %v515
        %v1215 = vunpack.c.h.b16 %v515
        %v1216 = vunpack.c.l.b16 %v516
        %v1217 = vunpack.c.h.b16 %v516
        %v1218 = vunpack.c.l.b16 %v517
        %v1219 = vunpack.c.h.b16 %v517
        %v1220 = vunpack.c.l.b16 %v518
        %v1221 = vunpack.c.h.b16 %v518
        %v1222 = vunpack.c.l.b16 %v519
        %v1223 = vunpack.c.h.b16 %v519
        %v1224 = vunpack.c.l.b16 %v520
        %v1225 = vunpack.c.h.b16 %v520
        %v1226 = vunpack.c.l.b16 %v521
        %v1227 = vunpack.c.h.b16 %v521
        %v1228 = vpack.c.b16 %v974, %v972
        %v1229 = vpack.c.b16 %v975, %v973
        %v1230 = vpack.c.b16 %v978, %v976
        %v1231 = vpack.c.b16 %v979, %v977
        %v1232 = vpack.c.b16 %v982, %v980
        %v1233 = vpack.c.b16 %v983, %v981
        %v1234 = vpack.c.b16 %v986, %v984
        %v1235 = vpack.c.b16 %v987, %v985
        %v1236 = vpack.c.b16 %v990, %v988
        %v1237 = vpack.c.b16 %v991, %v989
        %v1238 = vpack.c.b16 %v994, %v992
        %v1239 = vpack.c.b16 %v995, %v993
        %v1240 = vpack.c.b16 %v998, %v996
        %v1241 = vpack.c.b16 %v999, %v997
        %v1242 = vpack.c.b16 %v1002, %v1000
        %v1243 = vpack.c.b16 %v1003, %v1001
        %v1244 = vpack.c.b16 %v1006, %v1004
        %v1245 = vpack.c.b16 %v1007, %v1005
        %v1246 = vpack.c.b16 %v1010, %v1008
        %v1247 = vpack.c.b16 %v1011, %v1009
        %v1248 = vpack.c.b16 %v1014, %v1012
        %v1249 = vpack.c.b16 %v1015, %v1013
        %v1250 = vpack.c.b16 %v1018, %v1016
        %v1251 = vpack.c.b16 %v1019, %v1017
        %v1252 = vpack.c.b16 %v1022, %v1020
        %v1253 = vpack.c.b16 %v1023, %v1021
        %v1254 = vpack.c.b16 %v1026, %v1024
        %v1255 = vpack.c.b16 %v1027, %v1025
        %v1256 = vpack.c.b16 %v1030, %v1028
        %v1257 = vpack.c.b16 %v1031, %v1029
        %v1258 = vpack.c.b16 %v1034, %v1032
        %v1259 = vpack.c.b16 %v1035, %v1033
        %v1260 = vpack.c.b16 %v1038, %v1036
        %v1261 = vpack.c.b16 %v1039, %v1037
        %v1262 = vpack.c.b16 %v1042, %v1040
        %v1263 = vpack.c.b16 %v1043, %v1041
        %v1264 = vpack.c.b16 %v1046, %v1044
        %v1265 = vpack.c.b16 %v1047, %v1045
        %v1266 = vpack.c.b16 %v1050, %v1048
        %v1267 = vpack.c.b16 %v1051, %v1049
        %v1268 = vpack.c.b16 %v1054, %v1052
        %v1269 = vpack.c.b16 %v1055, %v1053
        %v1270 = vpack.c.b16 %v1058, %v1056
        %v1271 = vpack.c.b16 %v1059, %v1057
        %v1272 = vpack.c.b16 %v1062, %v1060
        %v1273 = vpack.c.b16 %v1063, %v1061
        %v1274 = vpack.c.b16 %v1066, %v1064
        %v1275 = vpack.c.b16 %v1067, %v1065
        %v1276 = vpack.c.b16 %v1070, %v1068
        %v1277 = vpack.c.b16 %v1071, %v1069
        %v1278 = vpack.c.b16 %v1074, %v1072
        %v1279 = vpack.c.b16 %v1075, %v1073
        %v1280 = vpack.c.b16 %v1078, %v1076
        %v1281 = vpack.c.b16 %v1079, %v1077
        %v1282 = vpack.c.b16 %v1082, %v1080
        %v1283 = vpack.c.b16 %v1083, %v1081
        %v1284 = vpack.c.b16 %v1086, %v1084
        %v1285 = vpack.c.b16 %v1087, %v1085
        %v1286 = vpack.c.b16 %v1090, %v1088
        %v1287 = vpack.c.b16 %v1091, %v1089
        %v1288 = vpack.c.b16 %v1094, %v1092
        %v1289 = vpack.c.b16 %v1095, %v1093
        %v1290 = vpack.c.b16 %v1098, %v1096
        %v1291 = vpack.c.b16 %v1099, %v1097
        %v1292 = vpack.c.b16 %v1102, %v1100
        %v1293 = vpack.c.b16 %v1103, %v1101
        %v1294 = vpack.c.b16 %v1106, %v1104
        %v1295 = vpack.c.b16 %v1107, %v1105
        %v1296 = vpack.c.b16 %v1110, %v1108
        %v1297 = vpack.c.b16 %v1111, %v1109
        %v1298 = vpack.c.b16 %v1114, %v1112
        %v1299 = vpack.c.b16 %v1115, %v1113
        %v1300 = vpack.c.b16 %v1118, %v1116
        %v1301 = vpack.c.b16 %v1119, %v1117
        %v1302 = vpack.c.b16 %v1122, %v1120
        %v1303 = vpack.c.b16 %v1123, %v1121
        %v1304 = vpack.c.b16 %v1126, %v1124
        %v1305 = vpack.c.b16 %v1127, %v1125
        %v1306 = vpack.c.b16 %v1130, %v1128
        %v1307 = vpack.c.b16 %v1131, %v1129
        %v1308 = vpack.c.b16 %v1134, %v1132
        %v1309 = vpack.c.b16 %v1135, %v1133
        %v1310 = vpack.c.b16 %v1138, %v1136
        %v1311 = vpack.c.b16 %v1139, %v1137
        %v1312 = vpack.c.b16 %v1142, %v1140
        %v1313 = vpack.c.b16 %v1143, %v1141
        %v1314 = vpack.c.b16 %v1146, %v1144
        %v1315 = vpack.c.b16 %v1147, %v1145
        %v1316 = vpack.c.b16 %v1150, %v1148
        %v1317 = vpack.c.b16 %v1151, %v1149
        %v1318 = vpack.c.b16 %v1154, %v1152
        %v1319 = vpack.c.b16 %v1155, %v1153
        %v1320 = vpack.c.b16 %v1158, %v1156
        %v1321 = vpack.c.b16 %v1159, %v1157
        %v1322 = vpack.c.b16 %v1162, %v1160
        %v1323 = vpack.c.b16 %v1163, %v1161
        %v1324 = vpack.c.b16 %v1166, %v1164
        %v1325 = vpack.c.b16 %v1167, %v1165
        %v1326 = vpack.c.b16 %v1170, %v1168
        %v1327 = vpack.c.b16 %v1171, %v1169
        %v1328 = vpack.c.b16 %v1174, %v1172
        %v1329 = vpack.c.b16 %v1175, %v1173
        %v1330 = vpack.c.b16 %v1178, %v1176
        %v1331 = vpack.c.b16 %v1179, %v1177
        %v1332 = vpack.c.b16 %v1182, %v1180
        %v1333 = vpack.c.b16 %v1183, %v1181
        %v1334 = vpack.c.b16 %v1186, %v1184
        %v1335 = vpack.c.b16 %v1187, %v1185
        %v1336 = vpack.c.b16 %v1190, %v1188
        %v1337 = vpack.c.b16 %v1191, %v1189
        %v1338 = vpack.c.b16 %v1194, %v1192
        %v1339 = vpack.c.b16 %v1195, %v1193
        %v1340 = vpack.c.b16 %v1198, %v1196
        %v1341 = vpack.c.b16 %v1199, %v1197
        %v1342 = vpack.c.b16 %v1202, %v1200
        %v1343 = vpack.c.b16 %v1203, %v1201
        %v1344 = vpack.c.b16 %v1206, %v1204
        %v1345 = vpack.c.b16 %v1207, %v1205
        %v1346 = vpack.c.b16 %v1210, %v1208
        %v1347 = vpack.c.b16 %v1211, %v1209
        %v1348 = vpack.c.b16 %v1214, %v1212
        %v1349 = vpack.c.b16 %v1215, %v1213
        %v1350 = vpack.c.b16 %v1218, %v1216
        %v1351 = vpack.c.b16 %v1219, %v1217
        %v1352 = vpack.c.b16 %v1222, %v1220
        %v1353 = vpack.c.b16 %v1223, %v1221
        %v1354 = vpack.c.b16 %v1226, %v1224
        %v1355 = vpack.c.b16 %v1227, %v1225
        %1484 = vmatprep.subr.bf16.mxu0 %v1229
        %1485 = vmatpush1.bf16.msra.mxu0 %v1228
        %1486 = vmatprep.subr.bf16.mxu0 %v1231
        %1487 = vmatpush1.bf16.msra.mxu0 %v1230
        %1488 = vmatprep.subr.bf16.mxu0 %v1233
        %1489 = vmatpush1.bf16.msra.mxu0 %v1232
        %1490 = vmatprep.subr.bf16.mxu0 %v1235
        %1491 = vmatpush1.bf16.msra.mxu0 %v1234
        %1492 = vmatprep.subr.bf16.mxu0 %v1237
        %1493 = vmatpush1.bf16.msra.mxu0 %v1236
        %1494 = vmatprep.subr.bf16.mxu0 %v1239
        %1495 = vmatpush1.bf16.msra.mxu0 %v1238
        %1496 = vmatprep.subr.bf16.mxu0 %v1241
        %1497 = vmatpush1.bf16.msra.mxu0 %v1240
        %1498 = vmatprep.subr.bf16.mxu0 %v1243
        %1499 = vmatpush1.bf16.msra.mxu0 %v1242
        %1500 = vmatprep.subr.bf16.mxu0 %v1245
        %1501 = vmatpush1.bf16.msra.mxu0 %v1244
        %1502 = vmatprep.subr.bf16.mxu0 %v1247
        %1503 = vmatpush1.bf16.msra.mxu0 %v1246
        %1504 = vmatprep.subr.bf16.mxu0 %v1249
        %1505 = vmatpush1.bf16.msra.mxu0 %v1248
        %1506 = vmatprep.subr.bf16.mxu0 %v1251
        %1507 = vmatpush1.bf16.msra.mxu0 %v1250
        %1508 = vmatprep.subr.bf16.mxu0 %v1253
        %1509 = vmatpush1.bf16.msra.mxu0 %v1252
        %1510 = vmatprep.subr.bf16.mxu0 %v1255
        %1511 = vmatpush1.bf16.msra.mxu0 %v1254
        %1512 = vmatprep.subr.bf16.mxu0 %v1257
        %1513 = vmatpush1.bf16.msra.mxu0 %v1256
        %1514 = vmatprep.subr.bf16.mxu0 %v1259
        %1515 = vmatpush1.bf16.msra.mxu0 %v1258
        %1516 = vmatprep.mubr.bf16.mxu0 %v717
        %1517 = vmatmul.mubr.bf16.gmra.mrb[0].mxu0 %v716
        %v1518 = vpop.f32.mrb[0].mxu0
        %v1519 = vadd.f32 %v522, %v1518
        %v1520 = vpop.f32.mrb[0].mxu0
        %v1521 = vadd.f32 %v523, %v1520
        %v1522 = vpop.f32.mrb[0].mxu0
        %v1523 = vadd.f32 %v522, %v1522
        %v1524 = vpop.f32.mrb[0].mxu0
        %v1525 = vadd.f32 %v523, %v1524
        %1526 = vmatprep.mubr.bf16.mxu0 %v725
        %1527 = vmatmul.mubr.bf16.gmra.mrb[0].mxu0 %v724
        %v1528 = vpop.f32.mrb[0].mxu0
        %v1529 = vadd.f32 %v522, %v1528
        %v1530 = vpop.f32.mrb[0].mxu0
        %v1531 = vadd.f32 %v523, %v1530
        %v1532 = vpop.f32.mrb[0].mxu0
        %v1533 = vadd.f32 %v522, %v1532
        %v1534 = vpop.f32.mrb[0].mxu0
        %v1535 = vadd.f32 %v523, %v1534
        %1536 = vmatprep.mubr.bf16.mxu0 %v733
        %1537 = vmatmul.mubr.bf16.gmra.mrb[0].mxu0 %v732
        %v1538 = vpop.f32.mrb[0].mxu0
        %v1539 = vadd.f32 %v522, %v1538
        %v1540 = vpop.f32.mrb[0].mxu0
        %v1541 = vadd.f32 %v523, %v1540
        %v1542 = vpop.f32.mrb[0].mxu0
        %v1543 = vadd.f32 %v522, %v1542
        %v1544 = vpop.f32.mrb[0].mxu0
        %v1545 = vadd.f32 %v523, %v1544
        %1546 = vmatprep.mubr.bf16.mxu0 %v741
        %1547 = vmatmul.mubr.bf16.gmra.mrb[0].mxu0 %v740
        %v1548 = vpop.f32.mrb[0].mxu0
        %v1549 = vadd.f32 %v522, %v1548
        %v1550 = vpop.f32.mrb[0].mxu0
        %v1551 = vadd.f32 %v523, %v1550
        %v1552 = vpop.f32.mrb[0].mxu0
        %v1553 = vadd.f32 %v522, %v1552
        %v1554 = vpop.f32.mrb[0].mxu0
        %v1555 = vadd.f32 %v523, %v1554
        %1556 = vmatprep.mubr.bf16.mxu0 %v749
        %1557 = vmatmul.mubr.bf16.gmra.mrb[0].mxu0 %v748
        %v1558 = vpop.f32.mrb[0].mxu0
        %v1559 = vadd.f32 %v522, %v1558
        %v1560 = vpop.f32.mrb[0].mxu0
        %v1561 = vadd.f32 %v523, %v1560
        %v1562 = vpop.f32.mrb[0].mxu0
        %v1563 = vadd.f32 %v522, %v1562
        %v1564 = vpop.f32.mrb[0].mxu0
        %v1565 = vadd.f32 %v523, %v1564
        %1566 = vmatprep.mubr.bf16.mxu0 %v757
        %1567 = vmatmul.mubr.bf16.gmra.mrb[0].mxu0 %v756
        %v1568 = vpop.f32.mrb[0].mxu0
        %v1569 = vadd.f32 %v522, %v1568
        %v1570 = vpop.f32.mrb[0].mxu0
        %v1571 = vadd.f32 %v523, %v1570
        %v1572 = vpop.f32.mrb[0].mxu0
        %v1573 = vadd.f32 %v522, %v1572
        %v1574 = vpop.f32.mrb[0].mxu0
        %v1575 = vadd.f32 %v523, %v1574
        %1576 = vmatprep.mubr.bf16.mxu0 %v765
        %1577 = vmatmul.mubr.bf16.gmra.mrb[0].mxu0 %v764
        %v1578 = vpop.f32.mrb[0].mxu0
        %v1579 = vadd.f32 %v522, %v1578
        %v1580 = vpop.f32.mrb[0].mxu0
        %v1581 = vadd.f32 %v523, %v1580
        %v1582 = vpop.f32.mrb[0].mxu0
        %v1583 = vadd.f32 %v522, %v1582
        %v1584 = vpop.f32.mrb[0].mxu0
        %v1585 = vadd.f32 %v523, %v1584
        %1586 = vmatprep.mubr.bf16.mxu0 %v773
        %1587 = vmatmul.mubr.bf16.gmra.mrb[0].mxu0 %v772
        %v1588 = vpop.f32.mrb[0].mxu0
        %v1589 = vadd.f32 %v522, %v1588
        %v1590 = vpop.f32.mrb[0].mxu0
        %v1591 = vadd.f32 %v523, %v1590
        %v1592 = vpop.f32.mrb[0].mxu0
        %v1593 = vadd.f32 %v522, %v1592
        %v1594 = vpop.f32.mrb[0].mxu0
        %v1595 = vadd.f32 %v523, %v1594
        %1596 = vdwg.mxu0
        %1597 = vmatprep.subr.bf16.mxu0 %v1261
        %1598 = vmatpush1.bf16.msra.mxu0 %v1260
        %1599 = vmatprep.subr.bf16.mxu0 %v1263
        %1600 = vmatpush1.bf16.msra.mxu0 %v1262
        %1601 = vmatprep.subr.bf16.mxu0 %v1265
        %1602 = vmatpush1.bf16.msra.mxu0 %v1264
        %1603 = vmatprep.subr.bf16.mxu0 %v1267
        %1604 = vmatpush1.bf16.msra.mxu0 %v1266
        %1605 = vmatprep.subr.bf16.mxu0 %v1269
        %1606 = vmatpush1.bf16.msra.mxu0 %v1268
        %1607 = vmatprep.subr.bf16.mxu0 %v1271
        %1608 = vmatpush1.bf16.msra.mxu0 %v1270
        %1609 = vmatprep.subr.bf16.mxu0 %v1273
        %1610 = vmatpush1.bf16.msra.mxu0 %v1272
        %1611 = vmatprep.subr.bf16.mxu0 %v1275
        %1612 = vmatpush1.bf16.msra.mxu0 %v1274
        %1613 = vmatprep.subr.bf16.mxu0 %v1277
        %1614 = vmatpush1.bf16.msra.mxu0 %v1276
        %1615 = vmatprep.subr.bf16.mxu0 %v1279
        %1616 = vmatpush1.bf16.msra.mxu0 %v1278
        %1617 = vmatprep.subr.bf16.mxu0 %v1281
        %1618 = vmatpush1.bf16.msra.mxu0 %v1280
        %1619 = vmatprep.subr.bf16.mxu0 %v1283
        %1620 = vmatpush1.bf16.msra.mxu0 %v1282
        %1621 = vmatprep.subr.bf16.mxu0 %v1285
        %1622 = vmatpush1.bf16.msra.mxu0 %v1284
        %1623 = vmatprep.subr.bf16.mxu0 %v1287
        %1624 = vmatpush1.bf16.msra.mxu0 %v1286
        %1625 = vmatprep.subr.bf16.mxu0 %v1289
        %1626 = vmatpush1.bf16.msra.mxu0 %v1288
        %1627 = vmatprep.subr.bf16.mxu0 %v1291
        %1628 = vmatpush1.bf16.msra.mxu0 %v1290
        %1629 = vmatprep.mubr.bf16.mxu0 %v719
        %1630 = vmatmul.mubr.bf16.gmra.mrb[0].mxu0 %v718
        %v1631 = vpop.f32.mrb[0].mxu0
        %v1632 = vadd.f32 %v1519, %v1631
        %v1633 = vpop.f32.mrb[0].mxu0
        %v1634 = vadd.f32 %v1521, %v1633
        %v1635 = vpop.f32.mrb[0].mxu0
        %v1636 = vadd.f32 %v1523, %v1635
        %v1637 = vpop.f32.mrb[0].mxu0
        %v1638 = vadd.f32 %v1525, %v1637
        %1639 = vmatprep.mubr.bf16.mxu0 %v727
        %1640 = vmatmul.mubr.bf16.gmra.mrb[0].mxu0 %v726
        %v1641 = vpop.f32.mrb[0].mxu0
        %v1642 = vadd.f32 %v1529, %v1641
        %v1643 = vpop.f32.mrb[0].mxu0
        %v1644 = vadd.f32 %v1531, %v1643
        %v1645 = vpop.f32.mrb[0].mxu0
        %v1646 = vadd.f32 %v1533, %v1645
        %v1647 = vpop.f32.mrb[0].mxu0
        %v1648 = vadd.f32 %v1535, %v1647
        %1649 = vmatprep.mubr.bf16.mxu0 %v735
        %1650 = vmatmul.mubr.bf16.gmra.mrb[0].mxu0 %v734
        %v1651 = vpop.f32.mrb[0].mxu0
        %v1652 = vadd.f32 %v1539, %v1651
        %v1653 = vpop.f32.mrb[0].mxu0
        %v1654 = vadd.f32 %v1541, %v1653
        %v1655 = vpop.f32.mrb[0].mxu0
        %v1656 = vadd.f32 %v1543, %v1655
        %v1657 = vpop.f32.mrb[0].mxu0
        %v1658 = vadd.f32 %v1545, %v1657
        %1659 = vmatprep.mubr.bf16.mxu0 %v743
        %1660 = vmatmul.mubr.bf16.gmra.mrb[0].mxu0 %v742
        %v1661 = vpop.f32.mrb[0].mxu0
        %v1662 = vadd.f32 %v1549, %v1661
        %v1663 = vpop.f32.mrb[0].mxu0
        %v1664 = vadd.f32 %v1551, %v1663
        %v1665 = vpop.f32.mrb[0].mxu0
        %v1666 = vadd.f32 %v1553, %v1665
        %v1667 = vpop.f32.mrb[0].mxu0
        %v1668 = vadd.f32 %v1555, %v1667
        %1669 = vmatprep.mubr.bf16.mxu0 %v751
        %1670 = vmatmul.mubr.bf16.gmra.mrb[0].mxu0 %v750
        %v1671 = vpop.f32.mrb[0].mxu0
        %v1672 = vadd.f32 %v1559, %v1671
        %v1673 = vpop.f32.mrb[0].mxu0
        %v1674 = vadd.f32 %v1561, %v1673
        %v1675 = vpop.f32.mrb[0].mxu0
        %v1676 = vadd.f32 %v1563, %v1675
        %v1677 = vpop.f32.mrb[0].mxu0
        %v1678 = vadd.f32 %v1565, %v1677
        %1679 = vmatprep.mubr.bf16.mxu0 %v759
        %1680 = vmatmul.mubr.bf16.gmra.mrb[0].mxu0 %v758
        %v1681 = vpop.f32.mrb[0].mxu0
        %v1682 = vadd.f32 %v1569, %v1681
        %v1683 = vpop.f32.mrb[0].mxu0
        %v1684 = vadd.f32 %v1571, %v1683
        %v1685 = vpop.f32.mrb[0].mxu0
        %v1686 = vadd.f32 %v1573, %v1685
        %v1687 = vpop.f32.mrb[0].mxu0
        %v1688 = vadd.f32 %v1575, %v1687
        %1689 = vmatprep.mubr.bf16.mxu0 %v767
        %1690 = vmatmul.mubr.bf16.gmra.mrb[0].mxu0 %v766
        %v1691 = vpop.f32.mrb[0].mxu0
        %v1692 = vadd.f32 %v1579, %v1691
        %v1693 = vpop.f32.mrb[0].mxu0
        %v1694 = vadd.f32 %v1581, %v1693
        %v1695 = vpop.f32.mrb[0].mxu0
        %v1696 = vadd.f32 %v1583, %v1695
        %v1697 = vpop.f32.mrb[0].mxu0
        %v1698 = vadd.f32 %v1585, %v1697
        %1699 = vmatprep.mubr.bf16.mxu0 %v775
        %1700 = vmatmul.mubr.bf16.gmra.mrb[0].mxu0 %v774
        %v1701 = vpop.f32.mrb[0].mxu0
        %v1702 = vadd.f32 %v1589, %v1701
        %v1703 = vpop.f32.mrb[0].mxu0
        %v1704 = vadd.f32 %v1591, %v1703
        %v1705 = vpop.f32.mrb[0].mxu0
        %v1706 = vadd.f32 %v1593, %v1705
        %v1707 = vpop.f32.mrb[0].mxu0
        %v1708 = vadd.f32 %v1595, %v1707
        %1709 = vdwg.mxu0
        %1710 = vmatprep.subr.bf16.mxu0 %v1293
        %1711 = vmatpush1.bf16.msra.mxu0 %v1292
        %1712 = vmatprep.subr.bf16.mxu0 %v1295
        %1713 = vmatpush1.bf16.msra.mxu0 %v1294
        %1714 = vmatprep.subr.bf16.mxu0 %v1297
        %1715 = vmatpush1.bf16.msra.mxu0 %v1296
        %1716 = vmatprep.subr.bf16.mxu0 %v1299
        %1717 = vmatpush1.bf16.msra.mxu0 %v1298
        %1718 = vmatprep.subr.bf16.mxu0 %v1301
        %1719 = vmatpush1.bf16.msra.mxu0 %v1300
        %1720 = vmatprep.subr.bf16.mxu0 %v1303
        %1721 = vmatpush1.bf16.msra.mxu0 %v1302
        %1722 = vmatprep.subr.bf16.mxu0 %v1305
        %1723 = vmatpush1.bf16.msra.mxu0 %v1304
        %1724 = vmatprep.subr.bf16.mxu0 %v1307
        %1725 = vmatpush1.bf16.msra.mxu0 %v1306
        %1726 = vmatprep.subr.bf16.mxu0 %v1309
        %1727 = vmatpush1.bf16.msra.mxu0 %v1308
        %1728 = vmatprep.subr.bf16.mxu0 %v1311
        %1729 = vmatpush1.bf16.msra.mxu0 %v1310
        %1730 = vmatprep.subr.bf16.mxu0 %v1313
        %1731 = vmatpush1.bf16.msra.mxu0 %v1312
        %1732 = vmatprep.subr.bf16.mxu0 %v1315
        %1733 = vmatpush1.bf16.msra.mxu0 %v1314
        %1734 = vmatprep.subr.bf16.mxu0 %v1317
        %1735 = vmatpush1.bf16.msra.mxu0 %v1316
        %1736 = vmatprep.subr.bf16.mxu0 %v1319
        %1737 = vmatpush1.bf16.msra.mxu0 %v1318
        %1738 = vmatprep.subr.bf16.mxu0 %v1321
        %1739 = vmatpush1.bf16.msra.mxu0 %v1320
        %1740 = vmatprep.subr.bf16.mxu0 %v1323
        %1741 = vmatpush1.bf16.msra.mxu0 %v1322
        %1742 = vmatprep.mubr.bf16.mxu0 %v721
        %1743 = vmatmul.mubr.bf16.gmra.mrb[0].mxu0 %v720
        %v1744 = vpop.f32.mrb[0].mxu0
        %v1745 = vadd.f32 %v1632, %v1744
        %v1746 = vpop.f32.mrb[0].mxu0
        %v1747 = vadd.f32 %v1634, %v1746
        %v1748 = vpop.f32.mrb[0].mxu0
        %v1749 = vadd.f32 %v1636, %v1748
        %v1750 = vpop.f32.mrb[0].mxu0
        %v1751 = vadd.f32 %v1638, %v1750
        %1752 = vmatprep.mubr.bf16.mxu0 %v729
        %1753 = vmatmul.mubr.bf16.gmra.mrb[0].mxu0 %v728
        %v1754 = vpop.f32.mrb[0].mxu0
        %v1755 = vadd.f32 %v1642, %v1754
        %v1756 = vpop.f32.mrb[0].mxu0
        %v1757 = vadd.f32 %v1644, %v1756
        %v1758 = vpop.f32.mrb[0].mxu0
        %v1759 = vadd.f32 %v1646, %v1758
        %v1760 = vpop.f32.mrb[0].mxu0
        %v1761 = vadd.f32 %v1648, %v1760
        %1762 = vmatprep.mubr.bf16.mxu0 %v737
        %1763 = vmatmul.mubr.bf16.gmra.mrb[0].mxu0 %v736
        %v1764 = vpop.f32.mrb[0].mxu0
        %v1765 = vadd.f32 %v1652, %v1764
        %v1766 = vpop.f32.mrb[0].mxu0
        %v1767 = vadd.f32 %v1654, %v1766
        %v1768 = vpop.f32.mrb[0].mxu0
        %v1769 = vadd.f32 %v1656, %v1768
        %v1770 = vpop.f32.mrb[0].mxu0
        %v1771 = vadd.f32 %v1658, %v1770
        %1772 = vmatprep.mubr.bf16.mxu0 %v745
        %1773 = vmatmul.mubr.bf16.gmra.mrb[0].mxu0 %v744
        %v1774 = vpop.f32.mrb[0].mxu0
        %v1775 = vadd.f32 %v1662, %v1774
        %v1776 = vpop.f32.mrb[0].mxu0
        %v1777 = vadd.f32 %v1664, %v1776
        %v1778 = vpop.f32.mrb[0].mxu0
        %v1779 = vadd.f32 %v1666, %v1778
        %v1780 = vpop.f32.mrb[0].mxu0
        %v1781 = vadd.f32 %v1668, %v1780
        %1782 = vmatprep.mubr.bf16.mxu0 %v753
        %1783 = vmatmul.mubr.bf16.gmra.mrb[0].mxu0 %v752
        %v1784 = vpop.f32.mrb[0].mxu0
        %v1785 = vadd.f32 %v1672, %v1784
        %v1786 = vpop.f32.mrb[0].mxu0
        %v1787 = vadd.f32 %v1674, %v1786
        %v1788 = vpop.f32.mrb[0].mxu0
        %v1789 = vadd.f32 %v1676, %v1788
        %v1790 = vpop.f32.mrb[0].mxu0
        %v1791 = vadd.f32 %v1678, %v1790
        %1792 = vmatprep.mubr.bf16.mxu0 %v761
        %1793 = vmatmul.mubr.bf16.gmra.mrb[0].mxu0 %v760
        %v1794 = vpop.f32.mrb[0].mxu0
        %v1795 = vadd.f32 %v1682, %v1794
        %v1796 = vpop.f32.mrb[0].mxu0
        %v1797 = vadd.f32 %v1684, %v1796
        %v1798 = vpop.f32.mrb[0].mxu0
        %v1799 = vadd.f32 %v1686, %v1798
        %v1800 = vpop.f32.mrb[0].mxu0
        %v1801 = vadd.f32 %v1688, %v1800
        %1802 = vmatprep.mubr.bf16.mxu0 %v769
        %1803 = vmatmul.mubr.bf16.gmra.mrb[0].mxu0 %v768
        %v1804 = vpop.f32.mrb[0].mxu0
        %v1805 = vadd.f32 %v1692, %v1804
        %v1806 = vpop.f32.mrb[0].mxu0
        %v1807 = vadd.f32 %v1694, %v1806
        %v1808 = vpop.f32.mrb[0].mxu0
        %v1809 = vadd.f32 %v1696, %v1808
        %v1810 = vpop.f32.mrb[0].mxu0
        %v1811 = vadd.f32 %v1698, %v1810
        %1812 = vmatprep.mubr.bf16.mxu0 %v777
        %1813 = vmatmul.mubr.bf16.gmra.mrb[0].mxu0 %v776
        %v1814 = vpop.f32.mrb[0].mxu0
        %v1815 = vadd.f32 %v1702, %v1814
        %v1816 = vpop.f32.mrb[0].mxu0
        %v1817 = vadd.f32 %v1704, %v1816
        %v1818 = vpop.f32.mrb[0].mxu0
        %v1819 = vadd.f32 %v1706, %v1818
        %v1820 = vpop.f32.mrb[0].mxu0
        %v1821 = vadd.f32 %v1708, %v1820
        %1822 = vdwg.mxu0
        %1823 = vmatprep.subr.bf16.mxu0 %v1325
        %1824 = vmatpush1.bf16.msra.mxu0 %v1324
        %1825 = vmatprep.subr.bf16.mxu0 %v1327
        %1826 = vmatpush1.bf16.msra.mxu0 %v1326
        %1827 = vmatprep.subr.bf16.mxu0 %v1329
        %1828 = vmatpush1.bf16.msra.mxu0 %v1328
        %1829 = vmatprep.subr.bf16.mxu0 %v1331
        %1830 = vmatpush1.bf16.msra.mxu0 %v1330
        %1831 = vmatprep.subr.bf16.mxu0 %v1333
        %1832 = vmatpush1.bf16.msra.mxu0 %v1332
        %1833 = vmatprep.subr.bf16.mxu0 %v1335
        %1834 = vmatpush1.bf16.msra.mxu0 %v1334
        %1835 = vmatprep.subr.bf16.mxu0 %v1337
        %1836 = vmatpush1.bf16.msra.mxu0 %v1336
        %1837 = vmatprep.subr.bf16.mxu0 %v1339
        %1838 = vmatpush1.bf16.msra.mxu0 %v1338
        %1839 = vmatprep.subr.bf16.mxu0 %v1341
        %1840 = vmatpush1.bf16.msra.mxu0 %v1340
        %1841 = vmatprep.subr.bf16.mxu0 %v1343
        %1842 = vmatpush1.bf16.msra.mxu0 %v1342
        %1843 = vmatprep.subr.bf16.mxu0 %v1345
        %1844 = vmatpush1.bf16.msra.mxu0 %v1344
        %1845 = vmatprep.subr.bf16.mxu0 %v1347
        %1846 = vmatpush1.bf16.msra.mxu0 %v1346
        %1847 = vmatprep.subr.bf16.mxu0 %v1349
        %1848 = vmatpush1.bf16.msra.mxu0 %v1348
        %1849 = vmatprep.subr.bf16.mxu0 %v1351
        %1850 = vmatpush1.bf16.msra.mxu0 %v1350
        %1851 = vmatprep.subr.bf16.mxu0 %v1353
        %1852 = vmatpush1.bf16.msra.mxu0 %v1352
        %1853 = vmatprep.subr.bf16.mxu0 %v1355
        %1854 = vmatpush1.bf16.msra.mxu0 %v1354
        %1855 = vmatprep.mubr.bf16.mxu0 %v723
        %1856 = vmatmul.mubr.bf16.gmra.mrb[0].mxu0 %v722
        %v1857 = vpop.f32.mrb[0].mxu0
        %v1858 = vadd.f32 %v1745, %v1857
        %v1859 = vpop.f32.mrb[0].mxu0
        %v1860 = vadd.f32 %v1747, %v1859
        %v1861 = vpop.f32.mrb[0].mxu0
        %v1862 = vadd.f32 %v1749, %v1861
        %v1863 = vpop.f32.mrb[0].mxu0
        %v1864 = vadd.f32 %v1751, %v1863
        %1865 = vmatprep.mubr.bf16.mxu0 %v731
        %1866 = vmatmul.mubr.bf16.gmra.mrb[0].mxu0 %v730
        %v1867 = vpop.f32.mrb[0].mxu0
        %v1868 = vadd.f32 %v1755, %v1867
        %v1869 = vpop.f32.mrb[0].mxu0
        %v1870 = vadd.f32 %v1757, %v1869
        %v1871 = vpop.f32.mrb[0].mxu0
        %v1872 = vadd.f32 %v1759, %v1871
        %v1873 = vpop.f32.mrb[0].mxu0
        %v1874 = vadd.f32 %v1761, %v1873
        %1875 = vmatprep.mubr.bf16.mxu0 %v739
        %1876 = vmatmul.mubr.bf16.gmra.mrb[0].mxu0 %v738
        %v1877 = vpop.f32.mrb[0].mxu0
        %v1878 = vadd.f32 %v1765, %v1877
        %v1879 = vpop.f32.mrb[0].mxu0
        %v1880 = vadd.f32 %v1767, %v1879
        %v1881 = vpop.f32.mrb[0].mxu0
        %v1882 = vadd.f32 %v1769, %v1881
        %v1883 = vpop.f32.mrb[0].mxu0
        %v1884 = vadd.f32 %v1771, %v1883
        %1885 = vmatprep.mubr.bf16.mxu0 %v747
        %1886 = vmatmul.mubr.bf16.gmra.mrb[0].mxu0 %v746
        %v1887 = vpop.f32.mrb[0].mxu0
        %v1888 = vadd.f32 %v1775, %v1887
        %v1889 = vpop.f32.mrb[0].mxu0
        %v1890 = vadd.f32 %v1777, %v1889
        %v1891 = vpop.f32.mrb[0].mxu0
        %v1892 = vadd.f32 %v1779, %v1891
        %v1893 = vpop.f32.mrb[0].mxu0
        %v1894 = vadd.f32 %v1781, %v1893
        %1895 = vmatprep.mubr.bf16.mxu0 %v755
        %1896 = vmatmul.mubr.bf16.gmra.mrb[0].mxu0 %v754
        %v1897 = vpop.f32.mrb[0].mxu0
        %v1898 = vadd.f32 %v1785, %v1897
        %v1899 = vpop.f32.mrb[0].mxu0
        %v1900 = vadd.f32 %v1787, %v1899
        %v1901 = vpop.f32.mrb[0].mxu0
        %v1902 = vadd.f32 %v1789, %v1901
        %v1903 = vpop.f32.mrb[0].mxu0
        %v1904 = vadd.f32 %v1791, %v1903
        %1905 = vmatprep.mubr.bf16.mxu0 %v763
        %1906 = vmatmul.mubr.bf16.gmra.mrb[0].mxu0 %v762
        %v1907 = vpop.f32.mrb[0].mxu0
        %v1908 = vadd.f32 %v1795, %v1907
        %v1909 = vpop.f32.mrb[0].mxu0
        %v1910 = vadd.f32 %v1797, %v1909
        %v1911 = vpop.f32.mrb[0].mxu0
        %v1912 = vadd.f32 %v1799, %v1911
        %v1913 = vpop.f32.mrb[0].mxu0
        %v1914 = vadd.f32 %v1801, %v1913
        %1915 = vmatprep.mubr.bf16.mxu0 %v771
        %1916 = vmatmul.mubr.bf16.gmra.mrb[0].mxu0 %v770
        %v1917 = vpop.f32.mrb[0].mxu0
        %v1918 = vadd.f32 %v1805, %v1917
        %v1919 = vpop.f32.mrb[0].mxu0
        %v1920 = vadd.f32 %v1807, %v1919
        %v1921 = vpop.f32.mrb[0].mxu0
        %v1922 = vadd.f32 %v1809, %v1921
        %v1923 = vpop.f32.mrb[0].mxu0
        %v1924 = vadd.f32 %v1811, %v1923
        %1925 = vmatprep.mubr.bf16.mxu0 %v779
        %1926 = vmatmul.mubr.bf16.gmra.mrb[0].mxu0 %v778
        %v1927 = vpop.f32.mrb[0].mxu0
        %v1928 = vadd.f32 %v1815, %v1927
        %v1929 = vpop.f32.mrb[0].mxu0
        %v1930 = vadd.f32 %v1817, %v1929
        %v1931 = vpop.f32.mrb[0].mxu0
        %v1932 = vadd.f32 %v1819, %v1931
        %v1933 = vpop.f32.mrb[0].mxu0
        %v1934 = vadd.f32 %v1821, %v1933
        %1935 = vdwg.mxu0
        %v1936 = vld [vmem:[#allocation8] sm:$0xf]
        %v1937 = vld [vmem:[#allocation8 + $0x4] sm:$0xf]
        %v1938 = vld [vmem:[#allocation8 + $0x8] sm:$0xf]
        %v1939 = vld [vmem:[#allocation8 + $0xc] sm:$0xf]
        %v1940 = vld [vmem:[#allocation8 + $0x10] sm:$0xf]
        %v1941 = vld [vmem:[#allocation8 + $0x14] sm:$0xf]
        %v1942 = vld [vmem:[#allocation8 + $0x18] sm:$0xf]
        %v1943 = vld [vmem:[#allocation8 + $0x1c] sm:$0xf]
        %v1944 = vld [vmem:[#allocation8 + $0x20] sm:$0xf]
        %v1945 = vld [vmem:[#allocation8 + $0x24] sm:$0xf]
        %v1946 = vld [vmem:[#allocation8 + $0x28] sm:$0xf]
        %v1947 = vld [vmem:[#allocation8 + $0x2c] sm:$0xf]
        %v1948 = vld [vmem:[#allocation8 + $0x30] sm:$0xf]
        %v1949 = vld [vmem:[#allocation8 + $0x34] sm:$0xf]
        %v1950 = vld [vmem:[#allocation8 + $0x38] sm:$0xf]
        %v1951 = vld [vmem:[#allocation8 + $0x3c] sm:$0xf]
        %v1952 = vpack.c.bf16 %v1862, %v1858
        %v1953 = vpack.c.bf16 %v1872, %v1868
        %v1954 = vpack.c.bf16 %v1882, %v1878
        %v1955 = vpack.c.bf16 %v1892, %v1888
        %v1956 = vpack.c.bf16 %v1902, %v1898
        %v1957 = vpack.c.bf16 %v1912, %v1908
        %v1958 = vpack.c.bf16 %v1922, %v1918
        %v1959 = vpack.c.bf16 %v1932, %v1928
        %v1976 = vunpack.c.l.b16 %v1936
        %v1977 = vunpack.c.l.b16 %v1937
        %v1978 = vunpack.c.l.b16 %v1938
        %v1979 = vunpack.c.l.b16 %v1939
        %v1980 = vunpack.c.l.b16 %v1940
        %v1981 = vunpack.c.l.b16 %v1941
        %v1982 = vunpack.c.l.b16 %v1942
        %v1983 = vunpack.c.l.b16 %v1943
        %v1984 = vunpack.c.l.b16 %v1944
        %v1985 = vunpack.c.l.b16 %v1945
        %v1986 = vunpack.c.l.b16 %v1946
        %v1987 = vunpack.c.l.b16 %v1947
        %v1988 = vunpack.c.l.b16 %v1948
        %v1989 = vunpack.c.l.b16 %v1949
        %v1990 = vunpack.c.l.b16 %v1950
        %v1991 = vunpack.c.l.b16 %v1951
        %v1992 = vpack.c.b16 %v1977, %v1976
        %v1993 = vpack.c.b16 %v1979, %v1978
        %v1994 = vpack.c.b16 %v1981, %v1980
        %v1995 = vpack.c.b16 %v1983, %v1982
        %v1996 = vpack.c.b16 %v1985, %v1984
        %v1997 = vpack.c.b16 %v1987, %v1986
        %v1998 = vpack.c.b16 %v1989, %v1988
        %v1999 = vpack.c.b16 %v1991, %v1990
        %2008 = vmatprep.subr.bf16.mxu0 0
        %2009 = vmatpush1.bf16.msra.mxu0 %v1952
        %2010 = vmatprep.subr.bf16.mxu0 0
        %2011 = vmatpush1.bf16.msra.mxu0 %v1953
        %2012 = vmatprep.subr.bf16.mxu0 0
        %2013 = vmatpush1.bf16.msra.mxu0 %v1954
        %2014 = vmatprep.subr.bf16.mxu0 0
        %2015 = vmatpush1.bf16.msra.mxu0 %v1955
        %2016 = vmatprep.subr.bf16.mxu0 0
        %2017 = vmatpush1.bf16.msra.mxu0 %v1956
        %2018 = vmatprep.subr.bf16.mxu0 0
        %2019 = vmatpush1.bf16.msra.mxu0 %v1957
        %2020 = vmatprep.subr.bf16.mxu0 0
        %2021 = vmatpush1.bf16.msra.mxu0 %v1958
        %2022 = vmatprep.subr.bf16.mxu0 0
        %2023 = vmatpush1.bf16.msra.mxu0 %v1959
        %2024 = vmatprep.subr.bf16.mxu0 0
        %2025 = vmatpush1.bf16.msra.mxu0 0
        %2026 = vmatprep.subr.bf16.mxu0 0
        %2027 = vmatpush1.bf16.msra.mxu0 0
        %2028 = vmatprep.subr.bf16.mxu0 0
        %2029 = vmatpush1.bf16.msra.mxu0 0
        %2030 = vmatprep.subr.bf16.mxu0 0
        %2031 = vmatpush1.bf16.msra.mxu0 0
        %2032 = vmatprep.subr.bf16.mxu0 0
        %2033 = vmatpush1.bf16.msra.mxu0 0
        %2034 = vmatprep.subr.bf16.mxu0 0
        %2035 = vmatpush1.bf16.msra.mxu0 0
        %2036 = vmatprep.subr.bf16.mxu0 0
        %2037 = vmatpush1.bf16.msra.mxu0 0
        %2038 = vmatprep.subr.bf16.mxu0 0
        %2039 = vmatpush1.bf16.msra.mxu0 0
        %2040 = vmatprep.mubr.bf16.mxu0 0
        %2041 = vmatmul.mubr.bf16.gmra.mrb[0].mxu0 %v1992
        %v2042 = vpop.f32.mrb[0].mxu0
        %v2043 = vadd.f32 0.0, %v2042
        %v2044 = vpop.f32.mrb[0].mxu0
        %v2045 = vpop.f32.mrb[0].mxu0
        %v2046 = vadd.f32 0.0, %v2045
        %v2047 = vpop.f32.mrb[0].mxu0
        %2048 = vmatprep.mubr.bf16.mxu0 0
        %2049 = vmatmul.mubr.bf16.gmra.mrb[0].mxu0 %v1993
        %v2050 = vpop.f32.mrb[0].mxu0
        %v2051 = vadd.f32 0.0, %v2050
        %v2052 = vpop.f32.mrb[0].mxu0
        %v2053 = vpop.f32.mrb[0].mxu0
        %v2054 = vadd.f32 0.0, %v2053
        %v2055 = vpop.f32.mrb[0].mxu0
        %2056 = vmatprep.mubr.bf16.mxu0 0
        %2057 = vmatmul.mubr.bf16.gmra.mrb[0].mxu0 %v1994
        %v2058 = vpop.f32.mrb[0].mxu0
        %v2059 = vadd.f32 0.0, %v2058
        %v2060 = vpop.f32.mrb[0].mxu0
        %v2061 = vpop.f32.mrb[0].mxu0
        %v2062 = vadd.f32 0.0, %v2061
        %v2063 = vpop.f32.mrb[0].mxu0
        %2064 = vmatprep.mubr.bf16.mxu0 0
        %2065 = vmatmul.mubr.bf16.gmra.mrb[0].mxu0 %v1995
        %v2066 = vpop.f32.mrb[0].mxu0
        %v2067 = vadd.f32 0.0, %v2066
        %v2068 = vpop.f32.mrb[0].mxu0
        %v2069 = vpop.f32.mrb[0].mxu0
        %v2070 = vadd.f32 0.0, %v2069
        %v2071 = vpop.f32.mrb[0].mxu0
        %2072 = vmatprep.mubr.bf16.mxu0 0
        %2073 = vmatmul.mubr.bf16.gmra.mrb[0].mxu0 %v1996
        %v2074 = vpop.f32.mrb[0].mxu0
        %v2075 = vadd.f32 0.0, %v2074
        %v2076 = vpop.f32.mrb[0].mxu0
        %v2077 = vpop.f32.mrb[0].mxu0
        %v2078 = vadd.f32 0.0, %v2077
        %v2079 = vpop.f32.mrb[0].mxu0
        %2080 = vmatprep.mubr.bf16.mxu0 0
        %2081 = vmatmul.mubr.bf16.gmra.mrb[0].mxu0 %v1997
        %v2082 = vpop.f32.mrb[0].mxu0
        %v2083 = vadd.f32 0.0, %v2082
        %v2084 = vpop.f32.mrb[0].mxu0
        %v2085 = vpop.f32.mrb[0].mxu0
        %v2086 = vadd.f32 0.0, %v2085
        %v2087 = vpop.f32.mrb[0].mxu0
        %2088 = vmatprep.mubr.bf16.mxu0 0
        %2089 = vmatmul.mubr.bf16.gmra.mrb[0].mxu0 %v1998
        %v2090 = vpop.f32.mrb[0].mxu0
        %v2091 = vadd.f32 0.0, %v2090
        %v2092 = vpop.f32.mrb[0].mxu0
        %v2093 = vpop.f32.mrb[0].mxu0
        %v2094 = vadd.f32 0.0, %v2093
        %v2095 = vpop.f32.mrb[0].mxu0
        %2096 = vmatprep.mubr.bf16.mxu0 0
        %2097 = vmatmul.mubr.bf16.gmra.mrb[0].mxu0 %v1999
        %v2098 = vpop.f32.mrb[0].mxu0
        %v2099 = vadd.f32 0.0, %v2098
        %v2100 = vpop.f32.mrb[0].mxu0
        %v2101 = vpop.f32.mrb[0].mxu0
        %v2102 = vadd.f32 0.0, %v2101
        %v2103 = vpop.f32.mrb[0].mxu0
        %2104 = vdwg.mxu0
        %v2105 = vxor.u32 %v2043, 2147483648
        %v2106 = vxor.u32 %v2046, 2147483648
        %v2107 = vxor.u32 %v2051, 2147483648
        %v2108 = vxor.u32 %v2054, 2147483648
        %v2109 = vxor.u32 %v2059, 2147483648
        %v2110 = vxor.u32 %v2062, 2147483648
        %v2111 = vxor.u32 %v2067, 2147483648
        %v2112 = vxor.u32 %v2070, 2147483648
        %v2113 = vxor.u32 %v2075, 2147483648
        %v2114 = vxor.u32 %v2078, 2147483648
        %v2115 = vxor.u32 %v2083, 2147483648
        %v2116 = vxor.u32 %v2086, 2147483648
        %v2117 = vxor.u32 %v2091, 2147483648
        %v2118 = vxor.u32 %v2094, 2147483648
        %v2119 = vxor.u32 %v2099, 2147483648
        %v2120 = vxor.u32 %v2102, 2147483648
        %v2121 = vmul.f32 %v2105, 1.442695
        %v2122 = vpow.pop %v2121
        %v2123 = vmul.f32 %v2106, 1.442695
        %v2124 = vpow.pop %v2123
        %v2125 = vmul.f32 %v2107, 1.442695
        %v2126 = vpow.pop %v2125
        %v2127 = vmul.f32 %v2108, 1.442695
        %v2128 = vpow.pop %v2127
        %v2129 = vmul.f32 %v2109, 1.442695
        %v2130 = vpow.pop %v2129
        %v2131 = vmul.f32 %v2110, 1.442695
        %v2132 = vpow.pop %v2131
        %v2133 = vmul.f32 %v2111, 1.442695
        %v2134 = vpow.pop %v2133
        %v2135 = vmul.f32 %v2112, 1.442695
        %v2136 = vpow.pop %v2135
        %v2137 = vmul.f32 %v2113, 1.442695
        %v2138 = vpow.pop %v2137
        %v2139 = vmul.f32 %v2114, 1.442695
        %v2140 = vpow.pop %v2139
        %v2141 = vmul.f32 %v2115, 1.442695
        %v2142 = vpow.pop %v2141
        %v2143 = vmul.f32 %v2116, 1.442695
        %v2144 = vpow.pop %v2143
        %v2145 = vmul.f32 %v2117, 1.442695
        %v2146 = vpow.pop %v2145
        %v2147 = vmul.f32 %v2118, 1.442695
        %v2148 = vpow.pop %v2147
        %v2149 = vmul.f32 %v2119, 1.442695
        %v2150 = vpow.pop %v2149
        %v2151 = vmul.f32 %v2120, 1.442695
        %v2152 = vpow.pop %v2151
        %v2153 = vadd.f32 %v2122, 1.0
        %v2154 = vadd.f32 %v2124, 1.0
        %v2155 = vadd.f32 %v2126, 1.0
        %v2156 = vadd.f32 %v2128, 1.0
        %v2157 = vadd.f32 %v2130, 1.0
        %v2158 = vadd.f32 %v2132, 1.0
        %v2159 = vadd.f32 %v2134, 1.0
        %v2160 = vadd.f32 %v2136, 1.0
        %v2161 = vadd.f32 %v2138, 1.0
        %v2162 = vadd.f32 %v2140, 1.0
        %v2163 = vadd.f32 %v2142, 1.0
        %v2164 = vadd.f32 %v2144, 1.0
        %v2165 = vadd.f32 %v2146, 1.0
        %v2166 = vadd.f32 %v2148, 1.0
        %v2167 = vadd.f32 %v2150, 1.0
        %v2168 = vadd.f32 %v2152, 1.0
        %v2169 = vrcp.pop %v2153
        %v2170 = vmul.f32 1.0, %v2169
        %v2171 = vrcp.pop %v2154
        %v2172 = vmul.f32 1.0, %v2171
        %v2173 = vrcp.pop %v2155
        %v2174 = vmul.f32 1.0, %v2173
        %v2175 = vrcp.pop %v2156
        %v2176 = vmul.f32 1.0, %v2175
        %v2177 = vrcp.pop %v2157
        %v2178 = vmul.f32 1.0, %v2177
        %v2179 = vrcp.pop %v2158
        %v2180 = vmul.f32 1.0, %v2179
        %v2181 = vrcp.pop %v2159
        %v2182 = vmul.f32 1.0, %v2181
        %v2183 = vrcp.pop %v2160
        %v2184 = vmul.f32 1.0, %v2183
        %v2185 = vrcp.pop %v2161
        %v2186 = vmul.f32 1.0, %v2185
        %v2187 = vrcp.pop %v2162
        %v2188 = vmul.f32 1.0, %v2187
        %v2189 = vrcp.pop %v2163
        %v2190 = vmul.f32 1.0, %v2189
        %v2191 = vrcp.pop %v2164
        %v2192 = vmul.f32 1.0, %v2191
        %v2193 = vrcp.pop %v2165
        %v2194 = vmul.f32 1.0, %v2193
        %v2195 = vrcp.pop %v2166
        %v2196 = vmul.f32 1.0, %v2195
        %v2197 = vrcp.pop %v2167
        %v2198 = vmul.f32 1.0, %v2197
        %v2199 = vrcp.pop %v2168
        %v2200 = vmul.f32 1.0, %v2199
        %v2201 = vmul.f32 %v1860, %v2170
        %v2202 = vmul.f32 %v1864, %v2172
        %v2203 = vmul.f32 %v1870, %v2174
        %v2204 = vmul.f32 %v1874, %v2176
        %v2205 = vmul.f32 %v1880, %v2178
        %v2206 = vmul.f32 %v1884, %v2180
        %v2207 = vmul.f32 %v1890, %v2182
        %v2208 = vmul.f32 %v1894, %v2184
        %v2209 = vmul.f32 %v1900, %v2186
        %v2210 = vmul.f32 %v1904, %v2188
        %v2211 = vmul.f32 %v1910, %v2190
        %v2212 = vmul.f32 %v1914, %v2192
        %v2213 = vmul.f32 %v1920, %v2194
        %v2214 = vmul.f32 %v1924, %v2196
        %v2215 = vmul.f32 %v1930, %v2198
        %v2216 = vmul.f32 %v1934, %v2200
        %v2217 = vpack.c.bf16 %v2202, %v2201
        %v2218 = vpack.c.bf16 %v2204, %v2203
        %v2219 = vpack.c.bf16 %v2206, %v2205
        %v2220 = vpack.c.bf16 %v2208, %v2207
        %v2221 = vpack.c.bf16 %v2210, %v2209
        %v2222 = vpack.c.bf16 %v2212, %v2211
        %v2223 = vpack.c.bf16 %v2214, %v2213
        %v2224 = vpack.c.bf16 %v2216, %v2215
        %v2225 = vld [vmem:[#allocation10] sm:$0xff]
        %v2226 = vld [vmem:[#allocation10 + $0x8] sm:$0xff]
        %v2227 = vld [vmem:[#allocation10 + $0x10] sm:$0xff]
        %v2228 = vld [vmem:[#allocation10 + $0x18] sm:$0xff]
        %v2229 = vld [vmem:[#allocation10 + $0x20] sm:$0xff]
        %v2230 = vld [vmem:[#allocation10 + $0x28] sm:$0xff]
        %v2231 = vld [vmem:[#allocation10 + $0x30] sm:$0xff]
        %v2232 = vld [vmem:[#allocation10 + $0x38] sm:$0xff]
        %v2233 = vld [vmem:[#allocation10 + $0x40] sm:$0xff]
        %v2234 = vld [vmem:[#allocation10 + $0x48] sm:$0xff]
        %v2235 = vld [vmem:[#allocation10 + $0x50] sm:$0xff]
        %v2236 = vld [vmem:[#allocation10 + $0x58] sm:$0xff]
        %v2237 = vld [vmem:[#allocation10 + $0x60] sm:$0xff]
        %v2238 = vld [vmem:[#allocation10 + $0x68] sm:$0xff]
        %v2239 = vld [vmem:[#allocation10 + $0x70] sm:$0xff]
        %v2240 = vld [vmem:[#allocation10 + $0x78] sm:$0xff]
        %v2241 = vld [vmem:[#allocation10 + $0x80] sm:$0xff]
        %v2242 = vld [vmem:[#allocation10 + $0x88] sm:$0xff]
        %v2243 = vld [vmem:[#allocation10 + $0x90] sm:$0xff]
        %v2244 = vld [vmem:[#allocation10 + $0x98] sm:$0xff]
        %v2245 = vld [vmem:[#allocation10 + $0xa0] sm:$0xff]
        %v2246 = vld [vmem:[#allocation10 + $0xa8] sm:$0xff]
        %v2247 = vld [vmem:[#allocation10 + $0xb0] sm:$0xff]
        %v2248 = vld [vmem:[#allocation10 + $0xb8] sm:$0xff]
        %v2249 = vld [vmem:[#allocation10 + $0xc0] sm:$0xff]
        %v2250 = vld [vmem:[#allocation10 + $0xc8] sm:$0xff]
        %v2251 = vld [vmem:[#allocation10 + $0xd0] sm:$0xff]
        %v2252 = vld [vmem:[#allocation10 + $0xd8] sm:$0xff]
        %v2253 = vld [vmem:[#allocation10 + $0xe0] sm:$0xff]
        %v2254 = vld [vmem:[#allocation10 + $0xe8] sm:$0xff]
        %v2255 = vld [vmem:[#allocation10 + $0xf0] sm:$0xff]
        %v2256 = vld [vmem:[#allocation10 + $0xf8] sm:$0xff]
        %v2257 = vld [vmem:[#allocation10 + $0x100] sm:$0xff]
        %v2258 = vld [vmem:[#allocation10 + $0x108] sm:$0xff]
        %v2259 = vld [vmem:[#allocation10 + $0x110] sm:$0xff]
        %v2260 = vld [vmem:[#allocation10 + $0x118] sm:$0xff]
        %v2261 = vld [vmem:[#allocation10 + $0x120] sm:$0xff]
        %v2262 = vld [vmem:[#allocation10 + $0x128] sm:$0xff]
        %v2263 = vld [vmem:[#allocation10 + $0x130] sm:$0xff]
        %v2264 = vld [vmem:[#allocation10 + $0x138] sm:$0xff]
        %v2265 = vld [vmem:[#allocation10 + $0x140] sm:$0xff]
        %v2266 = vld [vmem:[#allocation10 + $0x148] sm:$0xff]
        %v2267 = vld [vmem:[#allocation10 + $0x150] sm:$0xff]
        %v2268 = vld [vmem:[#allocation10 + $0x158] sm:$0xff]
        %v2269 = vld [vmem:[#allocation10 + $0x160] sm:$0xff]
        %v2270 = vld [vmem:[#allocation10 + $0x168] sm:$0xff]
        %v2271 = vld [vmem:[#allocation10 + $0x170] sm:$0xff]
        %v2272 = vld [vmem:[#allocation10 + $0x178] sm:$0xff]
        %v2273 = vld [vmem:[#allocation10 + $0x180] sm:$0xff]
        %v2274 = vld [vmem:[#allocation10 + $0x188] sm:$0xff]
        %v2275 = vld [vmem:[#allocation10 + $0x190] sm:$0xff]
        %v2276 = vld [vmem:[#allocation10 + $0x198] sm:$0xff]
        %v2277 = vld [vmem:[#allocation10 + $0x1a0] sm:$0xff]
        %v2278 = vld [vmem:[#allocation10 + $0x1a8] sm:$0xff]
        %v2279 = vld [vmem:[#allocation10 + $0x1b0] sm:$0xff]
        %v2280 = vld [vmem:[#allocation10 + $0x1b8] sm:$0xff]
        %v2281 = vld [vmem:[#allocation10 + $0x1c0] sm:$0xff]
        %v2282 = vld [vmem:[#allocation10 + $0x1c8] sm:$0xff]
        %v2283 = vld [vmem:[#allocation10 + $0x1d0] sm:$0xff]
        %v2284 = vld [vmem:[#allocation10 + $0x1d8] sm:$0xff]
        %v2285 = vld [vmem:[#allocation10 + $0x1e0] sm:$0xff]
        %v2286 = vld [vmem:[#allocation10 + $0x1e8] sm:$0xff]
        %v2287 = vld [vmem:[#allocation10 + $0x1f0] sm:$0xff]
        %v2288 = vld [vmem:[#allocation10 + $0x1f8] sm:$0xff]
        %v2289 = vld [vmem:[%s5] sm:$0xff]
        %v2291 = vlaneseq
        %v2292 = vshrl.u32 %v2291, 7
        %v2293 = vsub.s32 0, %v2292
        %v2294 = vrot.slane %v2289, %v2293
        %v2295 = vlaneseq
        %v2296 = vshrl.u32 %v2295, 7
        %v2297 = vsub.s32 1, %v2296
        %v2298 = vrot.slane %v2289, %v2297
        %v2299 = vlaneseq
        %v2300 = vshrl.u32 %v2299, 7
        %v2301 = vsub.s32 2, %v2300
        %v2302 = vrot.slane %v2289, %v2301
        %v2303 = vlaneseq
        %v2304 = vshrl.u32 %v2303, 7
        %v2305 = vsub.s32 3, %v2304
        %v2306 = vrot.slane %v2289, %v2305
        %v2307 = vlaneseq
        %v2308 = vshrl.u32 %v2307, 7
        %v2309 = vsub.s32 4, %v2308
        %v2310 = vrot.slane %v2289, %v2309
        %v2311 = vlaneseq
        %v2312 = vshrl.u32 %v2311, 7
        %v2313 = vsub.s32 5, %v2312
        %v2314 = vrot.slane %v2289, %v2313
        %v2315 = vlaneseq
        %v2316 = vshrl.u32 %v2315, 7
        %v2317 = vsub.s32 6, %v2316
        %v2318 = vrot.slane %v2289, %v2317
        %v2319 = vlaneseq
        %v2320 = vshrl.u32 %v2319, 7
        %v2321 = vsub.s32 7, %v2320
        %v2322 = vrot.slane %v2289, %v2321
        %v2395 = vunpack.c.l.b16 %v2225
        %v2396 = vunpack.c.h.b16 %v2225
        %v2397 = vunpack.c.l.b16 %v2226
        %v2398 = vunpack.c.h.b16 %v2226
        %v2399 = vunpack.c.l.b16 %v2227
        %v2400 = vunpack.c.h.b16 %v2227
        %v2401 = vunpack.c.l.b16 %v2228
        %v2402 = vunpack.c.h.b16 %v2228
        %v2403 = vunpack.c.l.b16 %v2229
        %v2404 = vunpack.c.h.b16 %v2229
        %v2405 = vunpack.c.l.b16 %v2230
        %v2406 = vunpack.c.h.b16 %v2230
        %v2407 = vunpack.c.l.b16 %v2231
        %v2408 = vunpack.c.h.b16 %v2231
        %v2409 = vunpack.c.l.b16 %v2232
        %v2410 = vunpack.c.h.b16 %v2232
        %v2411 = vunpack.c.l.b16 %v2233
        %v2412 = vunpack.c.h.b16 %v2233
        %v2413 = vunpack.c.l.b16 %v2234
        %v2414 = vunpack.c.h.b16 %v2234
        %v2415 = vunpack.c.l.b16 %v2235
        %v2416 = vunpack.c.h.b16 %v2235
        %v2417 = vunpack.c.l.b16 %v2236
        %v2418 = vunpack.c.h.b16 %v2236
        %v2419 = vunpack.c.l.b16 %v2237
        %v2420 = vunpack.c.h.b16 %v2237
        %v2421 = vunpack.c.l.b16 %v2238
        %v2422 = vunpack.c.h.b16 %v2238
        %v2423 = vunpack.c.l.b16 %v2239
        %v2424 = vunpack.c.h.b16 %v2239
        %v2425 = vunpack.c.l.b16 %v2240
        %v2426 = vunpack.c.h.b16 %v2240
        %v2427 = vunpack.c.l.b16 %v2241
        %v2428 = vunpack.c.h.b16 %v2241
        %v2429 = vunpack.c.l.b16 %v2242
        %v2430 = vunpack.c.h.b16 %v2242
        %v2431 = vunpack.c.l.b16 %v2243
        %v2432 = vunpack.c.h.b16 %v2243
        %v2433 = vunpack.c.l.b16 %v2244
        %v2434 = vunpack.c.h.b16 %v2244
        %v2435 = vunpack.c.l.b16 %v2245
        %v2436 = vunpack.c.h.b16 %v2245
        %v2437 = vunpack.c.l.b16 %v2246
        %v2438 = vunpack.c.h.b16 %v2246
        %v2439 = vunpack.c.l.b16 %v2247
        %v2440 = vunpack.c.h.b16 %v2247
        %v2441 = vunpack.c.l.b16 %v2248
        %v2442 = vunpack.c.h.b16 %v2248
        %v2443 = vunpack.c.l.b16 %v2249
        %v2444 = vunpack.c.h.b16 %v2249
        %v2445 = vunpack.c.l.b16 %v2250
        %v2446 = vunpack.c.h.b16 %v2250
        %v2447 = vunpack.c.l.b16 %v2251
        %v2448 = vunpack.c.h.b16 %v2251
        %v2449 = vunpack.c.l.b16 %v2252
        %v2450 = vunpack.c.h.b16 %v2252
        %v2451 = vunpack.c.l.b16 %v2253
        %v2452 = vunpack.c.h.b16 %v2253
        %v2453 = vunpack.c.l.b16 %v2254
        %v2454 = vunpack.c.h.b16 %v2254
        %v2455 = vunpack.c.l.b16 %v2255
        %v2456 = vunpack.c.h.b16 %v2255
        %v2457 = vunpack.c.l.b16 %v2256
        %v2458 = vunpack.c.h.b16 %v2256
        %v2459 = vunpack.c.l.b16 %v2257
        %v2460 = vunpack.c.h.b16 %v2257
        %v2461 = vunpack.c.l.b16 %v2258
        %v2462 = vunpack.c.h.b16 %v2258
        %v2463 = vunpack.c.l.b16 %v2259
        %v2464 = vunpack.c.h.b16 %v2259
        %v2465 = vunpack.c.l.b16 %v2260
        %v2466 = vunpack.c.h.b16 %v2260
        %v2467 = vunpack.c.l.b16 %v2261
        %v2468 = vunpack.c.h.b16 %v2261
        %v2469 = vunpack.c.l.b16 %v2262
        %v2470 = vunpack.c.h.b16 %v2262
        %v2471 = vunpack.c.l.b16 %v2263
        %v2472 = vunpack.c.h.b16 %v2263
        %v2473 = vunpack.c.l.b16 %v2264
        %v2474 = vunpack.c.h.b16 %v2264
        %v2475 = vunpack.c.l.b16 %v2265
        %v2476 = vunpack.c.h.b16 %v2265
        %v2477 = vunpack.c.l.b16 %v2266
        %v2478 = vunpack.c.h.b16 %v2266
        %v2479 = vunpack.c.l.b16 %v2267
        %v2480 = vunpack.c.h.b16 %v2267
        %v2481 = vunpack.c.l.b16 %v2268
        %v2482 = vunpack.c.h.b16 %v2268
        %v2483 = vunpack.c.l.b16 %v2269
        %v2484 = vunpack.c.h.b16 %v2269
        %v2485 = vunpack.c.l.b16 %v2270
        %v2486 = vunpack.c.h.b16 %v2270
        %v2487 = vunpack.c.l.b16 %v2271
        %v2488 = vunpack.c.h.b16 %v2271
        %v2489 = vunpack.c.l.b16 %v2272
        %v2490 = vunpack.c.h.b16 %v2272
        %v2491 = vunpack.c.l.b16 %v2273
        %v2492 = vunpack.c.h.b16 %v2273
        %v2493 = vunpack.c.l.b16 %v2274
        %v2494 = vunpack.c.h.b16 %v2274
        %v2495 = vunpack.c.l.b16 %v2275
        %v2496 = vunpack.c.h.b16 %v2275
        %v2497 = vunpack.c.l.b16 %v2276
        %v2498 = vunpack.c.h.b16 %v2276
        %v2499 = vunpack.c.l.b16 %v2277
        %v2500 = vunpack.c.h.b16 %v2277
        %v2501 = vunpack.c.l.b16 %v2278
        %v2502 = vunpack.c.h.b16 %v2278
        %v2503 = vunpack.c.l.b16 %v2279
        %v2504 = vunpack.c.h.b16 %v2279
        %v2505 = vunpack.c.l.b16 %v2280
        %v2506 = vunpack.c.h.b16 %v2280
        %v2507 = vunpack.c.l.b16 %v2281
        %v2508 = vunpack.c.h.b16 %v2281
        %v2509 = vunpack.c.l.b16 %v2282
        %v2510 = vunpack.c.h.b16 %v2282
        %v2511 = vunpack.c.l.b16 %v2283
        %v2512 = vunpack.c.h.b16 %v2283
        %v2513 = vunpack.c.l.b16 %v2284
        %v2514 = vunpack.c.h.b16 %v2284
        %v2515 = vunpack.c.l.b16 %v2285
        %v2516 = vunpack.c.h.b16 %v2285
        %v2517 = vunpack.c.l.b16 %v2286
        %v2518 = vunpack.c.h.b16 %v2286
        %v2519 = vunpack.c.l.b16 %v2287
        %v2520 = vunpack.c.h.b16 %v2287
        %v2521 = vunpack.c.l.b16 %v2288
        %v2522 = vunpack.c.h.b16 %v2288
        %v2523 = vpack.c.b16 %v2403, %v2395
        %v2524 = vpack.c.b16 %v2404, %v2396
        %v2525 = vpack.c.b16 %v2405, %v2397
        %v2526 = vpack.c.b16 %v2406, %v2398
        %v2527 = vpack.c.b16 %v2407, %v2399
        %v2528 = vpack.c.b16 %v2408, %v2400
        %v2529 = vpack.c.b16 %v2409, %v2401
        %v2530 = vpack.c.b16 %v2410, %v2402
        %v2531 = vpack.c.b16 %v2419, %v2411
        %v2532 = vpack.c.b16 %v2420, %v2412
        %v2533 = vpack.c.b16 %v2421, %v2413
        %v2534 = vpack.c.b16 %v2422, %v2414
        %v2535 = vpack.c.b16 %v2423, %v2415
        %v2536 = vpack.c.b16 %v2424, %v2416
        %v2537 = vpack.c.b16 %v2425, %v2417
        %v2538 = vpack.c.b16 %v2426, %v2418
        %v2539 = vpack.c.b16 %v2435, %v2427
        %v2540 = vpack.c.b16 %v2436, %v2428
        %v2541 = vpack.c.b16 %v2437, %v2429
        %v2542 = vpack.c.b16 %v2438, %v2430
        %v2543 = vpack.c.b16 %v2439, %v2431
        %v2544 = vpack.c.b16 %v2440, %v2432
        %v2545 = vpack.c.b16 %v2441, %v2433
        %v2546 = vpack.c.b16 %v2442, %v2434
        %v2547 = vpack.c.b16 %v2451, %v2443
        %v2548 = vpack.c.b16 %v2452, %v2444
        %v2549 = vpack.c.b16 %v2453, %v2445
        %v2550 = vpack.c.b16 %v2454, %v2446
        %v2551 = vpack.c.b16 %v2455, %v2447
        %v2552 = vpack.c.b16 %v2456, %v2448
        %v2553 = vpack.c.b16 %v2457, %v2449
        %v2554 = vpack.c.b16 %v2458, %v2450
        %v2555 = vpack.c.b16 %v2467, %v2459
        %v2556 = vpack.c.b16 %v2468, %v2460
        %v2557 = vpack.c.b16 %v2469, %v2461
        %v2558 = vpack.c.b16 %v2470, %v2462
        %v2559 = vpack.c.b16 %v2471, %v2463
        %v2560 = vpack.c.b16 %v2472, %v2464
        %v2561 = vpack.c.b16 %v2473, %v2465
        %v2562 = vpack.c.b16 %v2474, %v2466
        %v2563 = vpack.c.b16 %v2483, %v2475
        %v2564 = vpack.c.b16 %v2484, %v2476
        %v2565 = vpack.c.b16 %v2485, %v2477
        %v2566 = vpack.c.b16 %v2486, %v2478
        %v2567 = vpack.c.b16 %v2487, %v2479
        %v2568 = vpack.c.b16 %v2488, %v2480
        %v2569 = vpack.c.b16 %v2489, %v2481
        %v2570 = vpack.c.b16 %v2490, %v2482
        %v2571 = vpack.c.b16 %v2499, %v2491
        %v2572 = vpack.c.b16 %v2500, %v2492
        %v2573 = vpack.c.b16 %v2501, %v2493
        %v2574 = vpack.c.b16 %v2502, %v2494
        %v2575 = vpack.c.b16 %v2503, %v2495
        %v2576 = vpack.c.b16 %v2504, %v2496
        %v2577 = vpack.c.b16 %v2505, %v2497
        %v2578 = vpack.c.b16 %v2506, %v2498
        %v2579 = vpack.c.b16 %v2515, %v2507
        %v2580 = vpack.c.b16 %v2516, %v2508
        %v2581 = vpack.c.b16 %v2517, %v2509
        %v2582 = vpack.c.b16 %v2518, %v2510
        %v2583 = vpack.c.b16 %v2519, %v2511
        %v2584 = vpack.c.b16 %v2520, %v2512
        %v2585 = vpack.c.b16 %v2521, %v2513
        %v2586 = vpack.c.b16 %v2522, %v2514
        %2651 = vmatprep.subr.bf16.mxu0 %v2524
        %2652 = vmatpush1.bf16.msra.mxu0 %v2523
        %2653 = vmatprep.subr.bf16.mxu0 %v2532
        %2654 = vmatpush1.bf16.msra.mxu0 %v2531
        %2655 = vmatprep.subr.bf16.mxu0 %v2540
        %2656 = vmatpush1.bf16.msra.mxu0 %v2539
        %2657 = vmatprep.subr.bf16.mxu0 %v2548
        %2658 = vmatpush1.bf16.msra.mxu0 %v2547
        %2659 = vmatprep.subr.bf16.mxu0 %v2556
        %2660 = vmatpush1.bf16.msra.mxu0 %v2555
        %2661 = vmatprep.subr.bf16.mxu0 %v2564
        %2662 = vmatpush1.bf16.msra.mxu0 %v2563
        %2663 = vmatprep.subr.bf16.mxu0 %v2572
        %2664 = vmatpush1.bf16.msra.mxu0 %v2571
        %2665 = vmatprep.subr.bf16.mxu0 %v2580
        %2666 = vmatpush1.bf16.msra.mxu0 %v2579
        %2667 = vmatprep.subr.bf16.mxu0 0
        %2668 = vmatpush1.bf16.msra.mxu0 0
        %2669 = vmatprep.subr.bf16.mxu0 0
        %2670 = vmatpush1.bf16.msra.mxu0 0
        %2671 = vmatprep.subr.bf16.mxu0 0
        %2672 = vmatpush1.bf16.msra.mxu0 0
        %2673 = vmatprep.subr.bf16.mxu0 0
        %2674 = vmatpush1.bf16.msra.mxu0 0
        %2675 = vmatprep.subr.bf16.mxu0 0
        %2676 = vmatpush1.bf16.msra.mxu0 0
        %2677 = vmatprep.subr.bf16.mxu0 0
        %2678 = vmatpush1.bf16.msra.mxu0 0
        %2679 = vmatprep.subr.bf16.mxu0 0
        %2680 = vmatpush1.bf16.msra.mxu0 0
        %2681 = vmatprep.subr.bf16.mxu0 0
        %2682 = vmatpush1.bf16.msra.mxu0 0
        %2683 = vmatprep.mubr.bf16.mxu0 0
        %2684 = vmatmul.mubr.bf16.gmra.mrb[0].mxu0 %v2217
        %v2685 = vpop.f32.mrb[0].mxu0
        %v2686 = vadd.f32 %v2294, %v2685
        %v2687 = vpop.f32.mrb[0].mxu0
        %v2688 = vadd.f32 %v2298, %v2687
        %v2689 = vpop.f32.mrb[0].mxu0
        %v2690 = vadd.f32 %v2294, %v2689
        %v2691 = vpop.f32.mrb[0].mxu0
        %v2692 = vadd.f32 %v2298, %v2691
        %2693 = vmatprep.mubr.bf16.mxu0 0
        %2694 = vmatmul.mubr.bf16.gmra.mrb[0].mxu0 %v2218
        %v2695 = vpop.f32.mrb[0].mxu0
        %v2696 = vadd.f32 %v2294, %v2695
        %v2697 = vpop.f32.mrb[0].mxu0
        %v2698 = vadd.f32 %v2298, %v2697
        %v2699 = vpop.f32.mrb[0].mxu0
        %v2700 = vadd.f32 %v2294, %v2699
        %v2701 = vpop.f32.mrb[0].mxu0
        %v2702 = vadd.f32 %v2298, %v2701
        %2703 = vmatprep.mubr.bf16.mxu0 0
        %2704 = vmatmul.mubr.bf16.gmra.mrb[0].mxu0 %v2219
        %v2705 = vpop.f32.mrb[0].mxu0
        %v2706 = vadd.f32 %v2294, %v2705
        %v2707 = vpop.f32.mrb[0].mxu0
        %v2708 = vadd.f32 %v2298, %v2707
        %v2709 = vpop.f32.mrb[0].mxu0
        %v2710 = vadd.f32 %v2294, %v2709
        %v2711 = vpop.f32.mrb[0].mxu0
        %v2712 = vadd.f32 %v2298, %v2711
        %2713 = vmatprep.mubr.bf16.mxu0 0
        %2714 = vmatmul.mubr.bf16.gmra.mrb[0].mxu0 %v2220
        %v2715 = vpop.f32.mrb[0].mxu0
        %v2716 = vadd.f32 %v2294, %v2715
        %v2717 = vpop.f32.mrb[0].mxu0
        %v2718 = vadd.f32 %v2298, %v2717
        %v2719 = vpop.f32.mrb[0].mxu0
        %v2720 = vadd.f32 %v2294, %v2719
        %v2721 = vpop.f32.mrb[0].mxu0
        %v2722 = vadd.f32 %v2298, %v2721
        %2723 = vmatprep.mubr.bf16.mxu0 0
        %2724 = vmatmul.mubr.bf16.gmra.mrb[0].mxu0 %v2221
        %v2725 = vpop.f32.mrb[0].mxu0
        %v2726 = vadd.f32 %v2294, %v2725
        %v2727 = vpop.f32.mrb[0].mxu0
        %v2728 = vadd.f32 %v2298, %v2727
        %v2729 = vpop.f32.mrb[0].mxu0
        %v2730 = vadd.f32 %v2294, %v2729
        %v2731 = vpop.f32.mrb[0].mxu0
        %v2732 = vadd.f32 %v2298, %v2731
        %2733 = vmatprep.mubr.bf16.mxu0 0
        %2734 = vmatmul.mubr.bf16.gmra.mrb[0].mxu0 %v2222
        %v2735 = vpop.f32.mrb[0].mxu0
        %v2736 = vadd.f32 %v2294, %v2735
        %v2737 = vpop.f32.mrb[0].mxu0
        %v2738 = vadd.f32 %v2298, %v2737
        %v2739 = vpop.f32.mrb[0].mxu0
        %v2740 = vadd.f32 %v2294, %v2739
        %v2741 = vpop.f32.mrb[0].mxu0
        %v2742 = vadd.f32 %v2298, %v2741
        %2743 = vmatprep.mubr.bf16.mxu0 0
        %2744 = vmatmul.mubr.bf16.gmra.mrb[0].mxu0 %v2223
        %v2745 = vpop.f32.mrb[0].mxu0
        %v2746 = vadd.f32 %v2294, %v2745
        %v2747 = vpop.f32.mrb[0].mxu0
        %v2748 = vadd.f32 %v2298, %v2747
        %v2749 = vpop.f32.mrb[0].mxu0
        %v2750 = vadd.f32 %v2294, %v2749
        %v2751 = vpop.f32.mrb[0].mxu0
        %v2752 = vadd.f32 %v2298, %v2751
        %2753 = vmatprep.mubr.bf16.mxu0 0
        %2754 = vmatmul.mubr.bf16.gmra.mrb[0].mxu0 %v2224
        %v2755 = vpop.f32.mrb[0].mxu0
        %v2756 = vadd.f32 %v2294, %v2755
        %v2757 = vpop.f32.mrb[0].mxu0
        %v2758 = vadd.f32 %v2298, %v2757
        %v2759 = vpop.f32.mrb[0].mxu0
        %v2760 = vadd.f32 %v2294, %v2759
        %v2761 = vpop.f32.mrb[0].mxu0
        %v2762 = vadd.f32 %v2298, %v2761
        %2763 = vdwg.mxu0
        %2764 = vmatprep.subr.bf16.mxu0 %v2526
        %2765 = vmatpush1.bf16.msra.mxu0 %v2525
        %2766 = vmatprep.subr.bf16.mxu0 %v2534
        %2767 = vmatpush1.bf16.msra.mxu0 %v2533
        %2768 = vmatprep.subr.bf16.mxu0 %v2542
        %2769 = vmatpush1.bf16.msra.mxu0 %v2541
        %2770 = vmatprep.subr.bf16.mxu0 %v2550
        %2771 = vmatpush1.bf16.msra.mxu0 %v2549
        %2772 = vmatprep.subr.bf16.mxu0 %v2558
        %2773 = vmatpush1.bf16.msra.mxu0 %v2557
        %2774 = vmatprep.subr.bf16.mxu0 %v2566
        %2775 = vmatpush1.bf16.msra.mxu0 %v2565
        %2776 = vmatprep.subr.bf16.mxu0 %v2574
        %2777 = vmatpush1.bf16.msra.mxu0 %v2573
        %2778 = vmatprep.subr.bf16.mxu0 %v2582
        %2779 = vmatpush1.bf16.msra.mxu0 %v2581
        %2780 = vmatprep.subr.bf16.mxu0 0
        %2781 = vmatpush1.bf16.msra.mxu0 0
        %2782 = vmatprep.subr.bf16.mxu0 0
        %2783 = vmatpush1.bf16.msra.mxu0 0
        %2784 = vmatprep.subr.bf16.mxu0 0
        %2785 = vmatpush1.bf16.msra.mxu0 0
        %2786 = vmatprep.subr.bf16.mxu0 0
        %2787 = vmatpush1.bf16.msra.mxu0 0
        %2788 = vmatprep.subr.bf16.mxu0 0
        %2789 = vmatpush1.bf16.msra.mxu0 0
        %2790 = vmatprep.subr.bf16.mxu0 0
        %2791 = vmatpush1.bf16.msra.mxu0 0
        %2792 = vmatprep.subr.bf16.mxu0 0
        %2793 = vmatpush1.bf16.msra.mxu0 0
        %2794 = vmatprep.subr.bf16.mxu0 0
        %2795 = vmatpush1.bf16.msra.mxu0 0
        %2796 = vmatprep.mubr.bf16.mxu0 0
        %2797 = vmatmul.mubr.bf16.gmra.mrb[0].mxu0 %v2217
        %v2798 = vpop.f32.mrb[0].mxu0
        %v2799 = vadd.f32 %v2302, %v2798
        %v2800 = vpop.f32.mrb[0].mxu0
        %v2801 = vadd.f32 %v2306, %v2800
        %v2802 = vpop.f32.mrb[0].mxu0
        %v2803 = vadd.f32 %v2302, %v2802
        %v2804 = vpop.f32.mrb[0].mxu0
        %v2805 = vadd.f32 %v2306, %v2804
        %2806 = vmatprep.mubr.bf16.mxu0 0
        %2807 = vmatmul.mubr.bf16.gmra.mrb[0].mxu0 %v2218
        %v2808 = vpop.f32.mrb[0].mxu0
        %v2809 = vadd.f32 %v2302, %v2808
        %v2810 = vpop.f32.mrb[0].mxu0
        %v2811 = vadd.f32 %v2306, %v2810
        %v2812 = vpop.f32.mrb[0].mxu0
        %v2813 = vadd.f32 %v2302, %v2812
        %v2814 = vpop.f32.mrb[0].mxu0
        %v2815 = vadd.f32 %v2306, %v2814
        %2816 = vmatprep.mubr.bf16.mxu0 0
        %2817 = vmatmul.mubr.bf16.gmra.mrb[0].mxu0 %v2219
        %v2818 = vpop.f32.mrb[0].mxu0
        %v2819 = vadd.f32 %v2302, %v2818
        %v2820 = vpop.f32.mrb[0].mxu0
        %v2821 = vadd.f32 %v2306, %v2820
        %v2822 = vpop.f32.mrb[0].mxu0
        %v2823 = vadd.f32 %v2302, %v2822
        %v2824 = vpop.f32.mrb[0].mxu0
        %v2825 = vadd.f32 %v2306, %v2824
        %2826 = vmatprep.mubr.bf16.mxu0 0
        %2827 = vmatmul.mubr.bf16.gmra.mrb[0].mxu0 %v2220
        %v2828 = vpop.f32.mrb[0].mxu0
        %v2829 = vadd.f32 %v2302, %v2828
        %v2830 = vpop.f32.mrb[0].mxu0
        %v2831 = vadd.f32 %v2306, %v2830
        %v2832 = vpop.f32.mrb[0].mxu0
        %v2833 = vadd.f32 %v2302, %v2832
        %v2834 = vpop.f32.mrb[0].mxu0
        %v2835 = vadd.f32 %v2306, %v2834
        %2836 = vmatprep.mubr.bf16.mxu0 0
        %2837 = vmatmul.mubr.bf16.gmra.mrb[0].mxu0 %v2221
        %v2838 = vpop.f32.mrb[0].mxu0
        %v2839 = vadd.f32 %v2302, %v2838
        %v2840 = vpop.f32.mrb[0].mxu0
        %v2841 = vadd.f32 %v2306, %v2840
        %v2842 = vpop.f32.mrb[0].mxu0
        %v2843 = vadd.f32 %v2302, %v2842
        %v2844 = vpop.f32.mrb[0].mxu0
        %v2845 = vadd.f32 %v2306, %v2844
        %2846 = vmatprep.mubr.bf16.mxu0 0
        %2847 = vmatmul.mubr.bf16.gmra.mrb[0].mxu0 %v2222
        %v2848 = vpop.f32.mrb[0].mxu0
        %v2849 = vadd.f32 %v2302, %v2848
        %v2850 = vpop.f32.mrb[0].mxu0
        %v2851 = vadd.f32 %v2306, %v2850
        %v2852 = vpop.f32.mrb[0].mxu0
        %v2853 = vadd.f32 %v2302, %v2852
        %v2854 = vpop.f32.mrb[0].mxu0
        %v2855 = vadd.f32 %v2306, %v2854
        %2856 = vmatprep.mubr.bf16.mxu0 0
        %2857 = vmatmul.mubr.bf16.gmra.mrb[0].mxu0 %v2223
        %v2858 = vpop.f32.mrb[0].mxu0
        %v2859 = vadd.f32 %v2302, %v2858
        %v2860 = vpop.f32.mrb[0].mxu0
        %v2861 = vadd.f32 %v2306, %v2860
        %v2862 = vpop.f32.mrb[0].mxu0
        %v2863 = vadd.f32 %v2302, %v2862
        %v2864 = vpop.f32.mrb[0].mxu0
        %v2865 = vadd.f32 %v2306, %v2864
        %2866 = vmatprep.mubr.bf16.mxu0 0
        %2867 = vmatmul.mubr.bf16.gmra.mrb[0].mxu0 %v2224
        %v2868 = vpop.f32.mrb[0].mxu0
        %v2869 = vadd.f32 %v2302, %v2868
        %v2870 = vpop.f32.mrb[0].mxu0
        %v2871 = vadd.f32 %v2306, %v2870
        %v2872 = vpop.f32.mrb[0].mxu0
        %v2873 = vadd.f32 %v2302, %v2872
        %v2874 = vpop.f32.mrb[0].mxu0
        %v2875 = vadd.f32 %v2306, %v2874
        %2876 = vdwg.mxu0
        %2877 = vmatprep.subr.bf16.mxu0 %v2528
        %2878 = vmatpush1.bf16.msra.mxu0 %v2527
        %2879 = vmatprep.subr.bf16.mxu0 %v2536
        %2880 = vmatpush1.bf16.msra.mxu0 %v2535
        %2881 = vmatprep.subr.bf16.mxu0 %v2544
        %2882 = vmatpush1.bf16.msra.mxu0 %v2543
        %2883 = vmatprep.subr.bf16.mxu0 %v2552
        %2884 = vmatpush1.bf16.msra.mxu0 %v2551
        %2885 = vmatprep.subr.bf16.mxu0 %v2560
        %2886 = vmatpush1.bf16.msra.mxu0 %v2559
        %2887 = vmatprep.subr.bf16.mxu0 %v2568
        %2888 = vmatpush1.bf16.msra.mxu0 %v2567
        %2889 = vmatprep.subr.bf16.mxu0 %v2576
        %2890 = vmatpush1.bf16.msra.mxu0 %v2575
        %2891 = vmatprep.subr.bf16.mxu0 %v2584
        %2892 = vmatpush1.bf16.msra.mxu0 %v2583
        %2893 = vmatprep.subr.bf16.mxu0 0
        %2894 = vmatpush1.bf16.msra.mxu0 0
        %2895 = vmatprep.subr.bf16.mxu0 0
        %2896 = vmatpush1.bf16.msra.mxu0 0
        %2897 = vmatprep.subr.bf16.mxu0 0
        %2898 = vmatpush1.bf16.msra.mxu0 0
        %2899 = vmatprep.subr.bf16.mxu0 0
        %2900 = vmatpush1.bf16.msra.mxu0 0
        %2901 = vmatprep.subr.bf16.mxu0 0
        %2902 = vmatpush1.bf16.msra.mxu0 0
        %2903 = vmatprep.subr.bf16.mxu0 0
        %2904 = vmatpush1.bf16.msra.mxu0 0
        %2905 = vmatprep.subr.bf16.mxu0 0
        %2906 = vmatpush1.bf16.msra.mxu0 0
        %2907 = vmatprep.subr.bf16.mxu0 0
        %2908 = vmatpush1.bf16.msra.mxu0 0
        %2909 = vmatprep.mubr.bf16.mxu0 0
        %2910 = vmatmul.mubr.bf16.gmra.mrb[0].mxu0 %v2217
        %v2911 = vpop.f32.mrb[0].mxu0
        %v2912 = vadd.f32 %v2310, %v2911
        %v2913 = vpop.f32.mrb[0].mxu0
        %v2914 = vadd.f32 %v2314, %v2913
        %v2915 = vpop.f32.mrb[0].mxu0
        %v2916 = vadd.f32 %v2310, %v2915
        %v2917 = vpop.f32.mrb[0].mxu0
        %v2918 = vadd.f32 %v2314, %v2917
        %2919 = vmatprep.mubr.bf16.mxu0 0
        %2920 = vmatmul.mubr.bf16.gmra.mrb[0].mxu0 %v2218
        %v2921 = vpop.f32.mrb[0].mxu0
        %v2922 = vadd.f32 %v2310, %v2921
        %v2923 = vpop.f32.mrb[0].mxu0
        %v2924 = vadd.f32 %v2314, %v2923
        %v2925 = vpop.f32.mrb[0].mxu0
        %v2926 = vadd.f32 %v2310, %v2925
        %v2927 = vpop.f32.mrb[0].mxu0
        %v2928 = vadd.f32 %v2314, %v2927
        %2929 = vmatprep.mubr.bf16.mxu0 0
        %2930 = vmatmul.mubr.bf16.gmra.mrb[0].mxu0 %v2219
        %v2931 = vpop.f32.mrb[0].mxu0
        %v2932 = vadd.f32 %v2310, %v2931
        %v2933 = vpop.f32.mrb[0].mxu0
        %v2934 = vadd.f32 %v2314, %v2933
        %v2935 = vpop.f32.mrb[0].mxu0
        %v2936 = vadd.f32 %v2310, %v2935
        %v2937 = vpop.f32.mrb[0].mxu0
        %v2938 = vadd.f32 %v2314, %v2937
        %2939 = vmatprep.mubr.bf16.mxu0 0
        %2940 = vmatmul.mubr.bf16.gmra.mrb[0].mxu0 %v2220
        %v2941 = vpop.f32.mrb[0].mxu0
        %v2942 = vadd.f32 %v2310, %v2941
        %v2943 = vpop.f32.mrb[0].mxu0
        %v2944 = vadd.f32 %v2314, %v2943
        %v2945 = vpop.f32.mrb[0].mxu0
        %v2946 = vadd.f32 %v2310, %v2945
        %v2947 = vpop.f32.mrb[0].mxu0
        %v2948 = vadd.f32 %v2314, %v2947
        %2949 = vmatprep.mubr.bf16.mxu0 0
        %2950 = vmatmul.mubr.bf16.gmra.mrb[0].mxu0 %v2221
        %v2951 = vpop.f32.mrb[0].mxu0
        %v2952 = vadd.f32 %v2310, %v2951
        %v2953 = vpop.f32.mrb[0].mxu0
        %v2954 = vadd.f32 %v2314, %v2953
        %v2955 = vpop.f32.mrb[0].mxu0
        %v2956 = vadd.f32 %v2310, %v2955
        %v2957 = vpop.f32.mrb[0].mxu0
        %v2958 = vadd.f32 %v2314, %v2957
        %2959 = vmatprep.mubr.bf16.mxu0 0
        %2960 = vmatmul.mubr.bf16.gmra.mrb[0].mxu0 %v2222
        %v2961 = vpop.f32.mrb[0].mxu0
        %v2962 = vadd.f32 %v2310, %v2961
        %v2963 = vpop.f32.mrb[0].mxu0
        %v2964 = vadd.f32 %v2314, %v2963
        %v2965 = vpop.f32.mrb[0].mxu0
        %v2966 = vadd.f32 %v2310, %v2965
        %v2967 = vpop.f32.mrb[0].mxu0
        %v2968 = vadd.f32 %v2314, %v2967
        %2969 = vmatprep.mubr.bf16.mxu0 0
        %2970 = vmatmul.mubr.bf16.gmra.mrb[0].mxu0 %v2223
        %v2971 = vpop.f32.mrb[0].mxu0
        %v2972 = vadd.f32 %v2310, %v2971
        %v2973 = vpop.f32.mrb[0].mxu0
        %v2974 = vadd.f32 %v2314, %v2973
        %v2975 = vpop.f32.mrb[0].mxu0
        %v2976 = vadd.f32 %v2310, %v2975
        %v2977 = vpop.f32.mrb[0].mxu0
        %v2978 = vadd.f32 %v2314, %v2977
        %2979 = vmatprep.mubr.bf16.mxu0 0
        %2980 = vmatmul.mubr.bf16.gmra.mrb[0].mxu0 %v2224
        %v2981 = vpop.f32.mrb[0].mxu0
        %v2982 = vadd.f32 %v2310, %v2981
        %v2983 = vpop.f32.mrb[0].mxu0
        %v2984 = vadd.f32 %v2314, %v2983
        %v2985 = vpop.f32.mrb[0].mxu0
        %v2986 = vadd.f32 %v2310, %v2985
        %v2987 = vpop.f32.mrb[0].mxu0
        %v2988 = vadd.f32 %v2314, %v2987
        %2989 = vdwg.mxu0
        %2990 = vmatprep.subr.bf16.mxu0 %v2530
        %2991 = vmatpush1.bf16.msra.mxu0 %v2529
        %2992 = vmatprep.subr.bf16.mxu0 %v2538
        %2993 = vmatpush1.bf16.msra.mxu0 %v2537
        %2994 = vmatprep.subr.bf16.mxu0 %v2546
        %2995 = vmatpush1.bf16.msra.mxu0 %v2545
        %2996 = vmatprep.subr.bf16.mxu0 %v2554
        %2997 = vmatpush1.bf16.msra.mxu0 %v2553
        %2998 = vmatprep.subr.bf16.mxu0 %v2562
        %2999 = vmatpush1.bf16.msra.mxu0 %v2561
        %3000 = vmatprep.subr.bf16.mxu0 %v2570
        %3001 = vmatpush1.bf16.msra.mxu0 %v2569
        %3002 = vmatprep.subr.bf16.mxu0 %v2578
        %3003 = vmatpush1.bf16.msra.mxu0 %v2577
        %3004 = vmatprep.subr.bf16.mxu0 %v2586
        %3005 = vmatpush1.bf16.msra.mxu0 %v2585
        %3006 = vmatprep.subr.bf16.mxu0 0
        %3007 = vmatpush1.bf16.msra.mxu0 0
        %3008 = vmatprep.subr.bf16.mxu0 0
        %3009 = vmatpush1.bf16.msra.mxu0 0
        %3010 = vmatprep.subr.bf16.mxu0 0
        %3011 = vmatpush1.bf16.msra.mxu0 0
        %3012 = vmatprep.subr.bf16.mxu0 0
        %3013 = vmatpush1.bf16.msra.mxu0 0
        %3014 = vmatprep.subr.bf16.mxu0 0
        %3015 = vmatpush1.bf16.msra.mxu0 0
        %3016 = vmatprep.subr.bf16.mxu0 0
        %3017 = vmatpush1.bf16.msra.mxu0 0
        %3018 = vmatprep.subr.bf16.mxu0 0
        %3019 = vmatpush1.bf16.msra.mxu0 0
        %3020 = vmatprep.subr.bf16.mxu0 0
        %3021 = vmatpush1.bf16.msra.mxu0 0
        %3022 = vmatprep.mubr.bf16.mxu0 0
        %3023 = vmatmul.mubr.bf16.gmra.mrb[0].mxu0 %v2217
        %v3024 = vpop.f32.mrb[0].mxu0
        %v3025 = vadd.f32 %v2318, %v3024
        %v3026 = vpop.f32.mrb[0].mxu0
        %v3027 = vadd.f32 %v2322, %v3026
        %v3028 = vpop.f32.mrb[0].mxu0
        %v3029 = vadd.f32 %v2318, %v3028
        %v3030 = vpop.f32.mrb[0].mxu0
        %v3031 = vadd.f32 %v2322, %v3030
        %3032 = vmatprep.mubr.bf16.mxu0 0
        %3033 = vmatmul.mubr.bf16.gmra.mrb[0].mxu0 %v2218
        %v3034 = vpop.f32.mrb[0].mxu0
        %v3035 = vadd.f32 %v2318, %v3034
        %v3036 = vpop.f32.mrb[0].mxu0
        %v3037 = vadd.f32 %v2322, %v3036
        %v3038 = vpop.f32.mrb[0].mxu0
        %v3039 = vadd.f32 %v2318, %v3038
        %v3040 = vpop.f32.mrb[0].mxu0
        %v3041 = vadd.f32 %v2322, %v3040
        %3042 = vmatprep.mubr.bf16.mxu0 0
        %3043 = vmatmul.mubr.bf16.gmra.mrb[0].mxu0 %v2219
        %v3044 = vpop.f32.mrb[0].mxu0
        %v3045 = vadd.f32 %v2318, %v3044
        %v3046 = vpop.f32.mrb[0].mxu0
        %v3047 = vadd.f32 %v2322, %v3046
        %v3048 = vpop.f32.mrb[0].mxu0
        %v3049 = vadd.f32 %v2318, %v3048
        %v3050 = vpop.f32.mrb[0].mxu0
        %v3051 = vadd.f32 %v2322, %v3050
        %3052 = vmatprep.mubr.bf16.mxu0 0
        %3053 = vmatmul.mubr.bf16.gmra.mrb[0].mxu0 %v2220
        %v3054 = vpop.f32.mrb[0].mxu0
        %v3055 = vadd.f32 %v2318, %v3054
        %v3056 = vpop.f32.mrb[0].mxu0
        %v3057 = vadd.f32 %v2322, %v3056
        %v3058 = vpop.f32.mrb[0].mxu0
        %v3059 = vadd.f32 %v2318, %v3058
        %v3060 = vpop.f32.mrb[0].mxu0
        %v3061 = vadd.f32 %v2322, %v3060
        %3062 = vmatprep.mubr.bf16.mxu0 0
        %3063 = vmatmul.mubr.bf16.gmra.mrb[0].mxu0 %v2221
        %v3064 = vpop.f32.mrb[0].mxu0
        %v3065 = vadd.f32 %v2318, %v3064
        %v3066 = vpop.f32.mrb[0].mxu0
        %v3067 = vadd.f32 %v2322, %v3066
        %v3068 = vpop.f32.mrb[0].mxu0
        %v3069 = vadd.f32 %v2318, %v3068
        %v3070 = vpop.f32.mrb[0].mxu0
        %v3071 = vadd.f32 %v2322, %v3070
        %3072 = vmatprep.mubr.bf16.mxu0 0
        %3073 = vmatmul.mubr.bf16.gmra.mrb[0].mxu0 %v2222
        %v3074 = vpop.f32.mrb[0].mxu0
        %v3075 = vadd.f32 %v2318, %v3074
        %v3076 = vpop.f32.mrb[0].mxu0
        %v3077 = vadd.f32 %v2322, %v3076
        %v3078 = vpop.f32.mrb[0].mxu0
        %v3079 = vadd.f32 %v2318, %v3078
        %v3080 = vpop.f32.mrb[0].mxu0
        %v3081 = vadd.f32 %v2322, %v3080
        %3082 = vmatprep.mubr.bf16.mxu0 0
        %3083 = vmatmul.mubr.bf16.gmra.mrb[0].mxu0 %v2223
        %v3084 = vpop.f32.mrb[0].mxu0
        %v3085 = vadd.f32 %v2318, %v3084
        %v3086 = vpop.f32.mrb[0].mxu0
        %v3087 = vadd.f32 %v2322, %v3086
        %v3088 = vpop.f32.mrb[0].mxu0
        %v3089 = vadd.f32 %v2318, %v3088
        %v3090 = vpop.f32.mrb[0].mxu0
        %v3091 = vadd.f32 %v2322, %v3090
        %3092 = vmatprep.mubr.bf16.mxu0 0
        %3093 = vmatmul.mubr.bf16.gmra.mrb[0].mxu0 %v2224
        %v3094 = vpop.f32.mrb[0].mxu0
        %v3095 = vadd.f32 %v2318, %v3094
        %v3096 = vpop.f32.mrb[0].mxu0
        %v3097 = vadd.f32 %v2322, %v3096
        %v3098 = vpop.f32.mrb[0].mxu0
        %v3099 = vadd.f32 %v2318, %v3098
        %v3100 = vpop.f32.mrb[0].mxu0
        %v3101 = vadd.f32 %v2322, %v3100
        %3102 = vdwg.mxu0
        %v3103 = vpack.c.bf16 %v2690, %v2686
        %v3104 = vpack.c.bf16 %v2692, %v2688
        %v3105 = vpack.c.bf16 %v2803, %v2799
        %v3106 = vpack.c.bf16 %v2805, %v2801
        %v3107 = vpack.c.bf16 %v2916, %v2912
        %v3108 = vpack.c.bf16 %v2918, %v2914
        %v3109 = vpack.c.bf16 %v3029, %v3025
        %v3110 = vpack.c.bf16 %v3031, %v3027
        %v3111 = vpack.c.bf16 %v2700, %v2696
        %v3112 = vpack.c.bf16 %v2702, %v2698
        %v3113 = vpack.c.bf16 %v2813, %v2809
        %v3114 = vpack.c.bf16 %v2815, %v2811
        %v3115 = vpack.c.bf16 %v2926, %v2922
        %v3116 = vpack.c.bf16 %v2928, %v2924
        %v3117 = vpack.c.bf16 %v3039, %v3035
        %v3118 = vpack.c.bf16 %v3041, %v3037
        %v3119 = vpack.c.bf16 %v2710, %v2706
        %v3120 = vpack.c.bf16 %v2712, %v2708
        %v3121 = vpack.c.bf16 %v2823, %v2819
        %v3122 = vpack.c.bf16 %v2825, %v2821
        %v3123 = vpack.c.bf16 %v2936, %v2932
        %v3124 = vpack.c.bf16 %v2938, %v2934
        %v3125 = vpack.c.bf16 %v3049, %v3045
        %v3126 = vpack.c.bf16 %v3051, %v3047
        %v3127 = vpack.c.bf16 %v2720, %v2716
        %v3128 = vpack.c.bf16 %v2722, %v2718
        %v3129 = vpack.c.bf16 %v2833, %v2829
        %v3130 = vpack.c.bf16 %v2835, %v2831
        %v3131 = vpack.c.bf16 %v2946, %v2942
        %v3132 = vpack.c.bf16 %v2948, %v2944
        %v3133 = vpack.c.bf16 %v3059, %v3055
        %v3134 = vpack.c.bf16 %v3061, %v3057
        %v3135 = vpack.c.bf16 %v2730, %v2726
        %v3136 = vpack.c.bf16 %v2732, %v2728
        %v3137 = vpack.c.bf16 %v2843, %v2839
        %v3138 = vpack.c.bf16 %v2845, %v2841
        %v3139 = vpack.c.bf16 %v2956, %v2952
        %v3140 = vpack.c.bf16 %v2958, %v2954
        %v3141 = vpack.c.bf16 %v3069, %v3065
        %v3142 = vpack.c.bf16 %v3071, %v3067
        %v3143 = vpack.c.bf16 %v2740, %v2736
        %v3144 = vpack.c.bf16 %v2742, %v2738
        %v3145 = vpack.c.bf16 %v2853, %v2849
        %v3146 = vpack.c.bf16 %v2855, %v2851
        %v3147 = vpack.c.bf16 %v2966, %v2962
        %v3148 = vpack.c.bf16 %v2968, %v2964
        %v3149 = vpack.c.bf16 %v3079, %v3075
        %v3150 = vpack.c.bf16 %v3081, %v3077
        %v3151 = vpack.c.bf16 %v2750, %v2746
        %v3152 = vpack.c.bf16 %v2752, %v2748
        %v3153 = vpack.c.bf16 %v2863, %v2859
        %v3154 = vpack.c.bf16 %v2865, %v2861
        %v3155 = vpack.c.bf16 %v2976, %v2972
        %v3156 = vpack.c.bf16 %v2978, %v2974
        %v3157 = vpack.c.bf16 %v3089, %v3085
        %v3158 = vpack.c.bf16 %v3091, %v3087
        %v3159 = vpack.c.bf16 %v2760, %v2756
        %v3160 = vpack.c.bf16 %v2762, %v2758
        %v3161 = vpack.c.bf16 %v2873, %v2869
        %v3162 = vpack.c.bf16 %v2875, %v2871
        %v3163 = vpack.c.bf16 %v2986, %v2982
        %v3164 = vpack.c.bf16 %v2988, %v2984
        %v3165 = vpack.c.bf16 %v3099, %v3095
        %v3166 = vpack.c.bf16 %v3101, %v3097
        %v3231 = vunpack.c.l.b16 %v3103
        %v3232 = vunpack.c.l.b16 %v3104
        %v3233 = vunpack.c.l.b16 %v3105
        %v3234 = vunpack.c.l.b16 %v3106
        %v3235 = vunpack.c.l.b16 %v3107
        %v3236 = vunpack.c.l.b16 %v3108
        %v3237 = vunpack.c.l.b16 %v3109
        %v3238 = vunpack.c.l.b16 %v3110
        %v3239 = vunpack.c.h.b16 %v3103
        %v3240 = vunpack.c.h.b16 %v3104
        %v3241 = vunpack.c.h.b16 %v3105
        %v3242 = vunpack.c.h.b16 %v3106
        %v3243 = vunpack.c.h.b16 %v3107
        %v3244 = vunpack.c.h.b16 %v3108
        %v3245 = vunpack.c.h.b16 %v3109
        %v3246 = vunpack.c.h.b16 %v3110
        %v3247 = vunpack.c.l.b16 %v3111
        %v3248 = vunpack.c.l.b16 %v3112
        %v3249 = vunpack.c.l.b16 %v3113
        %v3250 = vunpack.c.l.b16 %v3114
        %v3251 = vunpack.c.l.b16 %v3115
        %v3252 = vunpack.c.l.b16 %v3116
        %v3253 = vunpack.c.l.b16 %v3117
        %v3254 = vunpack.c.l.b16 %v3118
        %v3255 = vunpack.c.h.b16 %v3111
        %v3256 = vunpack.c.h.b16 %v3112
        %v3257 = vunpack.c.h.b16 %v3113
        %v3258 = vunpack.c.h.b16 %v3114
        %v3259 = vunpack.c.h.b16 %v3115
        %v3260 = vunpack.c.h.b16 %v3116
        %v3261 = vunpack.c.h.b16 %v3117
        %v3262 = vunpack.c.h.b16 %v3118
        %v3263 = vunpack.c.l.b16 %v3119
        %v3264 = vunpack.c.l.b16 %v3120
        %v3265 = vunpack.c.l.b16 %v3121
        %v3266 = vunpack.c.l.b16 %v3122
        %v3267 = vunpack.c.l.b16 %v3123
        %v3268 = vunpack.c.l.b16 %v3124
        %v3269 = vunpack.c.l.b16 %v3125
        %v3270 = vunpack.c.l.b16 %v3126
        %v3271 = vunpack.c.h.b16 %v3119
        %v3272 = vunpack.c.h.b16 %v3120
        %v3273 = vunpack.c.h.b16 %v3121
        %v3274 = vunpack.c.h.b16 %v3122
        %v3275 = vunpack.c.h.b16 %v3123
        %v3276 = vunpack.c.h.b16 %v3124
        %v3277 = vunpack.c.h.b16 %v3125
        %v3278 = vunpack.c.h.b16 %v3126
        %v3279 = vunpack.c.l.b16 %v3127
        %v3280 = vunpack.c.l.b16 %v3128
        %v3281 = vunpack.c.l.b16 %v3129
        %v3282 = vunpack.c.l.b16 %v3130
        %v3283 = vunpack.c.l.b16 %v3131
        %v3284 = vunpack.c.l.b16 %v3132
        %v3285 = vunpack.c.l.b16 %v3133
        %v3286 = vunpack.c.l.b16 %v3134
        %v3287 = vunpack.c.h.b16 %v3127
        %v3288 = vunpack.c.h.b16 %v3128
        %v3289 = vunpack.c.h.b16 %v3129
        %v3290 = vunpack.c.h.b16 %v3130
        %v3291 = vunpack.c.h.b16 %v3131
        %v3292 = vunpack.c.h.b16 %v3132
        %v3293 = vunpack.c.h.b16 %v3133
        %v3294 = vunpack.c.h.b16 %v3134
        %v3295 = vunpack.c.l.b16 %v3135
        %v3296 = vunpack.c.l.b16 %v3136
        %v3297 = vunpack.c.l.b16 %v3137
        %v3298 = vunpack.c.l.b16 %v3138
        %v3299 = vunpack.c.l.b16 %v3139
        %v3300 = vunpack.c.l.b16 %v3140
        %v3301 = vunpack.c.l.b16 %v3141
        %v3302 = vunpack.c.l.b16 %v3142
        %v3303 = vunpack.c.h.b16 %v3135
        %v3304 = vunpack.c.h.b16 %v3136
        %v3305 = vunpack.c.h.b16 %v3137
        %v3306 = vunpack.c.h.b16 %v3138
        %v3307 = vunpack.c.h.b16 %v3139
        %v3308 = vunpack.c.h.b16 %v3140
        %v3309 = vunpack.c.h.b16 %v3141
        %v3310 = vunpack.c.h.b16 %v3142
        %v3311 = vunpack.c.l.b16 %v3143
        %v3312 = vunpack.c.l.b16 %v3144
        %v3313 = vunpack.c.l.b16 %v3145
        %v3314 = vunpack.c.l.b16 %v3146
        %v3315 = vunpack.c.l.b16 %v3147
        %v3316 = vunpack.c.l.b16 %v3148
        %v3317 = vunpack.c.l.b16 %v3149
        %v3318 = vunpack.c.l.b16 %v3150
        %v3319 = vunpack.c.h.b16 %v3143
        %v3320 = vunpack.c.h.b16 %v3144
        %v3321 = vunpack.c.h.b16 %v3145
        %v3322 = vunpack.c.h.b16 %v3146
        %v3323 = vunpack.c.h.b16 %v3147
        %v3324 = vunpack.c.h.b16 %v3148
        %v3325 = vunpack.c.h.b16 %v3149
        %v3326 = vunpack.c.h.b16 %v3150
        %v3327 = vunpack.c.l.b16 %v3151
        %v3328 = vunpack.c.l.b16 %v3152
        %v3329 = vunpack.c.l.b16 %v3153
        %v3330 = vunpack.c.l.b16 %v3154
        %v3331 = vunpack.c.l.b16 %v3155
        %v3332 = vunpack.c.l.b16 %v3156
        %v3333 = vunpack.c.l.b16 %v3157
        %v3334 = vunpack.c.l.b16 %v3158
        %v3335 = vunpack.c.h.b16 %v3151
        %v3336 = vunpack.c.h.b16 %v3152
        %v3337 = vunpack.c.h.b16 %v3153
        %v3338 = vunpack.c.h.b16 %v3154
        %v3339 = vunpack.c.h.b16 %v3155
        %v3340 = vunpack.c.h.b16 %v3156
        %v3341 = vunpack.c.h.b16 %v3157
        %v3342 = vunpack.c.h.b16 %v3158
        %v3343 = vunpack.c.l.b16 %v3159
        %v3344 = vunpack.c.l.b16 %v3160
        %v3345 = vunpack.c.l.b16 %v3161
        %v3346 = vunpack.c.l.b16 %v3162
        %v3347 = vunpack.c.l.b16 %v3163
        %v3348 = vunpack.c.l.b16 %v3164
        %v3349 = vunpack.c.l.b16 %v3165
        %v3350 = vunpack.c.l.b16 %v3166
        %v3351 = vunpack.c.h.b16 %v3159
        %v3352 = vunpack.c.h.b16 %v3160
        %v3353 = vunpack.c.h.b16 %v3161
        %v3354 = vunpack.c.h.b16 %v3162
        %v3355 = vunpack.c.h.b16 %v3163
        %v3356 = vunpack.c.h.b16 %v3164
        %v3357 = vunpack.c.h.b16 %v3165
        %v3358 = vunpack.c.h.b16 %v3166
        %v3359 = vpack.c.b16 %v3232, %v3231
        %v3360 = vpack.c.b16 %v3234, %v3233
        %v3361 = vpack.c.b16 %v3236, %v3235
        %v3362 = vpack.c.b16 %v3238, %v3237
        %v3363 = vpack.c.b16 %v3240, %v3239
        %v3364 = vpack.c.b16 %v3242, %v3241
        %v3365 = vpack.c.b16 %v3244, %v3243
        %v3366 = vpack.c.b16 %v3246, %v3245
        %v3367 = vpack.c.b16 %v3248, %v3247
        %v3368 = vpack.c.b16 %v3250, %v3249
        %v3369 = vpack.c.b16 %v3252, %v3251
        %v3370 = vpack.c.b16 %v3254, %v3253
        %v3371 = vpack.c.b16 %v3256, %v3255
        %v3372 = vpack.c.b16 %v3258, %v3257
        %v3373 = vpack.c.b16 %v3260, %v3259
        %v3374 = vpack.c.b16 %v3262, %v3261
        %v3375 = vpack.c.b16 %v3264, %v3263
        %v3376 = vpack.c.b16 %v3266, %v3265
        %v3377 = vpack.c.b16 %v3268, %v3267
        %v3378 = vpack.c.b16 %v3270, %v3269
        %v3379 = vpack.c.b16 %v3272, %v3271
        %v3380 = vpack.c.b16 %v3274, %v3273
        %v3381 = vpack.c.b16 %v3276, %v3275
        %v3382 = vpack.c.b16 %v3278, %v3277
        %v3383 = vpack.c.b16 %v3280, %v3279
        %v3384 = vpack.c.b16 %v3282, %v3281
        %v3385 = vpack.c.b16 %v3284, %v3283
        %v3386 = vpack.c.b16 %v3286, %v3285
        %v3387 = vpack.c.b16 %v3288, %v3287
        %v3388 = vpack.c.b16 %v3290, %v3289
        %v3389 = vpack.c.b16 %v3292, %v3291
        %v3390 = vpack.c.b16 %v3294, %v3293
        %v3391 = vpack.c.b16 %v3296, %v3295
        %v3392 = vpack.c.b16 %v3298, %v3297
        %v3393 = vpack.c.b16 %v3300, %v3299
        %v3394 = vpack.c.b16 %v3302, %v3301
        %v3395 = vpack.c.b16 %v3304, %v3303
        %v3396 = vpack.c.b16 %v3306, %v3305
        %v3397 = vpack.c.b16 %v3308, %v3307
        %v3398 = vpack.c.b16 %v3310, %v3309
        %v3399 = vpack.c.b16 %v3312, %v3311
        %v3400 = vpack.c.b16 %v3314, %v3313
        %v3401 = vpack.c.b16 %v3316, %v3315
        %v3402 = vpack.c.b16 %v3318, %v3317
        %v3403 = vpack.c.b16 %v3320, %v3319
        %v3404 = vpack.c.b16 %v3322, %v3321
        %v3405 = vpack.c.b16 %v3324, %v3323
        %v3406 = vpack.c.b16 %v3326, %v3325
        %v3407 = vpack.c.b16 %v3328, %v3327
        %v3408 = vpack.c.b16 %v3330, %v3329
        %v3409 = vpack.c.b16 %v3332, %v3331
        %v3410 = vpack.c.b16 %v3334, %v3333
        %v3411 = vpack.c.b16 %v3336, %v3335
        %v3412 = vpack.c.b16 %v3338, %v3337
        %v3413 = vpack.c.b16 %v3340, %v3339
        %v3414 = vpack.c.b16 %v3342, %v3341
        %v3415 = vpack.c.b16 %v3344, %v3343
        %v3416 = vpack.c.b16 %v3346, %v3345
        %v3417 = vpack.c.b16 %v3348, %v3347
        %v3418 = vpack.c.b16 %v3350, %v3349
        %v3419 = vpack.c.b16 %v3352, %v3351
        %v3420 = vpack.c.b16 %v3354, %v3353
        %v3421 = vpack.c.b16 %v3356, %v3355
        %v3422 = vpack.c.b16 %v3358, %v3357
        %3487 = vst [vmem:[%s326] sm:$0xff] %v3359
        %3488 = vst [vmem:[%s326 + $0x8] sm:$0xff] %v3360
        %3489 = vst [vmem:[%s326 + $0x10] sm:$0xff] %v3361
        %3490 = vst [vmem:[%s326 + $0x18] sm:$0xff] %v3362
        %3491 = vst [vmem:[%s326 + $0x20] sm:$0xff] %v3363
        %3492 = vst [vmem:[%s326 + $0x28] sm:$0xff] %v3364
        %3493 = vst [vmem:[%s326 + $0x30] sm:$0xff] %v3365
        %3494 = vst [vmem:[%s326 + $0x38] sm:$0xff] %v3366
        %3495 = vst [vmem:[%s326 + $0x40] sm:$0xff] %v3367
        %3496 = vst [vmem:[%s326 + $0x48] sm:$0xff] %v3368
        %3497 = vst [vmem:[%s326 + $0x50] sm:$0xff] %v3369
        %3498 = vst [vmem:[%s326 + $0x58] sm:$0xff] %v3370
        %3499 = vst [vmem:[%s326 + $0x60] sm:$0xff] %v3371
        %3500 = vst [vmem:[%s326 + $0x68] sm:$0xff] %v3372
        %3501 = vst [vmem:[%s326 + $0x70] sm:$0xff] %v3373
        %3502 = vst [vmem:[%s326 + $0x78] sm:$0xff] %v3374
        %3503 = vst [vmem:[%s326 + $0x80] sm:$0xff] %v3375
        %3504 = vst [vmem:[%s326 + $0x88] sm:$0xff] %v3376
        %3505 = vst [vmem:[%s326 + $0x90] sm:$0xff] %v3377
        %3506 = vst [vmem:[%s326 + $0x98] sm:$0xff] %v3378
        %3507 = vst [vmem:[%s326 + $0xa0] sm:$0xff] %v3379
        %3508 = vst [vmem:[%s326 + $0xa8] sm:$0xff] %v3380
        %3509 = vst [vmem:[%s326 + $0xb0] sm:$0xff] %v3381
        %3510 = vst [vmem:[%s326 + $0xb8] sm:$0xff] %v3382
        %3511 = vst [vmem:[%s326 + $0xc0] sm:$0xff] %v3383
        %3512 = vst [vmem:[%s326 + $0xc8] sm:$0xff] %v3384
        %3513 = vst [vmem:[%s326 + $0xd0] sm:$0xff] %v3385
        %3514 = vst [vmem:[%s326 + $0xd8] sm:$0xff] %v3386
        %3515 = vst [vmem:[%s326 + $0xe0] sm:$0xff] %v3387
        %3516 = vst [vmem:[%s326 + $0xe8] sm:$0xff] %v3388
        %3517 = vst [vmem:[%s326 + $0xf0] sm:$0xff] %v3389
        %3518 = vst [vmem:[%s326 + $0xf8] sm:$0xff] %v3390
        %3519 = vst [vmem:[%s326 + $0x100] sm:$0xff] %v3391
        %3520 = vst [vmem:[%s326 + $0x108] sm:$0xff] %v3392
        %3521 = vst [vmem:[%s326 + $0x110] sm:$0xff] %v3393
        %3522 = vst [vmem:[%s326 + $0x118] sm:$0xff] %v3394
        %3523 = vst [vmem:[%s326 + $0x120] sm:$0xff] %v3395
        %3524 = vst [vmem:[%s326 + $0x128] sm:$0xff] %v3396
        %3525 = vst [vmem:[%s326 + $0x130] sm:$0xff] %v3397
        %3526 = vst [vmem:[%s326 + $0x138] sm:$0xff] %v3398
        %3527 = vst [vmem:[%s326 + $0x140] sm:$0xff] %v3399
        %3528 = vst [vmem:[%s326 + $0x148] sm:$0xff] %v3400
        %3529 = vst [vmem:[%s326 + $0x150] sm:$0xff] %v3401
        %3530 = vst [vmem:[%s326 + $0x158] sm:$0xff] %v3402
        %3531 = vst [vmem:[%s326 + $0x160] sm:$0xff] %v3403
        %3532 = vst [vmem:[%s326 + $0x168] sm:$0xff] %v3404
        %3533 = vst [vmem:[%s326 + $0x170] sm:$0xff] %v3405
        %3534 = vst [vmem:[%s326 + $0x178] sm:$0xff] %v3406
        %3535 = vst [vmem:[%s326 + $0x180] sm:$0xff] %v3407
        %3536 = vst [vmem:[%s326 + $0x188] sm:$0xff] %v3408
        %3537 = vst [vmem:[%s326 + $0x190] sm:$0xff] %v3409
        %3538 = vst [vmem:[%s326 + $0x198] sm:$0xff] %v3410
        %3539 = vst [vmem:[%s326 + $0x1a0] sm:$0xff] %v3411
        %3540 = vst [vmem:[%s326 + $0x1a8] sm:$0xff] %v3412
        %3541 = vst [vmem:[%s326 + $0x1b0] sm:$0xff] %v3413
        %3542 = vst [vmem:[%s326 + $0x1b8] sm:$0xff] %v3414
        %3543 = vst [vmem:[%s326 + $0x1c0] sm:$0xff] %v3415
        %3544 = vst [vmem:[%s326 + $0x1c8] sm:$0xff] %v3416
        %3545 = vst [vmem:[%s326 + $0x1d0] sm:$0xff] %v3417
        %3546 = vst [vmem:[%s326 + $0x1d8] sm:$0xff] %v3418
        %3547 = vst [vmem:[%s326 + $0x1e0] sm:$0xff] %v3419
        %3548 = vst [vmem:[%s326 + $0x1e8] sm:$0xff] %v3420
        %3549 = vst [vmem:[%s326 + $0x1f0] sm:$0xff] %v3421
        %3550 = vst [vmem:[%s326 + $0x1f8] sm:$0xff] %v3422
        %s3551 = sand.u32 %s164, 1
        %s3552 = scalar_lea.sflag [#allocation4], %s3551
        %s3553 = sand.u32 %s164, 1
        %s3554 = smul.addr %s3553, 512
        %s3555 = scalar_lea.vmem [#allocation11], %s3554
        // Predicated region
        $region65: #{tpu_custom_call.1} parent=43 // pred_check
          %p3556 = pneg %p174
        $region66: #{tpu_custom_call.1} parent=43 // pred_check_branch
          %3558 = sbr.rel (%p3556) target = $region68
        $region67: #{tpu_custom_call.1} parent=43 // pred_region
          %s3559 = smul.u32 16, %s25
          %s3561 = ssub.s32 8192, 8192
          %3562 = vsyncadd %s3552, %s3561
          %s3563 = smul.addr %s3559, 8
          %s3564 = smul.addr %s3563, 64
          %s3565 = scalar_lea.hbm %s6, %s3564
          %s3566 = sshll.u32 %s3555, 4
          %s3567 = int_to_ptr.vmem [resolvable:$true] %s3566
          %3572 = dma.vmem_to_hbm [thread:$0]  %s3567, 8192, %s3565, %s3552, 512, 512, 32
        $region68: #{tpu_custom_call.1} parent=43 // pred_fallthru
          _
      $region44: #{tpu_custom_call.1} parent=5 // pred_fallthru
        _
      %p3573 = scmp.le.s32.totalorder 2, %s20
      // Predicated region
      $region69: #{tpu_custom_call.1} parent=5 // pred_check
        %p3574 = pneg %p3573
      $region70: #{tpu_custom_call.1} parent=5 // pred_check_branch
        %3576 = sbr.rel (%p3574) target = $region72
      $region71: #{tpu_custom_call.1} parent=5 // pred_region
        %s3577 = ssub.s32 %s20, 2
        // Predicated region
        $region73: #{tpu_custom_call.1} parent=71 // pred_check
          %p3578 = pneg %p180
        $region74: #{tpu_custom_call.1} parent=71 // pred_check_branch
          %3580 = sbr.rel (%p3578) target = $region76
        $region75: #{tpu_custom_call.1} parent=71 // pred_region
          %s3581 = sand.u32 %s165, 1
          %s3582 = scalar_lea.sflag [#allocation4], %s3581
          %s3583 = sand.u32 %s165, 1
          %s3584 = smul.addr %s3583, 512
          %s3585 = scalar_lea.vmem [#allocation11], %s3584
          %3586 = dma.done %s3582, 8192
        $region76: #{tpu_custom_call.1} parent=71 // pred_fallthru
          _
      $region72: #{tpu_custom_call.1} parent=5 // pred_fallthru
        _
    $region6: #{tpu_custom_call.1} parent=1 // loop_footer
      %s24 = sadd.s32 1, %s20
    $region7: #{tpu_custom_call.1} parent=1 // loop_footer_branch
      %19 = sbr.rel target = $region3
    $region8: #{tpu_custom_call.1} parent=1 // loop_exit
      _
    %3587 = vsyncpa [#allocation3], 1
    %s3588 = scalar_lea.sflag [#allocation3], 1
    %3589 = vsyncpa %s3588, 1
    %3590 = vsyncpa [#allocation6], 1
    %3591 = vsyncpa [#allocation9], 1
    %3592 = vsyncpa [#allocation4], 1
    %s3593 = scalar_lea.sflag [#allocation4], 1
    %3594 = vsyncpa %s3593, 1

</llo_original>
